<compile_context>
chip_gen: v6e
topology: v6e:2x2x1
jax: 0.10.0
libtpu: 0.0.40
codegen_flags: <defaults>
</compile_context>

<pallas_src>
import math

import jax
import jax.numpy as jnp
import numpy as np
from jax.experimental import pallas as pl
from jax.experimental.pallas import tpu as pltpu

# ----------------------------- config (small, synthetic) --------------------
B = 2                # batch
N_POSES = 21         # joints
POSE_DIM = 3         # xyz per joint
HIDDEN = 32          # model_config.HIDDEN_DIM
FF = 64              # model_config.FF_DIM
HEADS = 4            # model_config.N_HEADS
LAYERS = 2           # model_config.N_LAYERS
HEAD_DIM = HIDDEN // HEADS
SEQ = N_POSES + 1    # pose tokens + time token
BSEQ = B * SEQ       # merged (batch-folded) token count
FOURIER_SCALE = 16.0
LN_EPS = 1e-5        # PyTorch LayerNorm default
NEG_MASK = -1e30     # additive cross-batch attention mask


# ------------------------------- Pallas kernel -------------------------------
def mask_transformer_kernel(
    x_ref,          # (BSEQ, POSE_DIM)   poses, zero rows at time-token slots
    pe_bias_ref,    # (BSEQ, HIDDEN)     b_in + sinusoidal PE, tiled over batch
    tfeat_ref,      # (B, HIDDEN)        Gaussian-Fourier features of t
    attn_bias_ref,  # (BSEQ, BSEQ)       0 within batch, -1e30 across batches
    w_in_ref,                                       # input_processor weight
    wt1_ref, bt1_ref, wt2_ref, bt2_ref,             # time MLP (Lin-SiLU-Lin)
    wqkv_ref, bqkv_ref, wo_ref, bo_ref,             # per-layer attention (q pre-scaled)
    g1_ref, be1_ref,                                # per-layer norm1
    wf1_ref, bf1_ref, wf2_ref, bf2_ref,             # per-layer FFN
    g2_ref, be2_ref,                                # per-layer norm2
    out_ref,        # (BSEQ, HIDDEN)     transformer-encoder output (merged)
):
    f32 = jnp.float32

    def layer_norm(x, g, b):
        mu = jnp.mean(x, axis=-1, keepdims=True)
        var = jnp.mean((x - mu) ** 2, axis=-1, keepdims=True)
        return (x - mu) * jax.lax.rsqrt(var + LN_EPS) * g + b

    # ---- input projection (K=3): VPU broadcast-FMAs, no MXU push ----
    # pe_bias already holds b_in + PE (PE row at the time slot is zero; that
    # row is overwritten by the time token below, so its content is irrelevant).
    x = x_ref[...]                                   # (BSEQ, 3)
    w_in = w_in_ref[...]                             # (3, HIDDEN)
    h = pe_bias_ref[...]
    for kk in range(POSE_DIM):
        h = h + x[:, kk:kk + 1] * w_in[kk:kk + 1, :]

    # ---- time_processor, once for ALL batches: Linear -> SiLU -> Linear ----
    tf = tfeat_ref[...]                              # (B, HIDDEN)
    tf = jnp.dot(tf, wt1_ref[...], preferred_element_type=f32) + bt1_ref[...]
    tf = tf * jax.nn.sigmoid(tf)
    tf = jnp.dot(tf, wt2_ref[...], preferred_element_type=f32) + bt2_ref[...]

    # ---- place time tokens at rows b*SEQ + N_POSES of the merged sequence ----
    row = jax.lax.broadcasted_iota(jnp.int32, (BSEQ, 1), 0)
    tfull = tf[0:1, :]
    for b in range(1, B):
        tfull = jnp.where(row >= b * SEQ, tf[b:b + 1, :], tfull)
    is_time = row == N_POSES
    for b in range(1, B):
        is_time = jnp.logical_or(is_time, row == (b * SEQ + N_POSES))
    seq = jnp.where(is_time, tfull, h)               # (BSEQ, HIDDEN)

    attn_bias = attn_bias_ref[...]                   # (BSEQ, BSEQ)

    # ---- transformer encoder (post-norm, ReLU FFN, batch folded) ----
    # TODO(synk): src_key_padding_mask path not implemented (mask=None).
    for l in range(LAYERS):
        wqkv, bqkv = wqkv_ref[l], bqkv_ref[l]        # q columns pre-scaled by 1/sqrt(d)
        wo, bo = wo_ref[l], bo_ref[l]

        qkv = jnp.dot(seq, wqkv, preferred_element_type=f32) + bqkv  # (BSEQ, 3D)

        attn_out = None
        for hh in range(HEADS):
            lo, hi = hh * HEAD_DIM, (hh + 1) * HEAD_DIM
            qh = qkv[:, lo:hi]
            kh = qkv[:, HIDDEN + lo:HIDDEN + hi]
            vh = qkv[:, 2 * HIDDEN + lo:2 * HIDDEN + hi]

            s = jax.lax.dot_general(qh, kh, (((1,), (1,)), ((), ())),
                                    preferred_element_type=f32)
            s = s + attn_bias                        # block-diagonal per-batch attention
            s = s - jnp.max(s, axis=-1, keepdims=True)
            p = jnp.exp(s)
            p = p * pl.reciprocal(jnp.sum(p, axis=-1, keepdims=True), approx=True)

            ctx = jnp.dot(p, vh, preferred_element_type=f32)          # (BSEQ, hd)
            # sublane slice of wo is free -> accumulate, no lane concat.
            part = jnp.dot(ctx, wo[lo:hi, :], preferred_element_type=f32)
            attn_out = part if attn_out is None else attn_out + part

        attn_out = attn_out + bo
        seq = layer_norm(seq + attn_out, g1_ref[l], be1_ref[l])

        ff = jnp.dot(seq, wf1_ref[l], preferred_element_type=f32) + bf1_ref[l]
        ff = jnp.maximum(ff, 0.0)
        ff = jnp.dot(ff, wf2_ref[l], preferred_element_type=f32) + bf2_ref[l]
        seq = layer_norm(seq + ff, g2_ref[l], be2_ref[l])

    out_ref[...] = seq


# ------------------------------- wrapper (glue) -------------------------------
def preprocess_params(p):
    """One-time weight preprocessing for the kernel (free; not per-call compute)."""
    scale = 1.0 / math.sqrt(HEAD_DIM)
    kp = dict(p)
    kp["wqkv_s"] = p["wqkv"].at[:, :, :HIDDEN].multiply(scale)
    kp["bqkv_s"] = p["bqkv"].at[:, :, :HIDDEN].multiply(scale)
    kp["pe_bias"] = jnp.tile(p["pe_pad"] + p["b_in"], (B, 1))          # (BSEQ, HIDDEN)
    return kp


def mask_transformer_forward(batch_flat, t, kp):
    x = batch_flat.reshape(B, N_POSES, POSE_DIM)
    x_pad = jnp.pad(x, ((0, 0), (0, 1), (0, 0)))                       # zero time-token row
    x_flat = x_pad.reshape(BSEQ, POSE_DIM)

    # GaussianFourierProjection: [sin(t*W*2pi), cos(t*W*2pi)]
    proj = t[:, None] * kp["fourier_w"][None, :] * (2.0 * math.pi)
    tfeat = jnp.concatenate([jnp.sin(proj), jnp.cos(proj)], axis=-1)   # (B, HIDDEN)

    # block-diagonal additive attention mask for the merged token axis (constant)
    rows = jnp.arange(BSEQ, dtype=jnp.int32) // SEQ
    attn_bias = jnp.where(rows[:, None] == rows[None, :], 0.0, NEG_MASK
                          ).astype(jnp.float32)

    args = (
        x_flat, kp["pe_bias"], tfeat, attn_bias, kp["w_in"],
        kp["wt1"], kp["bt1"], kp["wt2"], kp["bt2"],
        kp["wqkv_s"], kp["bqkv_s"], kp["wo"], kp["bo"],
        kp["g1"], kp["be1"], kp["wf1"], kp["bf1"], kp["wf2"], kp["bf2"],
        kp["g2"], kp["be2"],
    )

    def full_vmem_spec(a):
        nd = a.ndim
        return pl.BlockSpec(a.shape, lambda i, _nd=nd: (0,) * _nd)

    # Everything fits in a few tens of KiB -> single grid step, full-VMEM blocks.
    # (On v7x one could instead shard batch across the two TensorCores with a
    #  parallel grid axis; here batch is folded into the token axis instead.)
    enc = pl.pallas_call(
        mask_transformer_kernel,
        out_shape=jax.ShapeDtypeStruct((BSEQ, HIDDEN), jnp.float32),
        grid=(1,),
        in_specs=[full_vmem_spec(a) for a in args],
        out_specs=pl.BlockSpec((BSEQ, HIDDEN), lambda i: (0, 0)),
        compiler_params=pltpu.CompilerParams(dimension_semantics=("arbitrary",)),
    )(*args)

    # N=3 output projection + sigma scaling in XLA: avoids a 3/256-utilized MXU
    # push and a 3-lane masked store inside the kernel (per perf review).
    enc = enc.reshape(B, SEQ, HIDDEN)[:, :N_POSES, :]
    y = jnp.einsum("bnd,dp->bnp", enc, kp["w_out"]) + kp["b_out"][None]
    return y.reshape(B, -1) / t[:, None]                               # used_sigmas = t (fourier)


# --------------------------- pure-JAX reference --------------------------------
def reference_forward(batch_flat, t, p):
    x = batch_flat.reshape(B, N_POSES, POSE_DIM)
    h = jnp.einsum("bnp,pd->bnd", x, p["w_in"]) + p["b_in"][None] \
        + p["pe_pad"][None, :N_POSES]
    proj = t[:, None] * p["fourier_w"][None, :] * (2.0 * math.pi)
    feat = jnp.concatenate([jnp.sin(proj), jnp.cos(proj)], axis=-1)
    tf = feat @ p["wt1"] + p["bt1"]
    tf = tf * jax.nn.sigmoid(tf)
    tf = tf @ p["wt2"] + p["bt2"]
    seq = jnp.concatenate([h, tf[:, None, :]], axis=1)

    def ln(x, g, b):
        mu = x.mean(-1, keepdims=True)
        var = ((x - mu) ** 2).mean(-1, keepdims=True)
        return (x - mu) / jnp.sqrt(var + LN_EPS) * g + b

    for l in range(LAYERS):
        qkv = jnp.einsum("bsd,de->bse", seq, p["wqkv"][l]) + p["bqkv"][l][None]
        q = qkv[..., :HIDDEN].reshape(B, SEQ, HEADS, HEAD_DIM)
        k = qkv[..., HIDDEN:2 * HIDDEN].reshape(B, SEQ, HEADS, HEAD_DIM)
        v = qkv[..., 2 * HIDDEN:].reshape(B, SEQ, HEADS, HEAD_DIM)
        s = jnp.einsum("bqhd,bkhd->bhqk", q, k) / math.sqrt(HEAD_DIM)
        pr = jax.nn.softmax(s, axis=-1)
        ctx = jnp.einsum("bhqk,bkhd->bqhd", pr, v).reshape(B, SEQ, HIDDEN)
        attn = jnp.einsum("bsd,de->bse", ctx, p["wo"][l]) + p["bo"][l][None]
        seq = ln(seq + attn, p["g1"][l][None], p["be1"][l][None])
        ff = jnp.maximum(jnp.einsum("bsd,df->bsf", seq, p["wf1"][l]) + p["bf1"][l][None], 0.0)
        ff = jnp.einsum("bsf,fd->bsd", ff, p["wf2"][l]) + p["bf2"][l][None]
        seq = ln(seq + ff, p["g2"][l][None], p["be2"][l][None])

    y = jnp.einsum("bnd,dp->bnp", seq[:, :N_POSES], p["w_out"]) + p["b_out"][None]
    return y.reshape(B, -1) / t[:, None]


# ------------------------------ params / main ---------------------------------
def make_params(key):
    keys = iter(jax.random.split(key, 24))

    def rnd(shape, scale=0.05):
        return jax.random.normal(next(keys), shape, dtype=jnp.float32) * scale

    # sinusoidal positional encoding table (batch-first PE, applied to pose tokens)
    pos = jnp.arange(N_POSES, dtype=jnp.float32)[:, None]
    div = jnp.exp(jnp.arange(0, HIDDEN, 2, dtype=jnp.float32)
                  * (-math.log(10000.0) / HIDDEN))
    pe = jnp.zeros((N_POSES, HIDDEN), jnp.float32)
    pe = pe.at[:, 0::2].set(jnp.sin(pos * div))
    pe = pe.at[:, 1::2].set(jnp.cos(pos * div))
    pe_pad = jnp.pad(pe, ((0, 1), (0, 0)))        # zero row for the time-token slot

    return dict(
        fourier_w=jax.random.normal(next(keys), (HIDDEN // 2,), jnp.float32) * FOURIER_SCALE,
        pe_pad=pe_pad,
        w_in=rnd((POSE_DIM, HIDDEN)), b_in=rnd((1, HIDDEN)),
        wt1=rnd((HIDDEN, HIDDEN)), bt1=rnd((1, HIDDEN)),
        wt2=rnd((HIDDEN, HIDDEN)), bt2=rnd((1, HIDDEN)),
        wqkv=rnd((LAYERS, HIDDEN, 3 * HIDDEN)), bqkv=rnd((LAYERS, 1, 3 * HIDDEN)),
        wo=rnd((LAYERS, HIDDEN, HIDDEN)), bo=rnd((LAYERS, 1, HIDDEN)),
        g1=jnp.ones((LAYERS, 1, HIDDEN), jnp.float32),
        be1=jnp.zeros((LAYERS, 1, HIDDEN), jnp.float32),
        wf1=rnd((LAYERS, HIDDEN, FF)), bf1=rnd((LAYERS, 1, FF)),
        wf2=rnd((LAYERS, FF, HIDDEN)), bf2=rnd((LAYERS, 1, HIDDEN)),
        g2=jnp.ones((LAYERS, 1, HIDDEN), jnp.float32),
        be2=jnp.zeros((LAYERS, 1, HIDDEN), jnp.float32),
        w_out=rnd((HIDDEN, POSE_DIM)), b_out=rnd((1, POSE_DIM)),
    )


if __name__ == "__main__":
    root = jax.random.PRNGKey(0)
    kp_key, kx, kt = jax.random.split(root, 3)
    params = make_params(kp_key)
    kparams = preprocess_params(params)   # one-time weight preprocessing

    batch_flat = jax.random.normal(kx, (B, N_POSES * POSE_DIM), dtype=jnp.float32)
    t = jax.random.uniform(kt, (B,), dtype=jnp.float32, minval=0.5, maxval=1.5)

    out = jax.block_until_ready(mask_transformer_forward(batch_flat, t, kparams))
    ref = reference_forward(batch_flat, t, params)

    assert out.shape == (B, N_POSES * POSE_DIM)
    assert bool(jnp.all(jnp.isfinite(out)))
    np.testing.assert_allclose(np.asarray(out), np.asarray(ref), rtol=2e-2, atol=2e-2)
    print("KERNEL_OK")
</pallas_src>

<mosaic_0001>
module attributes {stable_mosaic.version = 11 : i64} {
  func.func @mask_transformer_kernel(%arg0: i32, %arg1: memref<44x3xf32, #tpu.memory_space<vmem>>, %arg2: memref<44x32xf32, #tpu.memory_space<vmem>>, %arg3: memref<2x32xf32, #tpu.memory_space<vmem>>, %arg4: memref<44x44xf32, #tpu.memory_space<vmem>>, %arg5: memref<3x32xf32, #tpu.memory_space<vmem>>, %arg6: memref<32x32xf32, #tpu.memory_space<vmem>>, %arg7: memref<1x32xf32, #tpu.memory_space<vmem>>, %arg8: memref<32x32xf32, #tpu.memory_space<vmem>>, %arg9: memref<1x32xf32, #tpu.memory_space<vmem>>, %arg10: memref<2x32x96xf32, #tpu.memory_space<vmem>>, %arg11: memref<2x1x96xf32, #tpu.memory_space<vmem>>, %arg12: memref<2x32x32xf32, #tpu.memory_space<vmem>>, %arg13: memref<2x1x32xf32, #tpu.memory_space<vmem>>, %arg14: memref<2x1x32xf32, #tpu.memory_space<vmem>>, %arg15: memref<2x1x32xf32, #tpu.memory_space<vmem>>, %arg16: memref<2x32x64xf32, #tpu.memory_space<vmem>>, %arg17: memref<2x1x64xf32, #tpu.memory_space<vmem>>, %arg18: memref<2x64x32xf32, #tpu.memory_space<vmem>>, %arg19: memref<2x1x32xf32, #tpu.memory_space<vmem>>, %arg20: memref<2x1x32xf32, #tpu.memory_space<vmem>>, %arg21: memref<2x1x32xf32, #tpu.memory_space<vmem>>, %arg22: memref<44x32xf32, #tpu.memory_space<vmem>>) attributes {dimension_semantics = [#tpu.dimension_semantics<arbitrary>], iteration_bounds = array<i64: 1>, scalar_prefetch = 0 : i64, scratch_operands = 0 : i64, tpu.core_type = #tpu.core_type<tc>, window_params = [{pipeline_mode = #tpu.pipeline_mode<synchronous>, transform_indices = @transform_0, window_bounds = array<i64: 44, 3>}, {pipeline_mode = #tpu.pipeline_mode<synchronous>, transform_indices = @transform_1, window_bounds = array<i64: 44, 32>}, {pipeline_mode = #tpu.pipeline_mode<synchronous>, transform_indices = @transform_2, window_bounds = array<i64: 2, 32>}, {pipeline_mode = #tpu.pipeline_mode<synchronous>, transform_indices = @transform_3, window_bounds = array<i64: 44, 44>}, {pipeline_mode = #tpu.pipeline_mode<synchronous>, transform_indices = @transform_4, window_bounds = array<i64: 3, 32>}, {pipeline_mode = #tpu.pipeline_mode<synchronous>, transform_indices = @transform_5, window_bounds = array<i64: 32, 32>}, {pipeline_mode = #tpu.pipeline_mode<synchronous>, transform_indices = @transform_6, window_bounds = array<i64: 1, 32>}, {pipeline_mode = #tpu.pipeline_mode<synchronous>, transform_indices = @transform_7, window_bounds = array<i64: 32, 32>}, {pipeline_mode = #tpu.pipeline_mode<synchronous>, transform_indices = @transform_8, window_bounds = array<i64: 1, 32>}, {pipeline_mode = #tpu.pipeline_mode<synchronous>, transform_indices = @transform_9, window_bounds = array<i64: 2, 32, 96>}, {pipeline_mode = #tpu.pipeline_mode<synchronous>, transform_indices = @transform_10, window_bounds = array<i64: 2, 1, 96>}, {pipeline_mode = #tpu.pipeline_mode<synchronous>, transform_indices = @transform_11, window_bounds = array<i64: 2, 32, 32>}, {pipeline_mode = #tpu.pipeline_mode<synchronous>, transform_indices = @transform_12, window_bounds = array<i64: 2, 1, 32>}, {pipeline_mode = #tpu.pipeline_mode<synchronous>, transform_indices = @transform_13, window_bounds = array<i64: 2, 1, 32>}, {pipeline_mode = #tpu.pipeline_mode<synchronous>, transform_indices = @transform_14, window_bounds = array<i64: 2, 1, 32>}, {pipeline_mode = #tpu.pipeline_mode<synchronous>, transform_indices = @transform_15, window_bounds = array<i64: 2, 32, 64>}, {pipeline_mode = #tpu.pipeline_mode<synchronous>, transform_indices = @transform_16, window_bounds = array<i64: 2, 1, 64>}, {pipeline_mode = #tpu.pipeline_mode<synchronous>, transform_indices = @transform_17, window_bounds = array<i64: 2, 64, 32>}, {pipeline_mode = #tpu.pipeline_mode<synchronous>, transform_indices = @transform_18, window_bounds = array<i64: 2, 1, 32>}, {pipeline_mode = #tpu.pipeline_mode<synchronous>, transform_indices = @transform_19, window_bounds = array<i64: 2, 1, 32>}, {pipeline_mode = #tpu.pipeline_mode<synchronous>, transform_indices = @transform_20, window_bounds = array<i64: 2, 1, 32>}, {pipeline_mode = #tpu.pipeline_mode<synchronous>, transform_indices = @transform_21, window_bounds = array<i64: 44, 32>}]} {
    %c0 = arith.constant 0 : index
    %c0_0 = arith.constant 0 : index
    %0 = vector.load %arg1[%c0, %c0_0] : memref<44x3xf32, #tpu.memory_space<vmem>>, vector<44x3xf32>
    %c0_1 = arith.constant 0 : index
    %c0_2 = arith.constant 0 : index
    %1 = vector.load %arg5[%c0_1, %c0_2] : memref<3x32xf32, #tpu.memory_space<vmem>>, vector<3x32xf32>
    %c0_3 = arith.constant 0 : index
    %c0_4 = arith.constant 0 : index
    %2 = vector.load %arg2[%c0_3, %c0_4] : memref<44x32xf32, #tpu.memory_space<vmem>>, vector<44x32xf32>
    %3 = vector.extract_strided_slice %0 {offsets = [0, 0], sizes = [44, 1], strides = [1, 1]} : vector<44x3xf32> to vector<44x1xf32>
    %4 = vector.extract_strided_slice %1 {offsets = [0, 0], sizes = [1, 32], strides = [1, 1]} : vector<3x32xf32> to vector<1x32xf32>
    %5 = vector.broadcast %3 : vector<44x1xf32> to vector<44x32xf32>
    %6 = vector.broadcast %4 : vector<1x32xf32> to vector<44x32xf32>
    %7 = arith.mulf %5, %6 : vector<44x32xf32>
    %8 = arith.addf %2, %7 : vector<44x32xf32>
    %9 = vector.extract_strided_slice %0 {offsets = [0, 1], sizes = [44, 1], strides = [1, 1]} : vector<44x3xf32> to vector<44x1xf32>
    %10 = vector.extract_strided_slice %1 {offsets = [1, 0], sizes = [1, 32], strides = [1, 1]} : vector<3x32xf32> to vector<1x32xf32>
    %11 = vector.broadcast %9 : vector<44x1xf32> to vector<44x32xf32>
    %12 = vector.broadcast %10 : vector<1x32xf32> to vector<44x32xf32>
    %13 = arith.mulf %11, %12 : vector<44x32xf32>
    %14 = arith.addf %8, %13 : vector<44x32xf32>
    %15 = vector.extract_strided_slice %0 {offsets = [0, 2], sizes = [44, 1], strides = [1, 1]} : vector<44x3xf32> to vector<44x1xf32>
    %16 = vector.extract_strided_slice %1 {offsets = [2, 0], sizes = [1, 32], strides = [1, 1]} : vector<3x32xf32> to vector<1x32xf32>
    %17 = vector.broadcast %15 : vector<44x1xf32> to vector<44x32xf32>
    %18 = vector.broadcast %16 : vector<1x32xf32> to vector<44x32xf32>
    %19 = arith.mulf %17, %18 : vector<44x32xf32>
    %20 = arith.addf %14, %19 : vector<44x32xf32>
    %c0_5 = arith.constant 0 : index
    %c0_6 = arith.constant 0 : index
    %21 = vector.load %arg3[%c0_5, %c0_6] : memref<2x32xf32, #tpu.memory_space<vmem>>, vector<2x32xf32>
    %c0_7 = arith.constant 0 : index
    %c0_8 = arith.constant 0 : index
    %22 = vector.load %arg6[%c0_7, %c0_8] : memref<32x32xf32, #tpu.memory_space<vmem>>, vector<32x32xf32>
    %cst = arith.constant dense<0.000000e+00> : vector<2x32xf32>
    %23 = tpu.matmul %21, %22, %cst {dimension_numbers = #tpu.dot_dimension_numbers<[1], [0], [0], [1], [0, 0, 1, 1], [], []>} : vector<2x32xf32>, vector<32x32xf32>, vector<2x32xf32> -> vector<2x32xf32>
    %c0_9 = arith.constant 0 : index
    %c0_10 = arith.constant 0 : index
    %24 = vector.load %arg7[%c0_9, %c0_10] : memref<1x32xf32, #tpu.memory_space<vmem>>, vector<1x32xf32>
    %25 = vector.broadcast %24 : vector<1x32xf32> to vector<2x32xf32>
    %26 = arith.addf %23, %25 : vector<2x32xf32>
    %27 = arith.negf %26 : vector<2x32xf32>
    %28 = math.exp %27 : vector<2x32xf32>
    %cst_11 = arith.constant 1.000000e+00 : f32
    %29 = vector.broadcast %cst_11 : f32 to vector<2x32xf32>
    %30 = arith.addf %29, %28 : vector<2x32xf32>
    %31 = arith.divf %29, %30 : vector<2x32xf32>
    %32 = arith.mulf %26, %31 : vector<2x32xf32>
    %c0_12 = arith.constant 0 : index
    %c0_13 = arith.constant 0 : index
    %33 = vector.load %arg8[%c0_12, %c0_13] : memref<32x32xf32, #tpu.memory_space<vmem>>, vector<32x32xf32>
    %cst_14 = arith.constant dense<0.000000e+00> : vector<2x32xf32>
    %34 = tpu.matmul %32, %33, %cst_14 {dimension_numbers = #tpu.dot_dimension_numbers<[1], [0], [0], [1], [0, 0, 1, 1], [], []>} : vector<2x32xf32>, vector<32x32xf32>, vector<2x32xf32> -> vector<2x32xf32>
    %c0_15 = arith.constant 0 : index
    %c0_16 = arith.constant 0 : index
    %35 = vector.load %arg9[%c0_15, %c0_16] : memref<1x32xf32, #tpu.memory_space<vmem>>, vector<1x32xf32>
    %36 = vector.broadcast %35 : vector<1x32xf32> to vector<2x32xf32>
    %37 = arith.addf %34, %36 : vector<2x32xf32>
    %38 = tpu.iota {dimensions = array<i32: 0>} : vector<44x1xi32>
    %39 = vector.extract_strided_slice %37 {offsets = [0, 0], sizes = [1, 32], strides = [1, 1]} : vector<2x32xf32> to vector<1x32xf32>
    %c22_i32 = arith.constant 22 : i32
    %40 = vector.broadcast %c22_i32 : i32 to vector<44x1xi32>
    %41 = arith.cmpi sge, %38, %40 : vector<44x1xi32>
    %42 = vector.extract_strided_slice %37 {offsets = [1, 0], sizes = [1, 32], strides = [1, 1]} : vector<2x32xf32> to vector<1x32xf32>
    %43 = vector.shape_cast %41 : vector<44x1xi1> to vector<44x1xi1>
    %44 = vector.broadcast %43 : vector<44x1xi1> to vector<44x32xi1>
    %45 = vector.shape_cast %42 : vector<1x32xf32> to vector<1x32xf32>
    %46 = vector.broadcast %45 : vector<1x32xf32> to vector<44x32xf32>
    %47 = vector.shape_cast %39 : vector<1x32xf32> to vector<1x32xf32>
    %48 = vector.broadcast %47 : vector<1x32xf32> to vector<44x32xf32>
    %49 = arith.select %44, %46, %48 : vector<44x32xi1>, vector<44x32xf32>
    %c21_i32 = arith.constant 21 : i32
    %50 = vector.broadcast %c21_i32 : i32 to vector<44x1xi32>
    %51 = arith.cmpi eq, %38, %50 : vector<44x1xi32>
    %c43_i32 = arith.constant 43 : i32
    %52 = vector.broadcast %c43_i32 : i32 to vector<44x1xi32>
    %53 = arith.cmpi eq, %38, %52 : vector<44x1xi32>
    %54 = arith.ori %51, %53 : vector<44x1xi1>
    %55 = vector.shape_cast %54 : vector<44x1xi1> to vector<44x1xi1>
    %56 = vector.broadcast %55 : vector<44x1xi1> to vector<44x32xi1>
    %57 = arith.select %56, %49, %20 : vector<44x32xi1>, vector<44x32xf32>
    %c0_17 = arith.constant 0 : index
    %c0_18 = arith.constant 0 : index
    %58 = vector.load %arg4[%c0_17, %c0_18] : memref<44x44xf32, #tpu.memory_space<vmem>>, vector<44x44xf32>
    %c0_19 = arith.constant 0 : index
    %c0_20 = arith.constant 0 : index
    %c0_21 = arith.constant 0 : index
    %59 = vector.load %arg10[%c0_19, %c0_20, %c0_21] : memref<2x32x96xf32, #tpu.memory_space<vmem>>, vector<1x32x96xf32>
    %60 = vector.shape_cast %59 : vector<1x32x96xf32> to vector<32x96xf32>
    %c0_22 = arith.constant 0 : index
    %c0_23 = arith.constant 0 : index
    %c0_24 = arith.constant 0 : index
    %61 = vector.load %arg11[%c0_22, %c0_23, %c0_24] : memref<2x1x96xf32, #tpu.memory_space<vmem>>, vector<1x1x96xf32>
    %62 = vector.shape_cast %61 : vector<1x1x96xf32> to vector<1x96xf32>
    %c0_25 = arith.constant 0 : index
    %c0_26 = arith.constant 0 : index
    %c0_27 = arith.constant 0 : index
    %63 = vector.load %arg12[%c0_25, %c0_26, %c0_27] : memref<2x32x32xf32, #tpu.memory_space<vmem>>, vector<1x32x32xf32>
    %64 = vector.shape_cast %63 : vector<1x32x32xf32> to vector<32x32xf32>
    %c0_28 = arith.constant 0 : index
    %c0_29 = arith.constant 0 : index
    %c0_30 = arith.constant 0 : index
    %65 = vector.load %arg13[%c0_28, %c0_29, %c0_30] : memref<2x1x32xf32, #tpu.memory_space<vmem>>, vector<1x1x32xf32>
    %66 = vector.shape_cast %65 : vector<1x1x32xf32> to vector<1x32xf32>
    %cst_31 = arith.constant dense<0.000000e+00> : vector<44x96xf32>
    %67 = tpu.matmul %57, %60, %cst_31 {dimension_numbers = #tpu.dot_dimension_numbers<[1], [0], [0], [1], [0, 0, 1, 1], [], []>} : vector<44x32xf32>, vector<32x96xf32>, vector<44x96xf32> -> vector<44x96xf32>
    %68 = vector.broadcast %62 : vector<1x96xf32> to vector<44x96xf32>
    %69 = arith.addf %67, %68 : vector<44x96xf32>
    %70 = vector.extract_strided_slice %69 {offsets = [0, 0], sizes = [44, 8], strides = [1, 1]} : vector<44x96xf32> to vector<44x8xf32>
    %71 = vector.extract_strided_slice %69 {offsets = [0, 32], sizes = [44, 8], strides = [1, 1]} : vector<44x96xf32> to vector<44x8xf32>
    %72 = vector.extract_strided_slice %69 {offsets = [0, 64], sizes = [44, 8], strides = [1, 1]} : vector<44x96xf32> to vector<44x8xf32>
    %cst_32 = arith.constant dense<0.000000e+00> : vector<44x44xf32>
    %73 = tpu.matmul %70, %71, %cst_32 {dimension_numbers = #tpu.dot_dimension_numbers<[1], [1], [0], [0], [0, 0, 1, 0], [], []>} : vector<44x8xf32>, vector<44x8xf32>, vector<44x44xf32> -> vector<44x44xf32>
    %74 = arith.addf %73, %58 : vector<44x44xf32>
    %cst_33 = arith.constant dense<0xFF800000> : vector<44xf32>
    %75 = vector.multi_reduction <maximumf>, %74, %cst_33 [1] : vector<44x44xf32> to vector<44xf32>
    %76 = vector.shape_cast %75 : vector<44xf32> to vector<44x1xf32>
    %77 = vector.broadcast %76 : vector<44x1xf32> to vector<44x44xf32>
    %78 = arith.subf %74, %77 : vector<44x44xf32>
    %79 = math.exp %78 : vector<44x44xf32>
    %cst_34 = arith.constant dense<0.000000e+00> : vector<44xf32>
    %80 = vector.multi_reduction <add>, %79, %cst_34 [1] : vector<44x44xf32> to vector<44xf32>
    %81 = vector.shape_cast %80 : vector<44xf32> to vector<44x1xf32>
    %82 = tpu.reciprocal %81 {approx = true} : vector<44x1xf32> -> vector<44x1xf32>
    %83 = vector.broadcast %82 : vector<44x1xf32> to vector<44x44xf32>
    %84 = arith.mulf %79, %83 : vector<44x44xf32>
    %cst_35 = arith.constant dense<0.000000e+00> : vector<44x8xf32>
    %85 = tpu.matmul %84, %72, %cst_35 {dimension_numbers = #tpu.dot_dimension_numbers<[1], [0], [0], [1], [0, 0, 1, 1], [], []>} : vector<44x44xf32>, vector<44x8xf32>, vector<44x8xf32> -> vector<44x8xf32>
    %86 = vector.extract_strided_slice %64 {offsets = [0, 0], sizes = [8, 32], strides = [1, 1]} : vector<32x32xf32> to vector<8x32xf32>
    %cst_36 = arith.constant dense<0.000000e+00> : vector<44x32xf32>
    %87 = tpu.matmul %85, %86, %cst_36 {dimension_numbers = #tpu.dot_dimension_numbers<[1], [0], [0], [1], [0, 0, 1, 1], [], []>} : vector<44x8xf32>, vector<8x32xf32>, vector<44x32xf32> -> vector<44x32xf32>
    %88 = vector.extract_strided_slice %69 {offsets = [0, 8], sizes = [44, 8], strides = [1, 1]} : vector<44x96xf32> to vector<44x8xf32>
    %89 = vector.extract_strided_slice %69 {offsets = [0, 40], sizes = [44, 8], strides = [1, 1]} : vector<44x96xf32> to vector<44x8xf32>
    %90 = vector.extract_strided_slice %69 {offsets = [0, 72], sizes = [44, 8], strides = [1, 1]} : vector<44x96xf32> to vector<44x8xf32>
    %cst_37 = arith.constant dense<0.000000e+00> : vector<44x44xf32>
    %91 = tpu.matmul %88, %89, %cst_37 {dimension_numbers = #tpu.dot_dimension_numbers<[1], [1], [0], [0], [0, 0, 1, 0], [], []>} : vector<44x8xf32>, vector<44x8xf32>, vector<44x44xf32> -> vector<44x44xf32>
    %92 = arith.addf %91, %58 : vector<44x44xf32>
    %cst_38 = arith.constant dense<0xFF800000> : vector<44xf32>
    %93 = vector.multi_reduction <maximumf>, %92, %cst_38 [1] : vector<44x44xf32> to vector<44xf32>
    %94 = vector.shape_cast %93 : vector<44xf32> to vector<44x1xf32>
    %95 = vector.broadcast %94 : vector<44x1xf32> to vector<44x44xf32>
    %96 = arith.subf %92, %95 : vector<44x44xf32>
    %97 = math.exp %96 : vector<44x44xf32>
    %cst_39 = arith.constant dense<0.000000e+00> : vector<44xf32>
    %98 = vector.multi_reduction <add>, %97, %cst_39 [1] : vector<44x44xf32> to vector<44xf32>
    %99 = vector.shape_cast %98 : vector<44xf32> to vector<44x1xf32>
    %100 = tpu.reciprocal %99 {approx = true} : vector<44x1xf32> -> vector<44x1xf32>
    %101 = vector.broadcast %100 : vector<44x1xf32> to vector<44x44xf32>
    %102 = arith.mulf %97, %101 : vector<44x44xf32>
    %cst_40 = arith.constant dense<0.000000e+00> : vector<44x8xf32>
    %103 = tpu.matmul %102, %90, %cst_40 {dimension_numbers = #tpu.dot_dimension_numbers<[1], [0], [0], [1], [0, 0, 1, 1], [], []>} : vector<44x44xf32>, vector<44x8xf32>, vector<44x8xf32> -> vector<44x8xf32>
    %104 = vector.extract_strided_slice %64 {offsets = [8, 0], sizes = [8, 32], strides = [1, 1]} : vector<32x32xf32> to vector<8x32xf32>
    %cst_41 = arith.constant dense<0.000000e+00> : vector<44x32xf32>
    %105 = tpu.matmul %103, %104, %cst_41 {dimension_numbers = #tpu.dot_dimension_numbers<[1], [0], [0], [1], [0, 0, 1, 1], [], []>} : vector<44x8xf32>, vector<8x32xf32>, vector<44x32xf32> -> vector<44x32xf32>
    %106 = arith.addf %87, %105 : vector<44x32xf32>
    %107 = vector.extract_strided_slice %69 {offsets = [0, 16], sizes = [44, 8], strides = [1, 1]} : vector<44x96xf32> to vector<44x8xf32>
    %108 = vector.extract_strided_slice %69 {offsets = [0, 48], sizes = [44, 8], strides = [1, 1]} : vector<44x96xf32> to vector<44x8xf32>
    %109 = vector.extract_strided_slice %69 {offsets = [0, 80], sizes = [44, 8], strides = [1, 1]} : vector<44x96xf32> to vector<44x8xf32>
    %cst_42 = arith.constant dense<0.000000e+00> : vector<44x44xf32>
    %110 = tpu.matmul %107, %108, %cst_42 {dimension_numbers = #tpu.dot_dimension_numbers<[1], [1], [0], [0], [0, 0, 1, 0], [], []>} : vector<44x8xf32>, vector<44x8xf32>, vector<44x44xf32> -> vector<44x44xf32>
    %111 = arith.addf %110, %58 : vector<44x44xf32>
    %cst_43 = arith.constant dense<0xFF800000> : vector<44xf32>
    %112 = vector.multi_reduction <maximumf>, %111, %cst_43 [1] : vector<44x44xf32> to vector<44xf32>
    %113 = vector.shape_cast %112 : vector<44xf32> to vector<44x1xf32>
    %114 = vector.broadcast %113 : vector<44x1xf32> to vector<44x44xf32>
    %115 = arith.subf %111, %114 : vector<44x44xf32>
    %116 = math.exp %115 : vector<44x44xf32>
    %cst_44 = arith.constant dense<0.000000e+00> : vector<44xf32>
    %117 = vector.multi_reduction <add>, %116, %cst_44 [1] : vector<44x44xf32> to vector<44xf32>
    %118 = vector.shape_cast %117 : vector<44xf32> to vector<44x1xf32>
    %119 = tpu.reciprocal %118 {approx = true} : vector<44x1xf32> -> vector<44x1xf32>
    %120 = vector.broadcast %119 : vector<44x1xf32> to vector<44x44xf32>
    %121 = arith.mulf %116, %120 : vector<44x44xf32>
    %cst_45 = arith.constant dense<0.000000e+00> : vector<44x8xf32>
    %122 = tpu.matmul %121, %109, %cst_45 {dimension_numbers = #tpu.dot_dimension_numbers<[1], [0], [0], [1], [0, 0, 1, 1], [], []>} : vector<44x44xf32>, vector<44x8xf32>, vector<44x8xf32> -> vector<44x8xf32>
    %123 = vector.extract_strided_slice %64 {offsets = [16, 0], sizes = [8, 32], strides = [1, 1]} : vector<32x32xf32> to vector<8x32xf32>
    %cst_46 = arith.constant dense<0.000000e+00> : vector<44x32xf32>
    %124 = tpu.matmul %122, %123, %cst_46 {dimension_numbers = #tpu.dot_dimension_numbers<[1], [0], [0], [1], [0, 0, 1, 1], [], []>} : vector<44x8xf32>, vector<8x32xf32>, vector<44x32xf32> -> vector<44x32xf32>
    %125 = arith.addf %106, %124 : vector<44x32xf32>
    %126 = vector.extract_strided_slice %69 {offsets = [0, 24], sizes = [44, 8], strides = [1, 1]} : vector<44x96xf32> to vector<44x8xf32>
    %127 = vector.extract_strided_slice %69 {offsets = [0, 56], sizes = [44, 8], strides = [1, 1]} : vector<44x96xf32> to vector<44x8xf32>
    %128 = vector.extract_strided_slice %69 {offsets = [0, 88], sizes = [44, 8], strides = [1, 1]} : vector<44x96xf32> to vector<44x8xf32>
    %cst_47 = arith.constant dense<0.000000e+00> : vector<44x44xf32>
    %129 = tpu.matmul %126, %127, %cst_47 {dimension_numbers = #tpu.dot_dimension_numbers<[1], [1], [0], [0], [0, 0, 1, 0], [], []>} : vector<44x8xf32>, vector<44x8xf32>, vector<44x44xf32> -> vector<44x44xf32>
    %130 = arith.addf %129, %58 : vector<44x44xf32>
    %cst_48 = arith.constant dense<0xFF800000> : vector<44xf32>
    %131 = vector.multi_reduction <maximumf>, %130, %cst_48 [1] : vector<44x44xf32> to vector<44xf32>
    %132 = vector.shape_cast %131 : vector<44xf32> to vector<44x1xf32>
    %133 = vector.broadcast %132 : vector<44x1xf32> to vector<44x44xf32>
    %134 = arith.subf %130, %133 : vector<44x44xf32>
    %135 = math.exp %134 : vector<44x44xf32>
    %cst_49 = arith.constant dense<0.000000e+00> : vector<44xf32>
    %136 = vector.multi_reduction <add>, %135, %cst_49 [1] : vector<44x44xf32> to vector<44xf32>
    %137 = vector.shape_cast %136 : vector<44xf32> to vector<44x1xf32>
    %138 = tpu.reciprocal %137 {approx = true} : vector<44x1xf32> -> vector<44x1xf32>
    %139 = vector.broadcast %138 : vector<44x1xf32> to vector<44x44xf32>
    %140 = arith.mulf %135, %139 : vector<44x44xf32>
    %cst_50 = arith.constant dense<0.000000e+00> : vector<44x8xf32>
    %141 = tpu.matmul %140, %128, %cst_50 {dimension_numbers = #tpu.dot_dimension_numbers<[1], [0], [0], [1], [0, 0, 1, 1], [], []>} : vector<44x44xf32>, vector<44x8xf32>, vector<44x8xf32> -> vector<44x8xf32>
    %142 = vector.extract_strided_slice %64 {offsets = [24, 0], sizes = [8, 32], strides = [1, 1]} : vector<32x32xf32> to vector<8x32xf32>
    %cst_51 = arith.constant dense<0.000000e+00> : vector<44x32xf32>
    %143 = tpu.matmul %141, %142, %cst_51 {dimension_numbers = #tpu.dot_dimension_numbers<[1], [0], [0], [1], [0, 0, 1, 1], [], []>} : vector<44x8xf32>, vector<8x32xf32>, vector<44x32xf32> -> vector<44x32xf32>
    %144 = arith.addf %125, %143 : vector<44x32xf32>
    %145 = vector.broadcast %66 : vector<1x32xf32> to vector<44x32xf32>
    %146 = arith.addf %144, %145 : vector<44x32xf32>
    %147 = arith.addf %57, %146 : vector<44x32xf32>
    %c0_52 = arith.constant 0 : index
    %c0_53 = arith.constant 0 : index
    %c0_54 = arith.constant 0 : index
    %148 = vector.load %arg14[%c0_52, %c0_53, %c0_54] : memref<2x1x32xf32, #tpu.memory_space<vmem>>, vector<1x1x32xf32>
    %149 = vector.shape_cast %148 : vector<1x1x32xf32> to vector<1x32xf32>
    %c0_55 = arith.constant 0 : index
    %c0_56 = arith.constant 0 : index
    %c0_57 = arith.constant 0 : index
    %150 = vector.load %arg15[%c0_55, %c0_56, %c0_57] : memref<2x1x32xf32, #tpu.memory_space<vmem>>, vector<1x1x32xf32>
    %151 = vector.shape_cast %150 : vector<1x1x32xf32> to vector<1x32xf32>
    %cst_58 = arith.constant dense<0.000000e+00> : vector<44xf32>
    %152 = vector.multi_reduction <add>, %147, %cst_58 [1] : vector<44x32xf32> to vector<44xf32>
    %153 = vector.shape_cast %152 : vector<44xf32> to vector<44x1xf32>
    %cst_59 = arith.constant 3.200000e+01 : f32
    %154 = vector.broadcast %cst_59 : f32 to vector<44x1xf32>
    %155 = arith.divf %153, %154 : vector<44x1xf32>
    %156 = vector.broadcast %155 : vector<44x1xf32> to vector<44x32xf32>
    %157 = arith.subf %147, %156 : vector<44x32xf32>
    %158 = arith.mulf %157, %157 : vector<44x32xf32>
    %cst_60 = arith.constant dense<0.000000e+00> : vector<44xf32>
    %159 = vector.multi_reduction <add>, %158, %cst_60 [1] : vector<44x32xf32> to vector<44xf32>
    %160 = vector.shape_cast %159 : vector<44xf32> to vector<44x1xf32>
    %cst_61 = arith.constant 3.200000e+01 : f32
    %161 = vector.broadcast %cst_61 : f32 to vector<44x1xf32>
    %162 = arith.divf %160, %161 : vector<44x1xf32>
    %163 = vector.broadcast %155 : vector<44x1xf32> to vector<44x32xf32>
    %164 = arith.subf %147, %163 : vector<44x32xf32>
    %cst_62 = arith.constant 9.99999974E-6 : f32
    %165 = vector.broadcast %cst_62 : f32 to vector<44x1xf32>
    %166 = arith.addf %162, %165 : vector<44x1xf32>
    %167 = math.rsqrt %166 : vector<44x1xf32>
    %168 = vector.broadcast %167 : vector<44x1xf32> to vector<44x32xf32>
    %169 = arith.mulf %164, %168 : vector<44x32xf32>
    %170 = vector.broadcast %149 : vector<1x32xf32> to vector<44x32xf32>
    %171 = arith.mulf %169, %170 : vector<44x32xf32>
    %172 = vector.broadcast %151 : vector<1x32xf32> to vector<44x32xf32>
    %173 = arith.addf %171, %172 : vector<44x32xf32>
    %c0_63 = arith.constant 0 : index
    %c0_64 = arith.constant 0 : index
    %c0_65 = arith.constant 0 : index
    %174 = vector.load %arg16[%c0_63, %c0_64, %c0_65] : memref<2x32x64xf32, #tpu.memory_space<vmem>>, vector<1x32x64xf32>
    %175 = vector.shape_cast %174 : vector<1x32x64xf32> to vector<32x64xf32>
    %cst_66 = arith.constant dense<0.000000e+00> : vector<44x64xf32>
    %176 = tpu.matmul %173, %175, %cst_66 {dimension_numbers = #tpu.dot_dimension_numbers<[1], [0], [0], [1], [0, 0, 1, 1], [], []>} : vector<44x32xf32>, vector<32x64xf32>, vector<44x64xf32> -> vector<44x64xf32>
    %c0_67 = arith.constant 0 : index
    %c0_68 = arith.constant 0 : index
    %c0_69 = arith.constant 0 : index
    %177 = vector.load %arg17[%c0_67, %c0_68, %c0_69] : memref<2x1x64xf32, #tpu.memory_space<vmem>>, vector<1x1x64xf32>
    %178 = vector.shape_cast %177 : vector<1x1x64xf32> to vector<1x64xf32>
    %179 = vector.broadcast %178 : vector<1x64xf32> to vector<44x64xf32>
    %180 = arith.addf %176, %179 : vector<44x64xf32>
    %cst_70 = arith.constant 0.000000e+00 : f32
    %181 = vector.broadcast %cst_70 : f32 to vector<44x64xf32>
    %182 = arith.maximumf %180, %181 : vector<44x64xf32>
    %c0_71 = arith.constant 0 : index
    %c0_72 = arith.constant 0 : index
    %c0_73 = arith.constant 0 : index
    %183 = vector.load %arg18[%c0_71, %c0_72, %c0_73] : memref<2x64x32xf32, #tpu.memory_space<vmem>>, vector<1x64x32xf32>
    %184 = vector.shape_cast %183 : vector<1x64x32xf32> to vector<64x32xf32>
    %cst_74 = arith.constant dense<0.000000e+00> : vector<44x32xf32>
    %185 = tpu.matmul %182, %184, %cst_74 {dimension_numbers = #tpu.dot_dimension_numbers<[1], [0], [0], [1], [0, 0, 1, 1], [], []>} : vector<44x64xf32>, vector<64x32xf32>, vector<44x32xf32> -> vector<44x32xf32>
    %c0_75 = arith.constant 0 : index
    %c0_76 = arith.constant 0 : index
    %c0_77 = arith.constant 0 : index
    %186 = vector.load %arg19[%c0_75, %c0_76, %c0_77] : memref<2x1x32xf32, #tpu.memory_space<vmem>>, vector<1x1x32xf32>
    %187 = vector.shape_cast %186 : vector<1x1x32xf32> to vector<1x32xf32>
    %188 = vector.broadcast %187 : vector<1x32xf32> to vector<44x32xf32>
    %189 = arith.addf %185, %188 : vector<44x32xf32>
    %190 = arith.addf %173, %189 : vector<44x32xf32>
    %c0_78 = arith.constant 0 : index
    %c0_79 = arith.constant 0 : index
    %c0_80 = arith.constant 0 : index
    %191 = vector.load %arg20[%c0_78, %c0_79, %c0_80] : memref<2x1x32xf32, #tpu.memory_space<vmem>>, vector<1x1x32xf32>
    %192 = vector.shape_cast %191 : vector<1x1x32xf32> to vector<1x32xf32>
    %c0_81 = arith.constant 0 : index
    %c0_82 = arith.constant 0 : index
    %c0_83 = arith.constant 0 : index
    %193 = vector.load %arg21[%c0_81, %c0_82, %c0_83] : memref<2x1x32xf32, #tpu.memory_space<vmem>>, vector<1x1x32xf32>
    %194 = vector.shape_cast %193 : vector<1x1x32xf32> to vector<1x32xf32>
    %cst_84 = arith.constant dense<0.000000e+00> : vector<44xf32>
    %195 = vector.multi_reduction <add>, %190, %cst_84 [1] : vector<44x32xf32> to vector<44xf32>
    %196 = vector.shape_cast %195 : vector<44xf32> to vector<44x1xf32>
    %cst_85 = arith.constant 3.200000e+01 : f32
    %197 = vector.broadcast %cst_85 : f32 to vector<44x1xf32>
    %198 = arith.divf %196, %197 : vector<44x1xf32>
    %199 = vector.broadcast %198 : vector<44x1xf32> to vector<44x32xf32>
    %200 = arith.subf %190, %199 : vector<44x32xf32>
    %201 = arith.mulf %200, %200 : vector<44x32xf32>
    %cst_86 = arith.constant dense<0.000000e+00> : vector<44xf32>
    %202 = vector.multi_reduction <add>, %201, %cst_86 [1] : vector<44x32xf32> to vector<44xf32>
    %203 = vector.shape_cast %202 : vector<44xf32> to vector<44x1xf32>
    %cst_87 = arith.constant 3.200000e+01 : f32
    %204 = vector.broadcast %cst_87 : f32 to vector<44x1xf32>
    %205 = arith.divf %203, %204 : vector<44x1xf32>
    %206 = vector.broadcast %198 : vector<44x1xf32> to vector<44x32xf32>
    %207 = arith.subf %190, %206 : vector<44x32xf32>
    %cst_88 = arith.constant 9.99999974E-6 : f32
    %208 = vector.broadcast %cst_88 : f32 to vector<44x1xf32>
    %209 = arith.addf %205, %208 : vector<44x1xf32>
    %210 = math.rsqrt %209 : vector<44x1xf32>
    %211 = vector.broadcast %210 : vector<44x1xf32> to vector<44x32xf32>
    %212 = arith.mulf %207, %211 : vector<44x32xf32>
    %213 = vector.broadcast %192 : vector<1x32xf32> to vector<44x32xf32>
    %214 = arith.mulf %212, %213 : vector<44x32xf32>
    %215 = vector.broadcast %194 : vector<1x32xf32> to vector<44x32xf32>
    %216 = arith.addf %214, %215 : vector<44x32xf32>
    %c1 = arith.constant 1 : index
    %c0_89 = arith.constant 0 : index
    %c0_90 = arith.constant 0 : index
    %217 = vector.load %arg10[%c1, %c0_89, %c0_90] : memref<2x32x96xf32, #tpu.memory_space<vmem>>, vector<1x32x96xf32>
    %218 = vector.shape_cast %217 : vector<1x32x96xf32> to vector<32x96xf32>
    %c1_91 = arith.constant 1 : index
    %c0_92 = arith.constant 0 : index
    %c0_93 = arith.constant 0 : index
    %219 = vector.load %arg11[%c1_91, %c0_92, %c0_93] : memref<2x1x96xf32, #tpu.memory_space<vmem>>, vector<1x1x96xf32>
    %220 = vector.shape_cast %219 : vector<1x1x96xf32> to vector<1x96xf32>
    %c1_94 = arith.constant 1 : index
    %c0_95 = arith.constant 0 : index
    %c0_96 = arith.constant 0 : index
    %221 = vector.load %arg12[%c1_94, %c0_95, %c0_96] : memref<2x32x32xf32, #tpu.memory_space<vmem>>, vector<1x32x32xf32>
    %222 = vector.shape_cast %221 : vector<1x32x32xf32> to vector<32x32xf32>
    %c1_97 = arith.constant 1 : index
    %c0_98 = arith.constant 0 : index
    %c0_99 = arith.constant 0 : index
    %223 = vector.load %arg13[%c1_97, %c0_98, %c0_99] : memref<2x1x32xf32, #tpu.memory_space<vmem>>, vector<1x1x32xf32>
    %224 = vector.shape_cast %223 : vector<1x1x32xf32> to vector<1x32xf32>
    %cst_100 = arith.constant dense<0.000000e+00> : vector<44x96xf32>
    %225 = tpu.matmul %216, %218, %cst_100 {dimension_numbers = #tpu.dot_dimension_numbers<[1], [0], [0], [1], [0, 0, 1, 1], [], []>} : vector<44x32xf32>, vector<32x96xf32>, vector<44x96xf32> -> vector<44x96xf32>
    %226 = vector.broadcast %220 : vector<1x96xf32> to vector<44x96xf32>
    %227 = arith.addf %225, %226 : vector<44x96xf32>
    %228 = vector.extract_strided_slice %227 {offsets = [0, 0], sizes = [44, 8], strides = [1, 1]} : vector<44x96xf32> to vector<44x8xf32>
    %229 = vector.extract_strided_slice %227 {offsets = [0, 32], sizes = [44, 8], strides = [1, 1]} : vector<44x96xf32> to vector<44x8xf32>
    %230 = vector.extract_strided_slice %227 {offsets = [0, 64], sizes = [44, 8], strides = [1, 1]} : vector<44x96xf32> to vector<44x8xf32>
    %cst_101 = arith.constant dense<0.000000e+00> : vector<44x44xf32>
    %231 = tpu.matmul %228, %229, %cst_101 {dimension_numbers = #tpu.dot_dimension_numbers<[1], [1], [0], [0], [0, 0, 1, 0], [], []>} : vector<44x8xf32>, vector<44x8xf32>, vector<44x44xf32> -> vector<44x44xf32>
    %232 = arith.addf %231, %58 : vector<44x44xf32>
    %cst_102 = arith.constant dense<0xFF800000> : vector<44xf32>
    %233 = vector.multi_reduction <maximumf>, %232, %cst_102 [1] : vector<44x44xf32> to vector<44xf32>
    %234 = vector.shape_cast %233 : vector<44xf32> to vector<44x1xf32>
    %235 = vector.broadcast %234 : vector<44x1xf32> to vector<44x44xf32>
    %236 = arith.subf %232, %235 : vector<44x44xf32>
    %237 = math.exp %236 : vector<44x44xf32>
    %cst_103 = arith.constant dense<0.000000e+00> : vector<44xf32>
    %238 = vector.multi_reduction <add>, %237, %cst_103 [1] : vector<44x44xf32> to vector<44xf32>
    %239 = vector.shape_cast %238 : vector<44xf32> to vector<44x1xf32>
    %240 = tpu.reciprocal %239 {approx = true} : vector<44x1xf32> -> vector<44x1xf32>
    %241 = vector.broadcast %240 : vector<44x1xf32> to vector<44x44xf32>
    %242 = arith.mulf %237, %241 : vector<44x44xf32>
    %cst_104 = arith.constant dense<0.000000e+00> : vector<44x8xf32>
    %243 = tpu.matmul %242, %230, %cst_104 {dimension_numbers = #tpu.dot_dimension_numbers<[1], [0], [0], [1], [0, 0, 1, 1], [], []>} : vector<44x44xf32>, vector<44x8xf32>, vector<44x8xf32> -> vector<44x8xf32>
    %244 = vector.extract_strided_slice %222 {offsets = [0, 0], sizes = [8, 32], strides = [1, 1]} : vector<32x32xf32> to vector<8x32xf32>
    %cst_105 = arith.constant dense<0.000000e+00> : vector<44x32xf32>
    %245 = tpu.matmul %243, %244, %cst_105 {dimension_numbers = #tpu.dot_dimension_numbers<[1], [0], [0], [1], [0, 0, 1, 1], [], []>} : vector<44x8xf32>, vector<8x32xf32>, vector<44x32xf32> -> vector<44x32xf32>
    %246 = vector.extract_strided_slice %227 {offsets = [0, 8], sizes = [44, 8], strides = [1, 1]} : vector<44x96xf32> to vector<44x8xf32>
    %247 = vector.extract_strided_slice %227 {offsets = [0, 40], sizes = [44, 8], strides = [1, 1]} : vector<44x96xf32> to vector<44x8xf32>
    %248 = vector.extract_strided_slice %227 {offsets = [0, 72], sizes = [44, 8], strides = [1, 1]} : vector<44x96xf32> to vector<44x8xf32>
    %cst_106 = arith.constant dense<0.000000e+00> : vector<44x44xf32>
    %249 = tpu.matmul %246, %247, %cst_106 {dimension_numbers = #tpu.dot_dimension_numbers<[1], [1], [0], [0], [0, 0, 1, 0], [], []>} : vector<44x8xf32>, vector<44x8xf32>, vector<44x44xf32> -> vector<44x44xf32>
    %250 = arith.addf %249, %58 : vector<44x44xf32>
    %cst_107 = arith.constant dense<0xFF800000> : vector<44xf32>
    %251 = vector.multi_reduction <maximumf>, %250, %cst_107 [1] : vector<44x44xf32> to vector<44xf32>
    %252 = vector.shape_cast %251 : vector<44xf32> to vector<44x1xf32>
    %253 = vector.broadcast %252 : vector<44x1xf32> to vector<44x44xf32>
    %254 = arith.subf %250, %253 : vector<44x44xf32>
    %255 = math.exp %254 : vector<44x44xf32>
    %cst_108 = arith.constant dense<0.000000e+00> : vector<44xf32>
    %256 = vector.multi_reduction <add>, %255, %cst_108 [1] : vector<44x44xf32> to vector<44xf32>
    %257 = vector.shape_cast %256 : vector<44xf32> to vector<44x1xf32>
    %258 = tpu.reciprocal %257 {approx = true} : vector<44x1xf32> -> vector<44x1xf32>
    %259 = vector.broadcast %258 : vector<44x1xf32> to vector<44x44xf32>
    %260 = arith.mulf %255, %259 : vector<44x44xf32>
    %cst_109 = arith.constant dense<0.000000e+00> : vector<44x8xf32>
    %261 = tpu.matmul %260, %248, %cst_109 {dimension_numbers = #tpu.dot_dimension_numbers<[1], [0], [0], [1], [0, 0, 1, 1], [], []>} : vector<44x44xf32>, vector<44x8xf32>, vector<44x8xf32> -> vector<44x8xf32>
    %262 = vector.extract_strided_slice %222 {offsets = [8, 0], sizes = [8, 32], strides = [1, 1]} : vector<32x32xf32> to vector<8x32xf32>
    %cst_110 = arith.constant dense<0.000000e+00> : vector<44x32xf32>
    %263 = tpu.matmul %261, %262, %cst_110 {dimension_numbers = #tpu.dot_dimension_numbers<[1], [0], [0], [1], [0, 0, 1, 1], [], []>} : vector<44x8xf32>, vector<8x32xf32>, vector<44x32xf32> -> vector<44x32xf32>
    %264 = arith.addf %245, %263 : vector<44x32xf32>
    %265 = vector.extract_strided_slice %227 {offsets = [0, 16], sizes = [44, 8], strides = [1, 1]} : vector<44x96xf32> to vector<44x8xf32>
    %266 = vector.extract_strided_slice %227 {offsets = [0, 48], sizes = [44, 8], strides = [1, 1]} : vector<44x96xf32> to vector<44x8xf32>
    %267 = vector.extract_strided_slice %227 {offsets = [0, 80], sizes = [44, 8], strides = [1, 1]} : vector<44x96xf32> to vector<44x8xf32>
    %cst_111 = arith.constant dense<0.000000e+00> : vector<44x44xf32>
    %268 = tpu.matmul %265, %266, %cst_111 {dimension_numbers = #tpu.dot_dimension_numbers<[1], [1], [0], [0], [0, 0, 1, 0], [], []>} : vector<44x8xf32>, vector<44x8xf32>, vector<44x44xf32> -> vector<44x44xf32>
    %269 = arith.addf %268, %58 : vector<44x44xf32>
    %cst_112 = arith.constant dense<0xFF800000> : vector<44xf32>
    %270 = vector.multi_reduction <maximumf>, %269, %cst_112 [1] : vector<44x44xf32> to vector<44xf32>
    %271 = vector.shape_cast %270 : vector<44xf32> to vector<44x1xf32>
    %272 = vector.broadcast %271 : vector<44x1xf32> to vector<44x44xf32>
    %273 = arith.subf %269, %272 : vector<44x44xf32>
    %274 = math.exp %273 : vector<44x44xf32>
    %cst_113 = arith.constant dense<0.000000e+00> : vector<44xf32>
    %275 = vector.multi_reduction <add>, %274, %cst_113 [1] : vector<44x44xf32> to vector<44xf32>
    %276 = vector.shape_cast %275 : vector<44xf32> to vector<44x1xf32>
    %277 = tpu.reciprocal %276 {approx = true} : vector<44x1xf32> -> vector<44x1xf32>
    %278 = vector.broadcast %277 : vector<44x1xf32> to vector<44x44xf32>
    %279 = arith.mulf %274, %278 : vector<44x44xf32>
    %cst_114 = arith.constant dense<0.000000e+00> : vector<44x8xf32>
    %280 = tpu.matmul %279, %267, %cst_114 {dimension_numbers = #tpu.dot_dimension_numbers<[1], [0], [0], [1], [0, 0, 1, 1], [], []>} : vector<44x44xf32>, vector<44x8xf32>, vector<44x8xf32> -> vector<44x8xf32>
    %281 = vector.extract_strided_slice %222 {offsets = [16, 0], sizes = [8, 32], strides = [1, 1]} : vector<32x32xf32> to vector<8x32xf32>
    %cst_115 = arith.constant dense<0.000000e+00> : vector<44x32xf32>
    %282 = tpu.matmul %280, %281, %cst_115 {dimension_numbers = #tpu.dot_dimension_numbers<[1], [0], [0], [1], [0, 0, 1, 1], [], []>} : vector<44x8xf32>, vector<8x32xf32>, vector<44x32xf32> -> vector<44x32xf32>
    %283 = arith.addf %264, %282 : vector<44x32xf32>
    %284 = vector.extract_strided_slice %227 {offsets = [0, 24], sizes = [44, 8], strides = [1, 1]} : vector<44x96xf32> to vector<44x8xf32>
    %285 = vector.extract_strided_slice %227 {offsets = [0, 56], sizes = [44, 8], strides = [1, 1]} : vector<44x96xf32> to vector<44x8xf32>
    %286 = vector.extract_strided_slice %227 {offsets = [0, 88], sizes = [44, 8], strides = [1, 1]} : vector<44x96xf32> to vector<44x8xf32>
    %cst_116 = arith.constant dense<0.000000e+00> : vector<44x44xf32>
    %287 = tpu.matmul %284, %285, %cst_116 {dimension_numbers = #tpu.dot_dimension_numbers<[1], [1], [0], [0], [0, 0, 1, 0], [], []>} : vector<44x8xf32>, vector<44x8xf32>, vector<44x44xf32> -> vector<44x44xf32>
    %288 = arith.addf %287, %58 : vector<44x44xf32>
    %cst_117 = arith.constant dense<0xFF800000> : vector<44xf32>
    %289 = vector.multi_reduction <maximumf>, %288, %cst_117 [1] : vector<44x44xf32> to vector<44xf32>
    %290 = vector.shape_cast %289 : vector<44xf32> to vector<44x1xf32>
    %291 = vector.broadcast %290 : vector<44x1xf32> to vector<44x44xf32>
    %292 = arith.subf %288, %291 : vector<44x44xf32>
    %293 = math.exp %292 : vector<44x44xf32>
    %cst_118 = arith.constant dense<0.000000e+00> : vector<44xf32>
    %294 = vector.multi_reduction <add>, %293, %cst_118 [1] : vector<44x44xf32> to vector<44xf32>
    %295 = vector.shape_cast %294 : vector<44xf32> to vector<44x1xf32>
    %296 = tpu.reciprocal %295 {approx = true} : vector<44x1xf32> -> vector<44x1xf32>
    %297 = vector.broadcast %296 : vector<44x1xf32> to vector<44x44xf32>
    %298 = arith.mulf %293, %297 : vector<44x44xf32>
    %cst_119 = arith.constant dense<0.000000e+00> : vector<44x8xf32>
    %299 = tpu.matmul %298, %286, %cst_119 {dimension_numbers = #tpu.dot_dimension_numbers<[1], [0], [0], [1], [0, 0, 1, 1], [], []>} : vector<44x44xf32>, vector<44x8xf32>, vector<44x8xf32> -> vector<44x8xf32>
    %300 = vector.extract_strided_slice %222 {offsets = [24, 0], sizes = [8, 32], strides = [1, 1]} : vector<32x32xf32> to vector<8x32xf32>
    %cst_120 = arith.constant dense<0.000000e+00> : vector<44x32xf32>
    %301 = tpu.matmul %299, %300, %cst_120 {dimension_numbers = #tpu.dot_dimension_numbers<[1], [0], [0], [1], [0, 0, 1, 1], [], []>} : vector<44x8xf32>, vector<8x32xf32>, vector<44x32xf32> -> vector<44x32xf32>
    %302 = arith.addf %283, %301 : vector<44x32xf32>
    %303 = vector.broadcast %224 : vector<1x32xf32> to vector<44x32xf32>
    %304 = arith.addf %302, %303 : vector<44x32xf32>
    %305 = arith.addf %216, %304 : vector<44x32xf32>
    %c1_121 = arith.constant 1 : index
    %c0_122 = arith.constant 0 : index
    %c0_123 = arith.constant 0 : index
    %306 = vector.load %arg14[%c1_121, %c0_122, %c0_123] : memref<2x1x32xf32, #tpu.memory_space<vmem>>, vector<1x1x32xf32>
    %307 = vector.shape_cast %306 : vector<1x1x32xf32> to vector<1x32xf32>
    %c1_124 = arith.constant 1 : index
    %c0_125 = arith.constant 0 : index
    %c0_126 = arith.constant 0 : index
    %308 = vector.load %arg15[%c1_124, %c0_125, %c0_126] : memref<2x1x32xf32, #tpu.memory_space<vmem>>, vector<1x1x32xf32>
    %309 = vector.shape_cast %308 : vector<1x1x32xf32> to vector<1x32xf32>
    %cst_127 = arith.constant dense<0.000000e+00> : vector<44xf32>
    %310 = vector.multi_reduction <add>, %305, %cst_127 [1] : vector<44x32xf32> to vector<44xf32>
    %311 = vector.shape_cast %310 : vector<44xf32> to vector<44x1xf32>
    %cst_128 = arith.constant 3.200000e+01 : f32
    %312 = vector.broadcast %cst_128 : f32 to vector<44x1xf32>
    %313 = arith.divf %311, %312 : vector<44x1xf32>
    %314 = vector.broadcast %313 : vector<44x1xf32> to vector<44x32xf32>
    %315 = arith.subf %305, %314 : vector<44x32xf32>
    %316 = arith.mulf %315, %315 : vector<44x32xf32>
    %cst_129 = arith.constant dense<0.000000e+00> : vector<44xf32>
    %317 = vector.multi_reduction <add>, %316, %cst_129 [1] : vector<44x32xf32> to vector<44xf32>
    %318 = vector.shape_cast %317 : vector<44xf32> to vector<44x1xf32>
    %cst_130 = arith.constant 3.200000e+01 : f32
    %319 = vector.broadcast %cst_130 : f32 to vector<44x1xf32>
    %320 = arith.divf %318, %319 : vector<44x1xf32>
    %321 = vector.broadcast %313 : vector<44x1xf32> to vector<44x32xf32>
    %322 = arith.subf %305, %321 : vector<44x32xf32>
    %cst_131 = arith.constant 9.99999974E-6 : f32
    %323 = vector.broadcast %cst_131 : f32 to vector<44x1xf32>
    %324 = arith.addf %320, %323 : vector<44x1xf32>
    %325 = math.rsqrt %324 : vector<44x1xf32>
    %326 = vector.broadcast %325 : vector<44x1xf32> to vector<44x32xf32>
    %327 = arith.mulf %322, %326 : vector<44x32xf32>
    %328 = vector.broadcast %307 : vector<1x32xf32> to vector<44x32xf32>
    %329 = arith.mulf %327, %328 : vector<44x32xf32>
    %330 = vector.broadcast %309 : vector<1x32xf32> to vector<44x32xf32>
    %331 = arith.addf %329, %330 : vector<44x32xf32>
    %c1_132 = arith.constant 1 : index
    %c0_133 = arith.constant 0 : index
    %c0_134 = arith.constant 0 : index
    %332 = vector.load %arg16[%c1_132, %c0_133, %c0_134] : memref<2x32x64xf32, #tpu.memory_space<vmem>>, vector<1x32x64xf32>
    %333 = vector.shape_cast %332 : vector<1x32x64xf32> to vector<32x64xf32>
    %cst_135 = arith.constant dense<0.000000e+00> : vector<44x64xf32>
    %334 = tpu.matmul %331, %333, %cst_135 {dimension_numbers = #tpu.dot_dimension_numbers<[1], [0], [0], [1], [0, 0, 1, 1], [], []>} : vector<44x32xf32>, vector<32x64xf32>, vector<44x64xf32> -> vector<44x64xf32>
    %c1_136 = arith.constant 1 : index
    %c0_137 = arith.constant 0 : index
    %c0_138 = arith.constant 0 : index
    %335 = vector.load %arg17[%c1_136, %c0_137, %c0_138] : memref<2x1x64xf32, #tpu.memory_space<vmem>>, vector<1x1x64xf32>
    %336 = vector.shape_cast %335 : vector<1x1x64xf32> to vector<1x64xf32>
    %337 = vector.broadcast %336 : vector<1x64xf32> to vector<44x64xf32>
    %338 = arith.addf %334, %337 : vector<44x64xf32>
    %cst_139 = arith.constant 0.000000e+00 : f32
    %339 = vector.broadcast %cst_139 : f32 to vector<44x64xf32>
    %340 = arith.maximumf %338, %339 : vector<44x64xf32>
    %c1_140 = arith.constant 1 : index
    %c0_141 = arith.constant 0 : index
    %c0_142 = arith.constant 0 : index
    %341 = vector.load %arg18[%c1_140, %c0_141, %c0_142] : memref<2x64x32xf32, #tpu.memory_space<vmem>>, vector<1x64x32xf32>
    %342 = vector.shape_cast %341 : vector<1x64x32xf32> to vector<64x32xf32>
    %cst_143 = arith.constant dense<0.000000e+00> : vector<44x32xf32>
    %343 = tpu.matmul %340, %342, %cst_143 {dimension_numbers = #tpu.dot_dimension_numbers<[1], [0], [0], [1], [0, 0, 1, 1], [], []>} : vector<44x64xf32>, vector<64x32xf32>, vector<44x32xf32> -> vector<44x32xf32>
    %c1_144 = arith.constant 1 : index
    %c0_145 = arith.constant 0 : index
    %c0_146 = arith.constant 0 : index
    %344 = vector.load %arg19[%c1_144, %c0_145, %c0_146] : memref<2x1x32xf32, #tpu.memory_space<vmem>>, vector<1x1x32xf32>
    %345 = vector.shape_cast %344 : vector<1x1x32xf32> to vector<1x32xf32>
    %346 = vector.broadcast %345 : vector<1x32xf32> to vector<44x32xf32>
    %347 = arith.addf %343, %346 : vector<44x32xf32>
    %348 = arith.addf %331, %347 : vector<44x32xf32>
    %c1_147 = arith.constant 1 : index
    %c0_148 = arith.constant 0 : index
    %c0_149 = arith.constant 0 : index
    %349 = vector.load %arg20[%c1_147, %c0_148, %c0_149] : memref<2x1x32xf32, #tpu.memory_space<vmem>>, vector<1x1x32xf32>
    %350 = vector.shape_cast %349 : vector<1x1x32xf32> to vector<1x32xf32>
    %c1_150 = arith.constant 1 : index
    %c0_151 = arith.constant 0 : index
    %c0_152 = arith.constant 0 : index
    %351 = vector.load %arg21[%c1_150, %c0_151, %c0_152] : memref<2x1x32xf32, #tpu.memory_space<vmem>>, vector<1x1x32xf32>
    %352 = vector.shape_cast %351 : vector<1x1x32xf32> to vector<1x32xf32>
    %cst_153 = arith.constant dense<0.000000e+00> : vector<44xf32>
    %353 = vector.multi_reduction <add>, %348, %cst_153 [1] : vector<44x32xf32> to vector<44xf32>
    %354 = vector.shape_cast %353 : vector<44xf32> to vector<44x1xf32>
    %cst_154 = arith.constant 3.200000e+01 : f32
    %355 = vector.broadcast %cst_154 : f32 to vector<44x1xf32>
    %356 = arith.divf %354, %355 : vector<44x1xf32>
    %357 = vector.broadcast %356 : vector<44x1xf32> to vector<44x32xf32>
    %358 = arith.subf %348, %357 : vector<44x32xf32>
    %359 = arith.mulf %358, %358 : vector<44x32xf32>
    %cst_155 = arith.constant dense<0.000000e+00> : vector<44xf32>
    %360 = vector.multi_reduction <add>, %359, %cst_155 [1] : vector<44x32xf32> to vector<44xf32>
    %361 = vector.shape_cast %360 : vector<44xf32> to vector<44x1xf32>
    %cst_156 = arith.constant 3.200000e+01 : f32
    %362 = vector.broadcast %cst_156 : f32 to vector<44x1xf32>
    %363 = arith.divf %361, %362 : vector<44x1xf32>
    %364 = vector.broadcast %356 : vector<44x1xf32> to vector<44x32xf32>
    %365 = arith.subf %348, %364 : vector<44x32xf32>
    %cst_157 = arith.constant 9.99999974E-6 : f32
    %366 = vector.broadcast %cst_157 : f32 to vector<44x1xf32>
    %367 = arith.addf %363, %366 : vector<44x1xf32>
    %368 = math.rsqrt %367 : vector<44x1xf32>
    %369 = vector.broadcast %368 : vector<44x1xf32> to vector<44x32xf32>
    %370 = arith.mulf %365, %369 : vector<44x32xf32>
    %371 = vector.broadcast %350 : vector<1x32xf32> to vector<44x32xf32>
    %372 = arith.mulf %370, %371 : vector<44x32xf32>
    %373 = vector.broadcast %352 : vector<1x32xf32> to vector<44x32xf32>
    %374 = arith.addf %372, %373 : vector<44x32xf32>
    %c0_158 = arith.constant 0 : index
    %c0_159 = arith.constant 0 : index
    %375 = vector.load %arg22[%c0_158, %c0_159] : memref<44x32xf32, #tpu.memory_space<vmem>>, vector<44x32xf32>
    tpu.vector_store %arg22[%c0_158, %c0_159], %374 {strides = array<i32>} : memref<44x32xf32, #tpu.memory_space<vmem>>, vector<44x32xf32>,
    return
  }
  func.func @transform_0(%arg0: i32) -> (i32, i32) {
    %c0_i32 = arith.constant 0 : i32
    %c0_i32_0 = arith.constant 0 : i32
    %c0_i32_1 = arith.constant 0 : i32
    return %c0_i32, %c0_i32_0 : i32, i32
  }
  func.func @transform_1(%arg0: i32) -> (i32, i32) {
    %c0_i32 = arith.constant 0 : i32
    %c0_i32_0 = arith.constant 0 : i32
    %c0_i32_1 = arith.constant 0 : i32
    return %c0_i32, %c0_i32_0 : i32, i32
  }
  func.func @transform_2(%arg0: i32) -> (i32, i32) {
    %c0_i32 = arith.constant 0 : i32
    %c0_i32_0 = arith.constant 0 : i32
    %c0_i32_1 = arith.constant 0 : i32
    return %c0_i32, %c0_i32_0 : i32, i32
  }
  func.func @transform_3(%arg0: i32) -> (i32, i32) {
    %c0_i32 = arith.constant 0 : i32
    %c0_i32_0 = arith.constant 0 : i32
    %c0_i32_1 = arith.constant 0 : i32
    return %c0_i32, %c0_i32_0 : i32, i32
  }
  func.func @transform_4(%arg0: i32) -> (i32, i32) {
    %c0_i32 = arith.constant 0 : i32
    %c0_i32_0 = arith.constant 0 : i32
    %c0_i32_1 = arith.constant 0 : i32
    return %c0_i32, %c0_i32_0 : i32, i32
  }
  func.func @transform_5(%arg0: i32) -> (i32, i32) {
    %c0_i32 = arith.constant 0 : i32
    %c0_i32_0 = arith.constant 0 : i32
    %c0_i32_1 = arith.constant 0 : i32
    return %c0_i32, %c0_i32_0 : i32, i32
  }
  func.func @transform_6(%arg0: i32) -> (i32, i32) {
    %c0_i32 = arith.constant 0 : i32
    %c0_i32_0 = arith.constant 0 : i32
    %c0_i32_1 = arith.constant 0 : i32
    return %c0_i32, %c0_i32_0 : i32, i32
  }
  func.func @transform_7(%arg0: i32) -> (i32, i32) {
    %c0_i32 = arith.constant 0 : i32
    %c0_i32_0 = arith.constant 0 : i32
    %c0_i32_1 = arith.constant 0 : i32
    return %c0_i32, %c0_i32_0 : i32, i32
  }
  func.func @transform_8(%arg0: i32) -> (i32, i32) {
    %c0_i32 = arith.constant 0 : i32
    %c0_i32_0 = arith.constant 0 : i32
    %c0_i32_1 = arith.constant 0 : i32
    return %c0_i32, %c0_i32_0 : i32, i32
  }
  func.func @transform_9(%arg0: i32) -> (i32, i32, i32) {
    %c0_i32 = arith.constant 0 : i32
    %c0_i32_0 = arith.constant 0 : i32
    %c0_i32_1 = arith.constant 0 : i32
    %c0_i32_2 = arith.constant 0 : i32
    return %c0_i32, %c0_i32_0, %c0_i32_1 : i32, i32, i32
  }
  func.func @transform_10(%arg0: i32) -> (i32, i32, i32) {
    %c0_i32 = arith.constant 0 : i32
    %c0_i32_0 = arith.constant 0 : i32
    %c0_i32_1 = arith.constant 0 : i32
    %c0_i32_2 = arith.constant 0 : i32
    return %c0_i32, %c0_i32_0, %c0_i32_1 : i32, i32, i32
  }
  func.func @transform_11(%arg0: i32) -> (i32, i32, i32) {
    %c0_i32 = arith.constant 0 : i32
    %c0_i32_0 = arith.constant 0 : i32
    %c0_i32_1 = arith.constant 0 : i32
    %c0_i32_2 = arith.constant 0 : i32
    return %c0_i32, %c0_i32_0, %c0_i32_1 : i32, i32, i32
  }
  func.func @transform_12(%arg0: i32) -> (i32, i32, i32) {
    %c0_i32 = arith.constant 0 : i32
    %c0_i32_0 = arith.constant 0 : i32
    %c0_i32_1 = arith.constant 0 : i32
    %c0_i32_2 = arith.constant 0 : i32
    return %c0_i32, %c0_i32_0, %c0_i32_1 : i32, i32, i32
  }
  func.func @transform_13(%arg0: i32) -> (i32, i32, i32) {
    %c0_i32 = arith.constant 0 : i32
    %c0_i32_0 = arith.constant 0 : i32
    %c0_i32_1 = arith.constant 0 : i32
    %c0_i32_2 = arith.constant 0 : i32
    return %c0_i32, %c0_i32_0, %c0_i32_1 : i32, i32, i32
  }
  func.func @transform_14(%arg0: i32) -> (i32, i32, i32) {
    %c0_i32 = arith.constant 0 : i32
    %c0_i32_0 = arith.constant 0 : i32
    %c0_i32_1 = arith.constant 0 : i32
    %c0_i32_2 = arith.constant 0 : i32
    return %c0_i32, %c0_i32_0, %c0_i32_1 : i32, i32, i32
  }
  func.func @transform_15(%arg0: i32) -> (i32, i32, i32) {
    %c0_i32 = arith.constant 0 : i32
    %c0_i32_0 = arith.constant 0 : i32
    %c0_i32_1 = arith.constant 0 : i32
    %c0_i32_2 = arith.constant 0 : i32
    return %c0_i32, %c0_i32_0, %c0_i32_1 : i32, i32, i32
  }
  func.func @transform_16(%arg0: i32) -> (i32, i32, i32) {
    %c0_i32 = arith.constant 0 : i32
    %c0_i32_0 = arith.constant 0 : i32
    %c0_i32_1 = arith.constant 0 : i32
    %c0_i32_2 = arith.constant 0 : i32
    return %c0_i32, %c0_i32_0, %c0_i32_1 : i32, i32, i32
  }
  func.func @transform_17(%arg0: i32) -> (i32, i32, i32) {
    %c0_i32 = arith.constant 0 : i32
    %c0_i32_0 = arith.constant 0 : i32
    %c0_i32_1 = arith.constant 0 : i32
    %c0_i32_2 = arith.constant 0 : i32
    return %c0_i32, %c0_i32_0, %c0_i32_1 : i32, i32, i32
  }
  func.func @transform_18(%arg0: i32) -> (i32, i32, i32) {
    %c0_i32 = arith.constant 0 : i32
    %c0_i32_0 = arith.constant 0 : i32
    %c0_i32_1 = arith.constant 0 : i32
    %c0_i32_2 = arith.constant 0 : i32
    return %c0_i32, %c0_i32_0, %c0_i32_1 : i32, i32, i32
  }
  func.func @transform_19(%arg0: i32) -> (i32, i32, i32) {
    %c0_i32 = arith.constant 0 : i32
    %c0_i32_0 = arith.constant 0 : i32
    %c0_i32_1 = arith.constant 0 : i32
    %c0_i32_2 = arith.constant 0 : i32
    return %c0_i32, %c0_i32_0, %c0_i32_1 : i32, i32, i32
  }
  func.func @transform_20(%arg0: i32) -> (i32, i32, i32) {
    %c0_i32 = arith.constant 0 : i32
    %c0_i32_0 = arith.constant 0 : i32
    %c0_i32_1 = arith.constant 0 : i32
    %c0_i32_2 = arith.constant 0 : i32
    return %c0_i32, %c0_i32_0, %c0_i32_1 : i32, i32, i32
  }
  func.func @transform_21(%arg0: i32) -> (i32, i32) {
    %c0_i32 = arith.constant 0 : i32
    %c0_i32_0 = arith.constant 0 : i32
    %c0_i32_1 = arith.constant 0 : i32
    return %c0_i32, %c0_i32_0 : i32, i32
  }
}

</mosaic_0001>

<llo_original>
// kernel: tpu_custom_call.1
$region0: #{tpu_custom_call.1}
  #allocation0 [shape = 'u32[]', space=smem, size = 0x4, offset = 0x4, fixed_abs, tag = 'smem constant byte address 0x4 - core index']
  #allocation1 [shape = 'u32[144,128]{1,0:T(1,128)}', space=vmem, size = 0x12000, scoped, tag = 'internal scratch']
  %s0 = inlined_call_operand.vmem [shape: f32[44,3], index: 0, kind: input, shape index: {}]
  %s1 = inlined_call_operand.vmem [shape: f32[44,32], index: 1, kind: input, shape index: {}]
  %s2 = inlined_call_operand.vmem [shape: f32[2,32], index: 2, kind: input, shape index: {}]
  %s3 = inlined_call_operand.vmem [shape: f32[44,44], index: 3, kind: input, shape index: {}]
  %s4 = inlined_call_operand.vmem [shape: f32[3,32], index: 4, kind: input, shape index: {}]
  %s5 = inlined_call_operand.hbm [shape: f32[32,32], index: 5, kind: input, shape index: {}]
  %s6 = inlined_call_operand.vmem [shape: f32[1,32], index: 6, kind: input, shape index: {}]
  %s7 = inlined_call_operand.hbm [shape: f32[32,32], index: 7, kind: input, shape index: {}]
  %s8 = inlined_call_operand.vmem [shape: f32[1,32], index: 8, kind: input, shape index: {}]
  %s9 = inlined_call_operand.vmem [shape: f32[2,32,96], index: 9, kind: input, shape index: {}]
  %s10 = inlined_call_operand.vmem [shape: f32[2,1,96], index: 10, kind: input, shape index: {}]
  %s11 = inlined_call_operand.vmem [shape: f32[2,32,32], index: 11, kind: input, shape index: {}]
  %s12 = inlined_call_operand.vmem [shape: f32[2,1,32], index: 12, kind: input, shape index: {}]
  %s13 = inlined_call_operand.vmem [shape: f32[2,1,32], index: 13, kind: input, shape index: {}]
  %s14 = inlined_call_operand.vmem [shape: f32[2,1,32], index: 14, kind: input, shape index: {}]
  %s15 = inlined_call_operand.vmem [shape: f32[2,32,64], index: 15, kind: input, shape index: {}]
  %s16 = inlined_call_operand.vmem [shape: f32[2,1,64], index: 16, kind: input, shape index: {}]
  %s17 = inlined_call_operand.vmem [shape: f32[2,64,32], index: 17, kind: input, shape index: {}]
  %s18 = inlined_call_operand.vmem [shape: f32[2,1,32], index: 18, kind: input, shape index: {}]
  %s19 = inlined_call_operand.vmem [shape: f32[2,1,32], index: 19, kind: input, shape index: {}]
  %s20 = inlined_call_operand.vmem [shape: f32[2,1,32], index: 20, kind: input, shape index: {}]
  %s21 = inlined_call_operand.vmem [shape: f32[44,32], index: 21, kind: output, shape index: {}]
  %s22 = sld [smem:[#allocation0]]
  $region102: #{tpu_custom_call.1} parent=0
    _
  %s24 = ssub.s32 1, %s22
  %s25 = scalar_select 0, %s24, %s22
  $region1: #{tpu_custom_call.1} parent=0
    #allocation2 [shape = 'u8[16384]{0}', space=vmem, size = 0x4000, scoped, tag = 'input window, operand 5, single buffered']
    #allocation3 [shape = 's32[1]{0}', space=sflag, size = 0x4, scoped, tag = 'scoped memory for tpu_custom_call.1']
    #allocation4 [shape = 'u8[16384]{0}', space=vmem, size = 0x4000, scoped, tag = 'input window, operand 7, single buffered']
    #allocation5 [shape = 's32[1]{0}', space=sflag, size = 0x4, scoped, tag = 'scoped memory for tpu_custom_call.1']
    %26 = vsyncpa [#allocation3], 0
    %27 = vsyncpa [#allocation5], 0
    // Predicated region
    $region2: #{tpu_custom_call.1} parent=1 // pred_check
      _
    $region3: #{tpu_custom_call.1} parent=1 // pred_check_branch
      %29 = sbr.rel (0) target = $region5
    $region4: #{tpu_custom_call.1} parent=1 // pred_region
      _
    $region5: #{tpu_custom_call.1} parent=1 // pred_fallthru
      _
    // Predicated region
    $region6: #{tpu_custom_call.1} parent=1 // pred_check
      _
    $region7: #{tpu_custom_call.1} parent=1 // pred_check_branch
      %31 = sbr.rel (0) target = $region9
    $region8: #{tpu_custom_call.1} parent=1 // pred_region
      _
    $region9: #{tpu_custom_call.1} parent=1 // pred_fallthru
      _
    // Predicated region
    $region10: #{tpu_custom_call.1} parent=1 // pred_check
      _
    $region11: #{tpu_custom_call.1} parent=1 // pred_check_branch
      %33 = sbr.rel (0) target = $region13
    $region12: #{tpu_custom_call.1} parent=1 // pred_region
      _
    $region13: #{tpu_custom_call.1} parent=1 // pred_fallthru
      _
    // Predicated region
    $region14: #{tpu_custom_call.1} parent=1 // pred_check
      _
    $region15: #{tpu_custom_call.1} parent=1 // pred_check_branch
      %35 = sbr.rel (0) target = $region17
    $region16: #{tpu_custom_call.1} parent=1 // pred_region
      _
    $region17: #{tpu_custom_call.1} parent=1 // pred_fallthru
      _
    // Predicated region
    $region18: #{tpu_custom_call.1} parent=1 // pred_check
      _
    $region19: #{tpu_custom_call.1} parent=1 // pred_check_branch
      %37 = sbr.rel (0) target = $region21
    $region20: #{tpu_custom_call.1} parent=1 // pred_region
      _
    $region21: #{tpu_custom_call.1} parent=1 // pred_fallthru
      _
    // Predicated region
    $region22: #{tpu_custom_call.1} parent=1 // pred_check
      _
    $region23: #{tpu_custom_call.1} parent=1 // pred_check_branch
      %39 = sbr.rel (0) target = $region25
    $region24: #{tpu_custom_call.1} parent=1 // pred_region
      %s41 = ssub.s32 512, 512
      %42 = vsyncadd [#allocation3], %s41
      %s43 = sshll.u32 [#allocation2], 4
      %s44 = int_to_ptr.vmem [resolvable:$true] %s43
      %49 = dma.hbm_to_vmem [thread:$0]  %s5, 512, %s44, [#allocation3], 128, 128, 8
    $region25: #{tpu_custom_call.1} parent=1 // pred_fallthru
      _
    // Predicated region
    $region26: #{tpu_custom_call.1} parent=1 // pred_check
      _
    $region27: #{tpu_custom_call.1} parent=1 // pred_check_branch
      %51 = sbr.rel (0) target = $region29
    $region28: #{tpu_custom_call.1} parent=1 // pred_region
      _
    $region29: #{tpu_custom_call.1} parent=1 // pred_fallthru
      _
    // Predicated region
    $region30: #{tpu_custom_call.1} parent=1 // pred_check
      _
    $region31: #{tpu_custom_call.1} parent=1 // pred_check_branch
      %53 = sbr.rel (0) target = $region33
    $region32: #{tpu_custom_call.1} parent=1 // pred_region
      %s55 = ssub.s32 512, 512
      %56 = vsyncadd [#allocation5], %s55
      %s57 = sshll.u32 [#allocation4], 4
      %s58 = int_to_ptr.vmem [resolvable:$true] %s57
      %63 = dma.hbm_to_vmem [thread:$0]  %s7, 512, %s58, [#allocation5], 128, 128, 8
    $region33: #{tpu_custom_call.1} parent=1 // pred_fallthru
      _
    // Predicated region
    $region34: #{tpu_custom_call.1} parent=1 // pred_check
      _
    $region35: #{tpu_custom_call.1} parent=1 // pred_check_branch
      %65 = sbr.rel (0) target = $region37
    $region36: #{tpu_custom_call.1} parent=1 // pred_region
      _
    $region37: #{tpu_custom_call.1} parent=1 // pred_fallthru
      _
    // Predicated region
    $region38: #{tpu_custom_call.1} parent=1 // pred_check
      _
    $region39: #{tpu_custom_call.1} parent=1 // pred_check_branch
      %67 = sbr.rel (0) target = $region41
    $region40: #{tpu_custom_call.1} parent=1 // pred_region
      _
    $region41: #{tpu_custom_call.1} parent=1 // pred_fallthru
      _
    // Predicated region
    $region42: #{tpu_custom_call.1} parent=1 // pred_check
      _
    $region43: #{tpu_custom_call.1} parent=1 // pred_check_branch
      %69 = sbr.rel (0) target = $region45
    $region44: #{tpu_custom_call.1} parent=1 // pred_region
      _
    $region45: #{tpu_custom_call.1} parent=1 // pred_fallthru
      _
    // Predicated region
    $region46: #{tpu_custom_call.1} parent=1 // pred_check
      _
    $region47: #{tpu_custom_call.1} parent=1 // pred_check_branch
      %71 = sbr.rel (0) target = $region49
    $region48: #{tpu_custom_call.1} parent=1 // pred_region
      _
    $region49: #{tpu_custom_call.1} parent=1 // pred_fallthru
      _
    // Predicated region
    $region50: #{tpu_custom_call.1} parent=1 // pred_check
      _
    $region51: #{tpu_custom_call.1} parent=1 // pred_check_branch
      %73 = sbr.rel (0) target = $region53
    $region52: #{tpu_custom_call.1} parent=1 // pred_region
      _
    $region53: #{tpu_custom_call.1} parent=1 // pred_fallthru
      _
    // Predicated region
    $region54: #{tpu_custom_call.1} parent=1 // pred_check
      _
    $region55: #{tpu_custom_call.1} parent=1 // pred_check_branch
      %75 = sbr.rel (0) target = $region57
    $region56: #{tpu_custom_call.1} parent=1 // pred_region
      _
    $region57: #{tpu_custom_call.1} parent=1 // pred_fallthru
      _
    // Predicated region
    $region58: #{tpu_custom_call.1} parent=1 // pred_check
      _
    $region59: #{tpu_custom_call.1} parent=1 // pred_check_branch
      %77 = sbr.rel (0) target = $region61
    $region60: #{tpu_custom_call.1} parent=1 // pred_region
      _
    $region61: #{tpu_custom_call.1} parent=1 // pred_fallthru
      _
    // Predicated region
    $region62: #{tpu_custom_call.1} parent=1 // pred_check
      _
    $region63: #{tpu_custom_call.1} parent=1 // pred_check_branch
      %79 = sbr.rel (0) target = $region65
    $region64: #{tpu_custom_call.1} parent=1 // pred_region
      _
    $region65: #{tpu_custom_call.1} parent=1 // pred_fallthru
      _
    // Predicated region
    $region66: #{tpu_custom_call.1} parent=1 // pred_check
      _
    $region67: #{tpu_custom_call.1} parent=1 // pred_check_branch
      %81 = sbr.rel (0) target = $region69
    $region68: #{tpu_custom_call.1} parent=1 // pred_region
      _
    $region69: #{tpu_custom_call.1} parent=1 // pred_fallthru
      _
    // Predicated region
    $region70: #{tpu_custom_call.1} parent=1 // pred_check
      _
    $region71: #{tpu_custom_call.1} parent=1 // pred_check_branch
      %83 = sbr.rel (0) target = $region73
    $region72: #{tpu_custom_call.1} parent=1 // pred_region
      _
    $region73: #{tpu_custom_call.1} parent=1 // pred_fallthru
      _
    // Predicated region
    $region74: #{tpu_custom_call.1} parent=1 // pred_check
      _
    $region75: #{tpu_custom_call.1} parent=1 // pred_check_branch
      %85 = sbr.rel (0) target = $region77
    $region76: #{tpu_custom_call.1} parent=1 // pred_region
      _
    $region77: #{tpu_custom_call.1} parent=1 // pred_fallthru
      _
    // Predicated region
    $region78: #{tpu_custom_call.1} parent=1 // pred_check
      _
    $region79: #{tpu_custom_call.1} parent=1 // pred_check_branch
      %87 = sbr.rel (0) target = $region81
    $region80: #{tpu_custom_call.1} parent=1 // pred_region
      _
    $region81: #{tpu_custom_call.1} parent=1 // pred_fallthru
      _
    // Predicated region
    $region82: #{tpu_custom_call.1} parent=1 // pred_check
      _
    $region83: #{tpu_custom_call.1} parent=1 // pred_check_branch
      %89 = sbr.rel (0) target = $region85
    $region84: #{tpu_custom_call.1} parent=1 // pred_region
      _
    $region85: #{tpu_custom_call.1} parent=1 // pred_fallthru
      _
    // Predicated region
    $region86: #{tpu_custom_call.1} parent=1 // pred_check
      _
    $region87: #{tpu_custom_call.1} parent=1 // pred_check_branch
      %91 = sbr.rel (0) target = $region89
    $region88: #{tpu_custom_call.1} parent=1 // pred_region
      %92 = dma.done [#allocation3], 512
    $region89: #{tpu_custom_call.1} parent=1 // pred_fallthru
      _
    // Predicated region
    $region90: #{tpu_custom_call.1} parent=1 // pred_check
      _
    $region91: #{tpu_custom_call.1} parent=1 // pred_check_branch
      %94 = sbr.rel (0) target = $region93
    $region92: #{tpu_custom_call.1} parent=1 // pred_region
      %95 = dma.done [#allocation5], 512
    $region93: #{tpu_custom_call.1} parent=1 // pred_fallthru
      _
    %v96 = vld [vmem:[%s0] sm:$0xff]
    %v97 = vld [vmem:[%s0 + $0x8] sm:$0xff]
    %v98 = vld [vmem:[%s0 + $0x10] sm:$0xff]
    %v99 = vld [vmem:[%s0 + $0x18] sm:$0xff]
    %v100 = vld [vmem:[%s0 + $0x20] sm:$0xff]
    %v101 = vld [vmem:[%s0 + $0x28] sm:$0xf]
    %v102 = vld [vmem:[%s4] sm:$0x7]
    %v103 = vld [vmem:[%s1] sm:$0xff]
    %v104 = vld [vmem:[%s1 + $0x8] sm:$0xff]
    %v105 = vld [vmem:[%s1 + $0x10] sm:$0xff]
    %v106 = vld [vmem:[%s1 + $0x18] sm:$0xff]
    %v107 = vld [vmem:[%s1 + $0x20] sm:$0xff]
    %v108 = vld [vmem:[%s1 + $0x28] sm:$0xf]
    %110 = vset.pattern.permute.xlu0 0
    %111 = vperm.xlu0 %110, %v96
    %v112 = vpop.permute.xlu0 %111
    %115 = vset.pattern.permute.xlu0 0
    %116 = vperm.xlu0 %115, %v97
    %v117 = vpop.permute.xlu0 %116
    %120 = vset.pattern.permute.xlu0 0
    %121 = vperm.xlu0 %120, %v98
    %v122 = vpop.permute.xlu0 %121
    %125 = vset.pattern.permute.xlu0 0
    %126 = vperm.xlu0 %125, %v99
    %v127 = vpop.permute.xlu0 %126
    %130 = vset.pattern.permute.xlu0 0
    %131 = vperm.xlu0 %130, %v100
    %v132 = vpop.permute.xlu0 %131
    %135 = vset.pattern.permute.xlu0 0
    %136 = vperm.xlu0 %135, %v101
    %v137 = vpop.permute.xlu0 %136
    %v139 = vlaneseq
    %v140 = vshrl.u32 %v139, 7
    %v141 = vsub.s32 0, %v140
    %v142 = vrot.slane %v102, %v141
    %v143 = vmul.f32 %v112, %v142
    %v144 = vmul.f32 %v117, %v142
    %v145 = vmul.f32 %v122, %v142
    %v146 = vmul.f32 %v127, %v142
    %v147 = vmul.f32 %v132, %v142
    %v148 = vmul.f32 %v137, %v142
    %v149 = vadd.f32 %v103, %v143
    %v150 = vadd.f32 %v104, %v144
    %v151 = vadd.f32 %v105, %v145
    %v152 = vadd.f32 %v106, %v146
    %v153 = vadd.f32 %v107, %v147
    %v154 = vadd.f32 %v108, %v148
    %155 = vset.pattern.permute.xlu0 1
    %156 = vperm.xlu0 %155, %v96
    %v157 = vpop.permute.xlu0 %156
    %159 = vset.pattern.permute.xlu0 1
    %160 = vperm.xlu0 %159, %v97
    %v161 = vpop.permute.xlu0 %160
    %163 = vset.pattern.permute.xlu0 1
    %164 = vperm.xlu0 %163, %v98
    %v165 = vpop.permute.xlu0 %164
    %167 = vset.pattern.permute.xlu0 1
    %168 = vperm.xlu0 %167, %v99
    %v169 = vpop.permute.xlu0 %168
    %171 = vset.pattern.permute.xlu0 1
    %172 = vperm.xlu0 %171, %v100
    %v173 = vpop.permute.xlu0 %172
    %175 = vset.pattern.permute.xlu0 1
    %176 = vperm.xlu0 %175, %v101
    %v177 = vpop.permute.xlu0 %176
    %v179 = vlaneseq
    %v180 = vshrl.u32 %v179, 7
    %v181 = vsub.s32 1, %v180
    %v182 = vrot.slane %v102, %v181
    %v183 = vmul.f32 %v157, %v182
    %v184 = vmul.f32 %v161, %v182
    %v185 = vmul.f32 %v165, %v182
    %v186 = vmul.f32 %v169, %v182
    %v187 = vmul.f32 %v173, %v182
    %v188 = vmul.f32 %v177, %v182
    %v189 = vadd.f32 %v149, %v183
    %v190 = vadd.f32 %v150, %v184
    %v191 = vadd.f32 %v151, %v185
    %v192 = vadd.f32 %v152, %v186
    %v193 = vadd.f32 %v153, %v187
    %v194 = vadd.f32 %v154, %v188
    %195 = vset.pattern.permute.xlu0 2
    %196 = vperm.xlu0 %195, %v96
    %v197 = vpop.permute.xlu0 %196
    %199 = vset.pattern.permute.xlu0 2
    %200 = vperm.xlu0 %199, %v97
    %v201 = vpop.permute.xlu0 %200
    %203 = vset.pattern.permute.xlu0 2
    %204 = vperm.xlu0 %203, %v98
    %v205 = vpop.permute.xlu0 %204
    %207 = vset.pattern.permute.xlu0 2
    %208 = vperm.xlu0 %207, %v99
    %v209 = vpop.permute.xlu0 %208
    %211 = vset.pattern.permute.xlu0 2
    %212 = vperm.xlu0 %211, %v100
    %v213 = vpop.permute.xlu0 %212
    %215 = vset.pattern.permute.xlu0 2
    %216 = vperm.xlu0 %215, %v101
    %v217 = vpop.permute.xlu0 %216
    %v219 = vlaneseq
    %v220 = vshrl.u32 %v219, 7
    %v221 = vsub.s32 2, %v220
    %v222 = vrot.slane %v102, %v221
    %v223 = vmul.f32 %v197, %v222
    %v224 = vmul.f32 %v201, %v222
    %v225 = vmul.f32 %v205, %v222
    %v226 = vmul.f32 %v209, %v222
    %v227 = vmul.f32 %v213, %v222
    %v228 = vmul.f32 %v217, %v222
    %v229 = vadd.f32 %v189, %v223
    %v230 = vadd.f32 %v190, %v224
    %v231 = vadd.f32 %v191, %v225
    %v232 = vadd.f32 %v192, %v226
    %v233 = vadd.f32 %v193, %v227
    %v234 = vadd.f32 %v194, %v228
    %v235 = vld [vmem:[%s2] sm:$0x3]
    %v236 = vld [vmem:[#allocation2] sm:$0xff]
    %v237 = vld [vmem:[#allocation2 + $0x8] sm:$0xff]
    %v238 = vld [vmem:[#allocation2 + $0x10] sm:$0xff]
    %v239 = vld [vmem:[#allocation2 + $0x18] sm:$0xff]
    %v240 = vld [vmem:[%s6] sm:$0x1]
    %v242 = vlaneseq
    %v243 = vshrl.u32 %v242, 7
    %v244 = vsub.s32 0, %v243
    %v245 = vrot.slane %v240, %v244
    %vm247 = vcmask 261120
    %v249 = vsel %vm247, %v235, 0
    %251 = vmatprep.subr.mxu0 0.0
    %252 = vmatpush1.msra.mxu0 0.0
    %253 = vmatprep.subr.mxu0 0.0
    %254 = vmatpush1.msra.mxu0 0.0
    %255 = vmatprep.subr.mxu0 0.0
    %256 = vmatpush1.msra.mxu0 0.0
    %257 = vmatprep.subr.mxu0 0.0
    %258 = vmatpush1.msra.mxu0 0.0
    %259 = vmatprep.subr.mxu0 0.0
    %260 = vmatpush1.msra.mxu0 0.0
    %261 = vmatprep.subr.mxu0 0.0
    %262 = vmatpush1.msra.mxu0 0.0
    %263 = vmatprep.subr.mxu0 0.0
    %264 = vmatpush1.msra.mxu0 0.0
    %265 = vmatprep.subr.mxu0 0.0
    %266 = vmatpush1.msra.mxu0 0.0
    %267 = vmatprep.subr.mxu0 0.0
    %268 = vmatpush1.msra.mxu0 0.0
    %269 = vmatprep.subr.mxu0 0.0
    %270 = vmatpush1.msra.mxu0 0.0
    %271 = vmatprep.subr.mxu0 0.0
    %272 = vmatpush1.msra.mxu0 0.0
    %273 = vmatprep.subr.mxu0 0.0
    %274 = vmatpush1.msra.mxu0 0.0
    %275 = vmatprep.subr.mxu0 0.0
    %276 = vmatpush1.msra.mxu0 %v239
    %277 = vmatprep.subr.mxu0 0.0
    %278 = vmatpush1.msra.mxu0 %v238
    %279 = vmatprep.subr.mxu0 0.0
    %280 = vmatpush1.msra.mxu0 %v237
    %281 = vmatprep.subr.mxu0 0.0
    %282 = vmatpush1.msra.mxu0 %v236
    %283 = vmatprep.subr.mxu0 0.0
    %284 = vmatpush2.msra.mxu0 0.0
    %285 = vmatprep.subr.mxu0 0.0
    %286 = vmatpush2.msra.mxu0 0.0
    %287 = vmatprep.subr.mxu0 0.0
    %288 = vmatpush2.msra.mxu0 0.0
    %289 = vmatprep.subr.mxu0 0.0
    %290 = vmatpush2.msra.mxu0 0.0
    %291 = vmatprep.subr.mxu0 0.0
    %292 = vmatpush2.msra.mxu0 0.0
    %293 = vmatprep.subr.mxu0 0.0
    %294 = vmatpush2.msra.mxu0 0.0
    %295 = vmatprep.subr.mxu0 0.0
    %296 = vmatpush2.msra.mxu0 0.0
    %297 = vmatprep.subr.mxu0 0.0
    %298 = vmatpush2.msra.mxu0 0.0
    %299 = vmatprep.subr.mxu0 0.0
    %300 = vmatpush2.msra.mxu0 0.0
    %301 = vmatprep.subr.mxu0 0.0
    %302 = vmatpush2.msra.mxu0 0.0
    %303 = vmatprep.subr.mxu0 0.0
    %304 = vmatpush2.msra.mxu0 0.0
    %305 = vmatprep.subr.mxu0 0.0
    %306 = vmatpush2.msra.mxu0 0.0
    %307 = vmatprep.subr.mxu0 0.0
    %308 = vmatpush2.msra.mxu0 0.0
    %309 = vmatprep.subr.mxu0 0.0
    %310 = vmatpush2.msra.mxu0 0.0
    %311 = vmatprep.subr.mxu0 0.0
    %312 = vmatpush2.msra.mxu0 0.0
    %313 = vmatprep.subr.mxu0 0.0
    %314 = vmatpush2.msra.mxu0 0.0
    %315 = vmatprep.mubr.f32.mxu0 0.0
    %316 = vmatmul.mubr.f32.gmra.mxu0 %v249
    %v317 = vpop.f32.mrf.mxu0
    %v318 = vadd.f32 %v245, %v317
    %v319 = vpop.f32.mrf.mxu0
    %320 = vdwg.mxu0
    %v321 = vxor.u32 %v318, 2147483648
    %v322 = vmul.f32 %v321, 1.442695
    %v323 = vpow.pop %v322
    %v324 = vadd.f32 %v323, 1.0
    %v325 = vrcp.pop %v324
    %v326 = vmul.f32 1.0, %v325
    %v327 = vmul.f32 %v318, %v326
    %v328 = vld [vmem:[#allocation4] sm:$0xff]
    %v329 = vld [vmem:[#allocation4 + $0x8] sm:$0xff]
    %v330 = vld [vmem:[#allocation4 + $0x10] sm:$0xff]
    %v331 = vld [vmem:[#allocation4 + $0x18] sm:$0xff]
    %v332 = vld [vmem:[%s8] sm:$0x1]
    %v334 = vlaneseq
    %v335 = vshrl.u32 %v334, 7
    %v336 = vsub.s32 0, %v335
    %v337 = vrot.slane %v332, %v336
    %v340 = vsel %vm247, %v327, 0
    %342 = vmatprep.subr.mxu0 0.0
    %343 = vmatpush1.msra.mxu0 0.0
    %344 = vmatprep.subr.mxu0 0.0
    %345 = vmatpush1.msra.mxu0 0.0
    %346 = vmatprep.subr.mxu0 0.0
    %347 = vmatpush1.msra.mxu0 0.0
    %348 = vmatprep.subr.mxu0 0.0
    %349 = vmatpush1.msra.mxu0 0.0
    %350 = vmatprep.subr.mxu0 0.0
    %351 = vmatpush1.msra.mxu0 0.0
    %352 = vmatprep.subr.mxu0 0.0
    %353 = vmatpush1.msra.mxu0 0.0
    %354 = vmatprep.subr.mxu0 0.0
    %355 = vmatpush1.msra.mxu0 0.0
    %356 = vmatprep.subr.mxu0 0.0
    %357 = vmatpush1.msra.mxu0 0.0
    %358 = vmatprep.subr.mxu0 0.0
    %359 = vmatpush1.msra.mxu0 0.0
    %360 = vmatprep.subr.mxu0 0.0
    %361 = vmatpush1.msra.mxu0 0.0
    %362 = vmatprep.subr.mxu0 0.0
    %363 = vmatpush1.msra.mxu0 0.0
    %364 = vmatprep.subr.mxu0 0.0
    %365 = vmatpush1.msra.mxu0 0.0
    %366 = vmatprep.subr.mxu0 0.0
    %367 = vmatpush1.msra.mxu0 %v331
    %368 = vmatprep.subr.mxu0 0.0
    %369 = vmatpush1.msra.mxu0 %v330
    %370 = vmatprep.subr.mxu0 0.0
    %371 = vmatpush1.msra.mxu0 %v329
    %372 = vmatprep.subr.mxu0 0.0
    %373 = vmatpush1.msra.mxu0 %v328
    %374 = vmatprep.subr.mxu0 0.0
    %375 = vmatpush2.msra.mxu0 0.0
    %376 = vmatprep.subr.mxu0 0.0
    %377 = vmatpush2.msra.mxu0 0.0
    %378 = vmatprep.subr.mxu0 0.0
    %379 = vmatpush2.msra.mxu0 0.0
    %380 = vmatprep.subr.mxu0 0.0
    %381 = vmatpush2.msra.mxu0 0.0
    %382 = vmatprep.subr.mxu0 0.0
    %383 = vmatpush2.msra.mxu0 0.0
    %384 = vmatprep.subr.mxu0 0.0
    %385 = vmatpush2.msra.mxu0 0.0
    %386 = vmatprep.subr.mxu0 0.0
    %387 = vmatpush2.msra.mxu0 0.0
    %388 = vmatprep.subr.mxu0 0.0
    %389 = vmatpush2.msra.mxu0 0.0
    %390 = vmatprep.subr.mxu0 0.0
    %391 = vmatpush2.msra.mxu0 0.0
    %392 = vmatprep.subr.mxu0 0.0
    %393 = vmatpush2.msra.mxu0 0.0
    %394 = vmatprep.subr.mxu0 0.0
    %395 = vmatpush2.msra.mxu0 0.0
    %396 = vmatprep.subr.mxu0 0.0
    %397 = vmatpush2.msra.mxu0 0.0
    %398 = vmatprep.subr.mxu0 0.0
    %399 = vmatpush2.msra.mxu0 0.0
    %400 = vmatprep.subr.mxu0 0.0
    %401 = vmatpush2.msra.mxu0 0.0
    %402 = vmatprep.subr.mxu0 0.0
    %403 = vmatpush2.msra.mxu0 0.0
    %404 = vmatprep.subr.mxu0 0.0
    %405 = vmatpush2.msra.mxu0 0.0
    %406 = vmatprep.mubr.f32.mxu0 0.0
    %407 = vmatmul.mubr.f32.gmra.mxu0 %v340
    %v408 = vpop.f32.mrf.mxu0
    %v409 = vadd.f32 %v337, %v408
    %v410 = vpop.f32.mrf.mxu0
    %411 = vdwg.mxu0
    %v412 = vlaneseq
    %v413 = vshrl.u32 %v412, 7
    %v414 = vadd.s32 %v413, 8
    %v415 = vadd.s32 %v413, 16
    %v416 = vadd.s32 %v413, 24
    %v417 = vadd.s32 %v413, 32
    %v418 = vadd.s32 %v413, 40
    %vm419 = vcmp.ge.s32.totalorder %v413, 22
    %vm420 = vcmp.ge.s32.totalorder %v414, 22
    %vm421 = vcmp.ge.s32.totalorder %v415, 22
    %vm422 = vcmp.ge.s32.totalorder %v416, 22
    %vm423 = vcmp.ge.s32.totalorder %v417, 22
    %vm424 = vcmp.ge.s32.totalorder %v418, 22
    %v425 = vsel %vm419, 1, 0
    %v426 = vsel %vm420, 1, 0
    %v427 = vsel %vm421, 1, 0
    %v428 = vsel %vm422, 1, 0
    %v429 = vsel %vm423, 1, 0
    %v430 = vsel %vm424, 1, 0
    %vm431 = vcmp.eq.s32.totalorder %v425, 1
    %vm432 = vcmp.eq.s32.totalorder %v426, 1
    %vm433 = vcmp.eq.s32.totalorder %v427, 1
    %vm434 = vcmp.eq.s32.totalorder %v428, 1
    %vm435 = vcmp.eq.s32.totalorder %v429, 1
    %vm436 = vcmp.eq.s32.totalorder %v430, 1
    %v437 = vlaneseq
    %v438 = vshrl.u32 %v437, 7
    %v439 = vsub.s32 1, %v438
    %v440 = vrot.slane %v409, %v439
    %v441 = vlaneseq
    %v442 = vshrl.u32 %v441, 7
    %v443 = vsub.s32 0, %v442
    %v444 = vrot.slane %v409, %v443
    %v445 = vsel %vm431, %v440, %v444
    %v446 = vsel %vm432, %v440, %v444
    %v447 = vsel %vm433, %v440, %v444
    %v448 = vsel %vm434, %v440, %v444
    %v449 = vsel %vm435, %v440, %v444
    %v450 = vsel %vm436, %v440, %v444
    %vm451 = vcmp.eq.s32.totalorder %v413, 21
    %vm452 = vcmp.eq.s32.totalorder %v414, 21
    %vm453 = vcmp.eq.s32.totalorder %v415, 21
    %vm454 = vcmp.eq.s32.totalorder %v416, 21
    %vm455 = vcmp.eq.s32.totalorder %v417, 21
    %vm456 = vcmp.eq.s32.totalorder %v418, 21
    %vm457 = vcmp.eq.s32.totalorder %v413, 43
    %vm458 = vcmp.eq.s32.totalorder %v414, 43
    %vm459 = vcmp.eq.s32.totalorder %v415, 43
    %vm460 = vcmp.eq.s32.totalorder %v416, 43
    %vm461 = vcmp.eq.s32.totalorder %v417, 43
    %vm462 = vcmp.eq.s32.totalorder %v418, 43
    %vm463 = vmor %vm451, %vm457
    %vm464 = vmor %vm452, %vm458
    %vm465 = vmor %vm453, %vm459
    %vm466 = vmor %vm454, %vm460
    %vm467 = vmor %vm455, %vm461
    %vm468 = vmor %vm456, %vm462
    %v469 = vsel %vm463, 1, 0
    %v470 = vsel %vm464, 1, 0
    %v471 = vsel %vm465, 1, 0
    %v472 = vsel %vm466, 1, 0
    %v473 = vsel %vm467, 1, 0
    %v474 = vsel %vm468, 1, 0
    %vm475 = vcmp.eq.s32.totalorder %v469, 1
    %vm476 = vcmp.eq.s32.totalorder %v470, 1
    %vm477 = vcmp.eq.s32.totalorder %v471, 1
    %vm478 = vcmp.eq.s32.totalorder %v472, 1
    %vm479 = vcmp.eq.s32.totalorder %v473, 1
    %vm480 = vcmp.eq.s32.totalorder %v474, 1
    %v481 = vsel %vm475, %v445, %v229
    %v482 = vsel %vm476, %v446, %v230
    %v483 = vsel %vm477, %v447, %v231
    %v484 = vsel %vm478, %v448, %v232
    %v485 = vsel %vm479, %v449, %v233
    %v486 = vsel %vm480, %v450, %v234
    %v487 = vld [vmem:[%s3] sm:$0xff]
    %v488 = vld [vmem:[%s3 + $0x8] sm:$0xff]
    %v489 = vld [vmem:[%s3 + $0x10] sm:$0xff]
    %v490 = vld [vmem:[%s3 + $0x18] sm:$0xff]
    %v491 = vld [vmem:[%s3 + $0x20] sm:$0xff]
    %v492 = vld [vmem:[%s3 + $0x28] sm:$0xf]
    %v493 = vld [vmem:[%s9] sm:$0xff]
    %v494 = vld [vmem:[%s9 + $0x8] sm:$0xff]
    %v495 = vld [vmem:[%s9 + $0x10] sm:$0xff]
    %v496 = vld [vmem:[%s9 + $0x18] sm:$0xff]
    %v497 = vld [vmem:[%s10] sm:$0x1]
    %v498 = vld [vmem:[%s11] sm:$0xff]
    %v499 = vld [vmem:[%s11 + $0x8] sm:$0xff]
    %v500 = vld [vmem:[%s11 + $0x10] sm:$0xff]
    %v501 = vld [vmem:[%s11 + $0x18] sm:$0xff]
    %v502 = vld [vmem:[%s12] sm:$0x1]
    %v504 = vlaneseq
    %v505 = vshrl.u32 %v504, 7
    %v506 = vsub.s32 0, %v505
    %v507 = vrot.slane %v497, %v506
    %v510 = vsel %vm247, %v481, 0
    %v513 = vsel %vm247, %v482, 0
    %v516 = vsel %vm247, %v483, 0
    %v519 = vsel %vm247, %v484, 0
    %v522 = vsel %vm247, %v485, 0
    %v525 = vsel %vm247, %v486, 0
    %527 = vmatprep.subr.mxu0 0.0
    %528 = vmatpush1.msra.mxu0 0.0
    %529 = vmatprep.subr.mxu0 0.0
    %530 = vmatpush1.msra.mxu0 0.0
    %531 = vmatprep.subr.mxu0 0.0
    %532 = vmatpush1.msra.mxu0 0.0
    %533 = vmatprep.subr.mxu0 0.0
    %534 = vmatpush1.msra.mxu0 0.0
    %535 = vmatprep.subr.mxu0 0.0
    %536 = vmatpush1.msra.mxu0 0.0
    %537 = vmatprep.subr.mxu0 0.0
    %538 = vmatpush1.msra.mxu0 0.0
    %539 = vmatprep.subr.mxu0 0.0
    %540 = vmatpush1.msra.mxu0 0.0
    %541 = vmatprep.subr.mxu0 0.0
    %542 = vmatpush1.msra.mxu0 0.0
    %543 = vmatprep.subr.mxu0 0.0
    %544 = vmatpush1.msra.mxu0 0.0
    %545 = vmatprep.subr.mxu0 0.0
    %546 = vmatpush1.msra.mxu0 0.0
    %547 = vmatprep.subr.mxu0 0.0
    %548 = vmatpush1.msra.mxu0 0.0
    %549 = vmatprep.subr.mxu0 0.0
    %550 = vmatpush1.msra.mxu0 0.0
    %551 = vmatprep.subr.mxu0 0.0
    %552 = vmatpush1.msra.mxu0 %v496
    %553 = vmatprep.subr.mxu0 0.0
    %554 = vmatpush1.msra.mxu0 %v495
    %555 = vmatprep.subr.mxu0 0.0
    %556 = vmatpush1.msra.mxu0 %v494
    %557 = vmatprep.subr.mxu0 0.0
    %558 = vmatpush1.msra.mxu0 %v493
    %559 = vmatprep.subr.mxu0 0.0
    %560 = vmatpush2.msra.mxu0 0.0
    %561 = vmatprep.subr.mxu0 0.0
    %562 = vmatpush2.msra.mxu0 0.0
    %563 = vmatprep.subr.mxu0 0.0
    %564 = vmatpush2.msra.mxu0 0.0
    %565 = vmatprep.subr.mxu0 0.0
    %566 = vmatpush2.msra.mxu0 0.0
    %567 = vmatprep.subr.mxu0 0.0
    %568 = vmatpush2.msra.mxu0 0.0
    %569 = vmatprep.subr.mxu0 0.0
    %570 = vmatpush2.msra.mxu0 0.0
    %571 = vmatprep.subr.mxu0 0.0
    %572 = vmatpush2.msra.mxu0 0.0
    %573 = vmatprep.subr.mxu0 0.0
    %574 = vmatpush2.msra.mxu0 0.0
    %575 = vmatprep.subr.mxu0 0.0
    %576 = vmatpush2.msra.mxu0 0.0
    %577 = vmatprep.subr.mxu0 0.0
    %578 = vmatpush2.msra.mxu0 0.0
    %579 = vmatprep.subr.mxu0 0.0
    %580 = vmatpush2.msra.mxu0 0.0
    %581 = vmatprep.subr.mxu0 0.0
    %582 = vmatpush2.msra.mxu0 0.0
    %583 = vmatprep.subr.mxu0 0.0
    %584 = vmatpush2.msra.mxu0 0.0
    %585 = vmatprep.subr.mxu0 0.0
    %586 = vmatpush2.msra.mxu0 0.0
    %587 = vmatprep.subr.mxu0 0.0
    %588 = vmatpush2.msra.mxu0 0.0
    %589 = vmatprep.subr.mxu0 0.0
    %590 = vmatpush2.msra.mxu0 0.0
    %591 = vmatprep.mubr.f32.mxu0 0.0
    %592 = vmatmul.mubr.f32.gmra.mxu0 %v510
    %v593 = vpop.f32.mrf.mxu0
    %v594 = vadd.f32 %v507, %v593
    %v595 = vpop.f32.mrf.mxu0
    %596 = vmatprep.mubr.f32.mxu0 0.0
    %597 = vmatmul.mubr.f32.gmra.mxu0 %v513
    %v598 = vpop.f32.mrf.mxu0
    %v599 = vadd.f32 %v507, %v598
    %v600 = vpop.f32.mrf.mxu0
    %601 = vmatprep.mubr.f32.mxu0 0.0
    %602 = vmatmul.mubr.f32.gmra.mxu0 %v516
    %v603 = vpop.f32.mrf.mxu0
    %v604 = vadd.f32 %v507, %v603
    %v605 = vpop.f32.mrf.mxu0
    %606 = vmatprep.mubr.f32.mxu0 0.0
    %607 = vmatmul.mubr.f32.gmra.mxu0 %v519
    %v608 = vpop.f32.mrf.mxu0
    %v609 = vadd.f32 %v507, %v608
    %v610 = vpop.f32.mrf.mxu0
    %611 = vmatprep.mubr.f32.mxu0 0.0
    %612 = vmatmul.mubr.f32.gmra.mxu0 %v522
    %v613 = vpop.f32.mrf.mxu0
    %v614 = vadd.f32 %v507, %v613
    %v615 = vpop.f32.mrf.mxu0
    %616 = vmatprep.mubr.f32.mxu0 0.0
    %617 = vmatmul.mubr.f32.gmra.mxu0 %v525
    %v618 = vpop.f32.mrf.mxu0
    %v619 = vadd.f32 %v507, %v618
    %v620 = vpop.f32.mrf.mxu0
    %621 = vdwg.mxu0
    %628 = vrot.lane.b32.xlu0 %v594, 96
    %v629 = vpop.permute.xlu0 %628
    %630 = vrot.lane.b32.xlu0 %v599, 96
    %v631 = vpop.permute.xlu0 %630
    %632 = vrot.lane.b32.xlu0 %v604, 96
    %v633 = vpop.permute.xlu0 %632
    %634 = vrot.lane.b32.xlu0 %v609, 96
    %v635 = vpop.permute.xlu0 %634
    %636 = vrot.lane.b32.xlu0 %v614, 96
    %v637 = vpop.permute.xlu0 %636
    %638 = vrot.lane.b32.xlu0 %v619, 96
    %v639 = vpop.permute.xlu0 %638
    %vm640 = vcmask 64512
    %v641 = vsel %vm640, %v594, 0
    %v643 = vsel %vm640, %v599, 0
    %v645 = vsel %vm640, %v604, 0
    %v647 = vsel %vm640, %v609, 0
    %v649 = vsel %vm640, %v614, 0
    %v651 = vsel %vm640, %v619, 0
    %v653 = vsel %vm640, %v629, 0
    %v655 = vsel %vm640, %v631, 0
    %v657 = vsel %vm640, %v633, 0
    %v659 = vsel %vm640, %v635, 0
    %v661 = vsel %vm640, %v637, 0
    %v663 = vsel %vm640, %v639, 0
    %665 = vmatprep.subr.mxu0 0.0
    %666 = vmatpush1.xpose.msra.mxu0 0.0
    %667 = vmatprep.subr.mxu0 0.0
    %668 = vmatpush1.xpose.msra.mxu0 0.0
    %669 = vmatprep.subr.mxu0 0.0
    %670 = vmatpush1.xpose.msra.mxu0 0.0
    %671 = vmatprep.subr.mxu0 0.0
    %672 = vmatpush1.xpose.msra.mxu0 0.0
    %673 = vmatprep.subr.mxu0 0.0
    %674 = vmatpush1.xpose.msra.mxu0 0.0
    %675 = vmatprep.subr.mxu0 0.0
    %676 = vmatpush1.xpose.msra.mxu0 0.0
    %677 = vmatprep.subr.mxu0 0.0
    %678 = vmatpush1.xpose.msra.mxu0 0.0
    %679 = vmatprep.subr.mxu0 0.0
    %680 = vmatpush1.xpose.msra.mxu0 0.0
    %681 = vmatprep.subr.mxu0 0.0
    %682 = vmatpush1.xpose.msra.mxu0 0.0
    %683 = vmatprep.subr.mxu0 0.0
    %684 = vmatpush1.xpose.msra.mxu0 0.0
    %685 = vmatprep.subr.mxu0 0.0
    %686 = vmatpush1.xpose.msra.mxu0 %v663
    %687 = vmatprep.subr.mxu0 0.0
    %688 = vmatpush1.xpose.msra.mxu0 %v661
    %689 = vmatprep.subr.mxu0 0.0
    %690 = vmatpush1.xpose.msra.mxu0 %v659
    %691 = vmatprep.subr.mxu0 0.0
    %692 = vmatpush1.xpose.msra.mxu0 %v657
    %693 = vmatprep.subr.mxu0 0.0
    %694 = vmatpush1.xpose.msra.mxu0 %v655
    %695 = vmatprep.subr.mxu0 0.0
    %696 = vmatpush1.xpose.msra.mxu0 %v653
    %697 = vmatprep.subr.mxu0 0.0
    %698 = vmatpush2.xpose.msra.mxu0 0.0
    %699 = vmatprep.subr.mxu0 0.0
    %700 = vmatpush2.xpose.msra.mxu0 0.0
    %701 = vmatprep.subr.mxu0 0.0
    %702 = vmatpush2.xpose.msra.mxu0 0.0
    %703 = vmatprep.subr.mxu0 0.0
    %704 = vmatpush2.xpose.msra.mxu0 0.0
    %705 = vmatprep.subr.mxu0 0.0
    %706 = vmatpush2.xpose.msra.mxu0 0.0
    %707 = vmatprep.subr.mxu0 0.0
    %708 = vmatpush2.xpose.msra.mxu0 0.0
    %709 = vmatprep.subr.mxu0 0.0
    %710 = vmatpush2.xpose.msra.mxu0 0.0
    %711 = vmatprep.subr.mxu0 0.0
    %712 = vmatpush2.xpose.msra.mxu0 0.0
    %713 = vmatprep.subr.mxu0 0.0
    %714 = vmatpush2.xpose.msra.mxu0 0.0
    %715 = vmatprep.subr.mxu0 0.0
    %716 = vmatpush2.xpose.msra.mxu0 0.0
    %717 = vmatprep.subr.mxu0 0.0
    %718 = vmatpush2.xpose.msra.mxu0 0.0
    %719 = vmatprep.subr.mxu0 0.0
    %720 = vmatpush2.xpose.msra.mxu0 0.0
    %721 = vmatprep.subr.mxu0 0.0
    %722 = vmatpush2.xpose.msra.mxu0 0.0
    %723 = vmatprep.subr.mxu0 0.0
    %724 = vmatpush2.xpose.msra.mxu0 0.0
    %725 = vmatprep.subr.mxu0 0.0
    %726 = vmatpush2.xpose.msra.mxu0 0.0
    %727 = vmatprep.subr.mxu0 0.0
    %728 = vmatpush2.xpose.msra.mxu0 0.0
    %729 = vmatprep.mubr.f32.mxu0 0.0
    %730 = vmatmul.mubr.f32.gmra.mxu0 %v641
    %v731 = vpop.f32.mrf.mxu0
    %v732 = vadd.f32 %v487, %v731
    %v733 = vpop.f32.mrf.mxu0
    %734 = vmatprep.mubr.f32.mxu0 0.0
    %735 = vmatmul.mubr.f32.gmra.mxu0 %v643
    %v736 = vpop.f32.mrf.mxu0
    %v737 = vadd.f32 %v488, %v736
    %v738 = vpop.f32.mrf.mxu0
    %739 = vmatprep.mubr.f32.mxu0 0.0
    %740 = vmatmul.mubr.f32.gmra.mxu0 %v645
    %v741 = vpop.f32.mrf.mxu0
    %v742 = vadd.f32 %v489, %v741
    %v743 = vpop.f32.mrf.mxu0
    %744 = vmatprep.mubr.f32.mxu0 0.0
    %745 = vmatmul.mubr.f32.gmra.mxu0 %v647
    %v746 = vpop.f32.mrf.mxu0
    %v747 = vadd.f32 %v490, %v746
    %v748 = vpop.f32.mrf.mxu0
    %749 = vmatprep.mubr.f32.mxu0 0.0
    %750 = vmatmul.mubr.f32.gmra.mxu0 %v649
    %v751 = vpop.f32.mrf.mxu0
    %v752 = vadd.f32 %v491, %v751
    %v753 = vpop.f32.mrf.mxu0
    %754 = vmatprep.mubr.f32.mxu0 0.0
    %755 = vmatmul.mubr.f32.gmra.mxu0 %v651
    %v756 = vpop.f32.mrf.mxu0
    %v757 = vadd.f32 %v492, %v756
    %v758 = vpop.f32.mrf.mxu0
    %759 = vdwg.mxu0
    %vm760 = vcmask 359424
    %v761 = vsel %vm760, %v732, -inf
    %762 = vmax.xlane.f32.xlu0 %v761
    %v763 = vpop.xlane.xlu0 %762
    %v764 = vsel %vm760, %v737, -inf
    %765 = vmax.xlane.f32.xlu0 %v764
    %v766 = vpop.xlane.xlu0 %765
    %v767 = vsel %vm760, %v742, -inf
    %768 = vmax.xlane.f32.xlu0 %v767
    %v769 = vpop.xlane.xlu0 %768
    %v770 = vsel %vm760, %v747, -inf
    %771 = vmax.xlane.f32.xlu0 %v770
    %v772 = vpop.xlane.xlu0 %771
    %v773 = vsel %vm760, %v752, -inf
    %774 = vmax.xlane.f32.xlu0 %v773
    %v775 = vpop.xlane.xlu0 %774
    %vm776 = vcmask 355328
    %v777 = vsel %vm776, %v757, -inf
    %778 = vmax.xlane.f32.xlu0 %v777
    %v779 = vpop.xlane.xlu0 %778
    %v780 = vsub.f32 %v732, %v763
    %v781 = vsub.f32 %v737, %v766
    %v782 = vsub.f32 %v742, %v769
    %v783 = vsub.f32 %v747, %v772
    %v784 = vsub.f32 %v752, %v775
    %v785 = vsub.f32 %v757, %v779
    %v786 = vmul.f32 %v780, 1.442695
    %v787 = vpow.pop %v786
    %v788 = vmul.f32 %v781, 1.442695
    %v789 = vpow.pop %v788
    %v790 = vmul.f32 %v782, 1.442695
    %v791 = vpow.pop %v790
    %v792 = vmul.f32 %v783, 1.442695
    %v793 = vpow.pop %v792
    %v794 = vmul.f32 %v784, 1.442695
    %v795 = vpow.pop %v794
    %v796 = vmul.f32 %v785, 1.442695
    %v797 = vpow.pop %v796
    %v798 = vsel %vm760, %v787, 0.0
    %799 = vadd.xlane.f32.xlu0 %v798
    %v800 = vpop.xlane.xlu0 %799
    %v801 = vsel %vm760, %v789, 0.0
    %802 = vadd.xlane.f32.xlu0 %v801
    %v803 = vpop.xlane.xlu0 %802
    %v804 = vsel %vm760, %v791, 0.0
    %805 = vadd.xlane.f32.xlu0 %v804
    %v806 = vpop.xlane.xlu0 %805
    %v807 = vsel %vm760, %v793, 0.0
    %808 = vadd.xlane.f32.xlu0 %v807
    %v809 = vpop.xlane.xlu0 %808
    %v810 = vsel %vm760, %v795, 0.0
    %811 = vadd.xlane.f32.xlu0 %v810
    %v812 = vpop.xlane.xlu0 %811
    %v813 = vsel %vm776, %v797, 0.0
    %814 = vadd.xlane.f32.xlu0 %v813
    %v815 = vpop.xlane.xlu0 %814
    %v816 = vrcp.pop %v800
    %v817 = vrcp.pop %v803
    %v818 = vrcp.pop %v806
    %v819 = vrcp.pop %v809
    %v820 = vrcp.pop %v812
    %v821 = vrcp.pop %v815
    %v822 = vmul.f32 %v787, %v816
    %v823 = vmul.f32 %v789, %v817
    %v824 = vmul.f32 %v791, %v818
    %v825 = vmul.f32 %v793, %v819
    %v826 = vmul.f32 %v795, %v820
    %v827 = vmul.f32 %v797, %v821
    %828 = vrot.lane.b32.xlu0 %v594, 64
    %v829 = vpop.permute.xlu0 %828
    %830 = vrot.lane.b32.xlu0 %v599, 64
    %v831 = vpop.permute.xlu0 %830
    %832 = vrot.lane.b32.xlu0 %v604, 64
    %v833 = vpop.permute.xlu0 %832
    %834 = vrot.lane.b32.xlu0 %v609, 64
    %v835 = vpop.permute.xlu0 %834
    %836 = vrot.lane.b32.xlu0 %v614, 64
    %v837 = vpop.permute.xlu0 %836
    %838 = vrot.lane.b32.xlu0 %v619, 64
    %v839 = vpop.permute.xlu0 %838
    %v846 = vsel %vm760, %v822, 0
    %v849 = vsel %vm760, %v823, 0
    %v852 = vsel %vm760, %v824, 0
    %v855 = vsel %vm760, %v825, 0
    %v858 = vsel %vm760, %v826, 0
    %v861 = vsel %vm760, %v827, 0
    %vm863 = vcmask 1043456
    %v864 = vsel %vm863, %v839, 0
    %866 = vmatprep.subr.mxu0 0.0
    %867 = vmatpush1.msra.mxu0 0.0
    %868 = vmatprep.subr.mxu0 0.0
    %869 = vmatpush1.msra.mxu0 0.0
    %870 = vmatprep.subr.mxu0 0.0
    %871 = vmatpush1.msra.mxu0 0.0
    %872 = vmatprep.subr.mxu0 0.0
    %873 = vmatpush1.msra.mxu0 0.0
    %874 = vmatprep.subr.mxu0 0.0
    %875 = vmatpush1.msra.mxu0 0.0
    %876 = vmatprep.subr.mxu0 0.0
    %877 = vmatpush1.msra.mxu0 0.0
    %878 = vmatprep.subr.mxu0 0.0
    %879 = vmatpush1.msra.mxu0 0.0
    %880 = vmatprep.subr.mxu0 0.0
    %881 = vmatpush1.msra.mxu0 0.0
    %882 = vmatprep.subr.mxu0 0.0
    %883 = vmatpush1.msra.mxu0 0.0
    %884 = vmatprep.subr.mxu0 0.0
    %885 = vmatpush1.msra.mxu0 0.0
    %886 = vmatprep.subr.mxu0 0.0
    %887 = vmatpush1.msra.mxu0 %v864
    %888 = vmatprep.subr.mxu0 0.0
    %889 = vmatpush1.msra.mxu0 %v837
    %890 = vmatprep.subr.mxu0 0.0
    %891 = vmatpush1.msra.mxu0 %v835
    %892 = vmatprep.subr.mxu0 0.0
    %893 = vmatpush1.msra.mxu0 %v833
    %894 = vmatprep.subr.mxu0 0.0
    %895 = vmatpush1.msra.mxu0 %v831
    %896 = vmatprep.subr.mxu0 0.0
    %897 = vmatpush1.msra.mxu0 %v829
    %898 = vmatprep.subr.mxu0 0.0
    %899 = vmatpush2.msra.mxu0 0.0
    %900 = vmatprep.subr.mxu0 0.0
    %901 = vmatpush2.msra.mxu0 0.0
    %902 = vmatprep.subr.mxu0 0.0
    %903 = vmatpush2.msra.mxu0 0.0
    %904 = vmatprep.subr.mxu0 0.0
    %905 = vmatpush2.msra.mxu0 0.0
    %906 = vmatprep.subr.mxu0 0.0
    %907 = vmatpush2.msra.mxu0 0.0
    %908 = vmatprep.subr.mxu0 0.0
    %909 = vmatpush2.msra.mxu0 0.0
    %910 = vmatprep.subr.mxu0 0.0
    %911 = vmatpush2.msra.mxu0 0.0
    %912 = vmatprep.subr.mxu0 0.0
    %913 = vmatpush2.msra.mxu0 0.0
    %914 = vmatprep.subr.mxu0 0.0
    %915 = vmatpush2.msra.mxu0 0.0
    %916 = vmatprep.subr.mxu0 0.0
    %917 = vmatpush2.msra.mxu0 0.0
    %918 = vmatprep.subr.mxu0 0.0
    %919 = vmatpush2.msra.mxu0 0.0
    %920 = vmatprep.subr.mxu0 0.0
    %921 = vmatpush2.msra.mxu0 0.0
    %922 = vmatprep.subr.mxu0 0.0
    %923 = vmatpush2.msra.mxu0 0.0
    %924 = vmatprep.subr.mxu0 0.0
    %925 = vmatpush2.msra.mxu0 0.0
    %926 = vmatprep.subr.mxu0 0.0
    %927 = vmatpush2.msra.mxu0 0.0
    %928 = vmatprep.subr.mxu0 0.0
    %929 = vmatpush2.msra.mxu0 0.0
    %930 = vmatprep.mubr.f32.mxu0 0.0
    %931 = vmatmul.mubr.f32.gmra.mxu0 %v846
    %v932 = vpop.f32.mrf.mxu0
    %v933 = vadd.f32 0.0, %v932
    %v934 = vpop.f32.mrf.mxu0
    %935 = vmatprep.mubr.f32.mxu0 0.0
    %936 = vmatmul.mubr.f32.gmra.mxu0 %v849
    %v937 = vpop.f32.mrf.mxu0
    %v938 = vadd.f32 0.0, %v937
    %v939 = vpop.f32.mrf.mxu0
    %940 = vmatprep.mubr.f32.mxu0 0.0
    %941 = vmatmul.mubr.f32.gmra.mxu0 %v852
    %v942 = vpop.f32.mrf.mxu0
    %v943 = vadd.f32 0.0, %v942
    %v944 = vpop.f32.mrf.mxu0
    %945 = vmatprep.mubr.f32.mxu0 0.0
    %946 = vmatmul.mubr.f32.gmra.mxu0 %v855
    %v947 = vpop.f32.mrf.mxu0
    %v948 = vadd.f32 0.0, %v947
    %v949 = vpop.f32.mrf.mxu0
    %950 = vmatprep.mubr.f32.mxu0 0.0
    %951 = vmatmul.mubr.f32.gmra.mxu0 %v858
    %v952 = vpop.f32.mrf.mxu0
    %v953 = vadd.f32 0.0, %v952
    %v954 = vpop.f32.mrf.mxu0
    %955 = vmatprep.mubr.f32.mxu0 0.0
    %956 = vmatmul.mubr.f32.gmra.mxu0 %v861
    %v957 = vpop.f32.mrf.mxu0
    %v958 = vadd.f32 0.0, %v957
    %v959 = vpop.f32.mrf.mxu0
    %960 = vdwg.mxu0
    %961 = vrot.lane.b32.xlu0 %v594, 120
    %v962 = vpop.permute.xlu0 %961
    %963 = vrot.lane.b32.xlu0 %v599, 120
    %v964 = vpop.permute.xlu0 %963
    %965 = vrot.lane.b32.xlu0 %v604, 120
    %v966 = vpop.permute.xlu0 %965
    %967 = vrot.lane.b32.xlu0 %v609, 120
    %v968 = vpop.permute.xlu0 %967
    %969 = vrot.lane.b32.xlu0 %v614, 120
    %v970 = vpop.permute.xlu0 %969
    %971 = vrot.lane.b32.xlu0 %v619, 120
    %v972 = vpop.permute.xlu0 %971
    %973 = vrot.lane.b32.xlu0 %v594, 88
    %v974 = vpop.permute.xlu0 %973
    %975 = vrot.lane.b32.xlu0 %v599, 88
    %v976 = vpop.permute.xlu0 %975
    %977 = vrot.lane.b32.xlu0 %v604, 88
    %v978 = vpop.permute.xlu0 %977
    %979 = vrot.lane.b32.xlu0 %v609, 88
    %v980 = vpop.permute.xlu0 %979
    %981 = vrot.lane.b32.xlu0 %v614, 88
    %v982 = vpop.permute.xlu0 %981
    %983 = vrot.lane.b32.xlu0 %v619, 88
    %v984 = vpop.permute.xlu0 %983
    %v985 = vsel %vm640, %v962, 0
    %v987 = vsel %vm640, %v964, 0
    %v989 = vsel %vm640, %v966, 0
    %v991 = vsel %vm640, %v968, 0
    %v993 = vsel %vm640, %v970, 0
    %v995 = vsel %vm640, %v972, 0
    %v997 = vsel %vm640, %v974, 0
    %v999 = vsel %vm640, %v976, 0
    %v1001 = vsel %vm640, %v978, 0
    %v1003 = vsel %vm640, %v980, 0
    %v1005 = vsel %vm640, %v982, 0
    %v1007 = vsel %vm640, %v984, 0
    %1009 = vmatprep.subr.mxu0 0.0
    %1010 = vmatpush1.xpose.msra.mxu0 0.0
    %1011 = vmatprep.subr.mxu0 0.0
    %1012 = vmatpush1.xpose.msra.mxu0 0.0
    %1013 = vmatprep.subr.mxu0 0.0
    %1014 = vmatpush1.xpose.msra.mxu0 0.0
    %1015 = vmatprep.subr.mxu0 0.0
    %1016 = vmatpush1.xpose.msra.mxu0 0.0
    %1017 = vmatprep.subr.mxu0 0.0
    %1018 = vmatpush1.xpose.msra.mxu0 0.0
    %1019 = vmatprep.subr.mxu0 0.0
    %1020 = vmatpush1.xpose.msra.mxu0 0.0
    %1021 = vmatprep.subr.mxu0 0.0
    %1022 = vmatpush1.xpose.msra.mxu0 0.0
    %1023 = vmatprep.subr.mxu0 0.0
    %1024 = vmatpush1.xpose.msra.mxu0 0.0
    %1025 = vmatprep.subr.mxu0 0.0
    %1026 = vmatpush1.xpose.msra.mxu0 0.0
    %1027 = vmatprep.subr.mxu0 0.0
    %1028 = vmatpush1.xpose.msra.mxu0 0.0
    %1029 = vmatprep.subr.mxu0 0.0
    %1030 = vmatpush1.xpose.msra.mxu0 %v1007
    %1031 = vmatprep.subr.mxu0 0.0
    %1032 = vmatpush1.xpose.msra.mxu0 %v1005
    %1033 = vmatprep.subr.mxu0 0.0
    %1034 = vmatpush1.xpose.msra.mxu0 %v1003
    %1035 = vmatprep.subr.mxu0 0.0
    %1036 = vmatpush1.xpose.msra.mxu0 %v1001
    %1037 = vmatprep.subr.mxu0 0.0
    %1038 = vmatpush1.xpose.msra.mxu0 %v999
    %1039 = vmatprep.subr.mxu0 0.0
    %1040 = vmatpush1.xpose.msra.mxu0 %v997
    %1041 = vmatprep.subr.mxu0 0.0
    %1042 = vmatpush2.xpose.msra.mxu0 0.0
    %1043 = vmatprep.subr.mxu0 0.0
    %1044 = vmatpush2.xpose.msra.mxu0 0.0
    %1045 = vmatprep.subr.mxu0 0.0
    %1046 = vmatpush2.xpose.msra.mxu0 0.0
    %1047 = vmatprep.subr.mxu0 0.0
    %1048 = vmatpush2.xpose.msra.mxu0 0.0
    %1049 = vmatprep.subr.mxu0 0.0
    %1050 = vmatpush2.xpose.msra.mxu0 0.0
    %1051 = vmatprep.subr.mxu0 0.0
    %1052 = vmatpush2.xpose.msra.mxu0 0.0
    %1053 = vmatprep.subr.mxu0 0.0
    %1054 = vmatpush2.xpose.msra.mxu0 0.0
    %1055 = vmatprep.subr.mxu0 0.0
    %1056 = vmatpush2.xpose.msra.mxu0 0.0
    %1057 = vmatprep.subr.mxu0 0.0
    %1058 = vmatpush2.xpose.msra.mxu0 0.0
    %1059 = vmatprep.subr.mxu0 0.0
    %1060 = vmatpush2.xpose.msra.mxu0 0.0
    %1061 = vmatprep.subr.mxu0 0.0
    %1062 = vmatpush2.xpose.msra.mxu0 0.0
    %1063 = vmatprep.subr.mxu0 0.0
    %1064 = vmatpush2.xpose.msra.mxu0 0.0
    %1065 = vmatprep.subr.mxu0 0.0
    %1066 = vmatpush2.xpose.msra.mxu0 0.0
    %1067 = vmatprep.subr.mxu0 0.0
    %1068 = vmatpush2.xpose.msra.mxu0 0.0
    %1069 = vmatprep.subr.mxu0 0.0
    %1070 = vmatpush2.xpose.msra.mxu0 0.0
    %1071 = vmatprep.subr.mxu0 0.0
    %1072 = vmatpush2.xpose.msra.mxu0 0.0
    %1073 = vmatprep.mubr.f32.mxu0 0.0
    %1074 = vmatmul.mubr.f32.gmra.mxu0 %v985
    %v1075 = vpop.f32.mrf.mxu0
    %v1076 = vadd.f32 %v487, %v1075
    %v1077 = vpop.f32.mrf.mxu0
    %1078 = vmatprep.mubr.f32.mxu0 0.0
    %1079 = vmatmul.mubr.f32.gmra.mxu0 %v987
    %v1080 = vpop.f32.mrf.mxu0
    %v1081 = vadd.f32 %v488, %v1080
    %v1082 = vpop.f32.mrf.mxu0
    %1083 = vmatprep.mubr.f32.mxu0 0.0
    %1084 = vmatmul.mubr.f32.gmra.mxu0 %v989
    %v1085 = vpop.f32.mrf.mxu0
    %v1086 = vadd.f32 %v489, %v1085
    %v1087 = vpop.f32.mrf.mxu0
    %1088 = vmatprep.mubr.f32.mxu0 0.0
    %1089 = vmatmul.mubr.f32.gmra.mxu0 %v991
    %v1090 = vpop.f32.mrf.mxu0
    %v1091 = vadd.f32 %v490, %v1090
    %v1092 = vpop.f32.mrf.mxu0
    %1093 = vmatprep.mubr.f32.mxu0 0.0
    %1094 = vmatmul.mubr.f32.gmra.mxu0 %v993
    %v1095 = vpop.f32.mrf.mxu0
    %v1096 = vadd.f32 %v491, %v1095
    %v1097 = vpop.f32.mrf.mxu0
    %1098 = vmatprep.mubr.f32.mxu0 0.0
    %1099 = vmatmul.mubr.f32.gmra.mxu0 %v995
    %v1100 = vpop.f32.mrf.mxu0
    %v1101 = vadd.f32 %v492, %v1100
    %v1102 = vpop.f32.mrf.mxu0
    %1103 = vdwg.mxu0
    %v1104 = vsel %vm760, %v1076, -inf
    %1105 = vmax.xlane.f32.xlu0 %v1104
    %v1106 = vpop.xlane.xlu0 %1105
    %v1107 = vsel %vm760, %v1081, -inf
    %1108 = vmax.xlane.f32.xlu0 %v1107
    %v1109 = vpop.xlane.xlu0 %1108
    %v1110 = vsel %vm760, %v1086, -inf
    %1111 = vmax.xlane.f32.xlu0 %v1110
    %v1112 = vpop.xlane.xlu0 %1111
    %v1113 = vsel %vm760, %v1091, -inf
    %1114 = vmax.xlane.f32.xlu0 %v1113
    %v1115 = vpop.xlane.xlu0 %1114
    %v1116 = vsel %vm760, %v1096, -inf
    %1117 = vmax.xlane.f32.xlu0 %v1116
    %v1118 = vpop.xlane.xlu0 %1117
    %v1119 = vsel %vm776, %v1101, -inf
    %1120 = vmax.xlane.f32.xlu0 %v1119
    %v1121 = vpop.xlane.xlu0 %1120
    %v1122 = vsub.f32 %v1076, %v1106
    %v1123 = vsub.f32 %v1081, %v1109
    %v1124 = vsub.f32 %v1086, %v1112
    %v1125 = vsub.f32 %v1091, %v1115
    %v1126 = vsub.f32 %v1096, %v1118
    %v1127 = vsub.f32 %v1101, %v1121
    %v1128 = vmul.f32 %v1122, 1.442695
    %v1129 = vpow.pop %v1128
    %v1130 = vmul.f32 %v1123, 1.442695
    %v1131 = vpow.pop %v1130
    %v1132 = vmul.f32 %v1124, 1.442695
    %v1133 = vpow.pop %v1132
    %v1134 = vmul.f32 %v1125, 1.442695
    %v1135 = vpow.pop %v1134
    %v1136 = vmul.f32 %v1126, 1.442695
    %v1137 = vpow.pop %v1136
    %v1138 = vmul.f32 %v1127, 1.442695
    %v1139 = vpow.pop %v1138
    %v1140 = vsel %vm760, %v1129, 0.0
    %1141 = vadd.xlane.f32.xlu0 %v1140
    %v1142 = vpop.xlane.xlu0 %1141
    %v1143 = vsel %vm760, %v1131, 0.0
    %1144 = vadd.xlane.f32.xlu0 %v1143
    %v1145 = vpop.xlane.xlu0 %1144
    %v1146 = vsel %vm760, %v1133, 0.0
    %1147 = vadd.xlane.f32.xlu0 %v1146
    %v1148 = vpop.xlane.xlu0 %1147
    %v1149 = vsel %vm760, %v1135, 0.0
    %1150 = vadd.xlane.f32.xlu0 %v1149
    %v1151 = vpop.xlane.xlu0 %1150
    %v1152 = vsel %vm760, %v1137, 0.0
    %1153 = vadd.xlane.f32.xlu0 %v1152
    %v1154 = vpop.xlane.xlu0 %1153
    %v1155 = vsel %vm776, %v1139, 0.0
    %1156 = vadd.xlane.f32.xlu0 %v1155
    %v1157 = vpop.xlane.xlu0 %1156
    %v1158 = vrcp.pop %v1142
    %v1159 = vrcp.pop %v1145
    %v1160 = vrcp.pop %v1148
    %v1161 = vrcp.pop %v1151
    %v1162 = vrcp.pop %v1154
    %v1163 = vrcp.pop %v1157
    %v1164 = vmul.f32 %v1129, %v1158
    %v1165 = vmul.f32 %v1131, %v1159
    %v1166 = vmul.f32 %v1133, %v1160
    %v1167 = vmul.f32 %v1135, %v1161
    %v1168 = vmul.f32 %v1137, %v1162
    %v1169 = vmul.f32 %v1139, %v1163
    %1170 = vrot.lane.b32.xlu0 %v594, 56
    %v1171 = vpop.permute.xlu0 %1170
    %1172 = vrot.lane.b32.xlu0 %v599, 56
    %v1173 = vpop.permute.xlu0 %1172
    %1174 = vrot.lane.b32.xlu0 %v604, 56
    %v1175 = vpop.permute.xlu0 %1174
    %1176 = vrot.lane.b32.xlu0 %v609, 56
    %v1177 = vpop.permute.xlu0 %1176
    %1178 = vrot.lane.b32.xlu0 %v614, 56
    %v1179 = vpop.permute.xlu0 %1178
    %1180 = vrot.lane.b32.xlu0 %v619, 56
    %v1181 = vpop.permute.xlu0 %1180
    %v1188 = vsel %vm760, %v1164, 0
    %v1191 = vsel %vm760, %v1165, 0
    %v1194 = vsel %vm760, %v1166, 0
    %v1197 = vsel %vm760, %v1167, 0
    %v1200 = vsel %vm760, %v1168, 0
    %v1203 = vsel %vm760, %v1169, 0
    %v1205 = vsel %vm863, %v1181, 0
    %1207 = vmatprep.subr.mxu0 0.0
    %1208 = vmatpush1.msra.mxu0 0.0
    %1209 = vmatprep.subr.mxu0 0.0
    %1210 = vmatpush1.msra.mxu0 0.0
    %1211 = vmatprep.subr.mxu0 0.0
    %1212 = vmatpush1.msra.mxu0 0.0
    %1213 = vmatprep.subr.mxu0 0.0
    %1214 = vmatpush1.msra.mxu0 0.0
    %1215 = vmatprep.subr.mxu0 0.0
    %1216 = vmatpush1.msra.mxu0 0.0
    %1217 = vmatprep.subr.mxu0 0.0
    %1218 = vmatpush1.msra.mxu0 0.0
    %1219 = vmatprep.subr.mxu0 0.0
    %1220 = vmatpush1.msra.mxu0 0.0
    %1221 = vmatprep.subr.mxu0 0.0
    %1222 = vmatpush1.msra.mxu0 0.0
    %1223 = vmatprep.subr.mxu0 0.0
    %1224 = vmatpush1.msra.mxu0 0.0
    %1225 = vmatprep.subr.mxu0 0.0
    %1226 = vmatpush1.msra.mxu0 0.0
    %1227 = vmatprep.subr.mxu0 0.0
    %1228 = vmatpush1.msra.mxu0 %v1205
    %1229 = vmatprep.subr.mxu0 0.0
    %1230 = vmatpush1.msra.mxu0 %v1179
    %1231 = vmatprep.subr.mxu0 0.0
    %1232 = vmatpush1.msra.mxu0 %v1177
    %1233 = vmatprep.subr.mxu0 0.0
    %1234 = vmatpush1.msra.mxu0 %v1175
    %1235 = vmatprep.subr.mxu0 0.0
    %1236 = vmatpush1.msra.mxu0 %v1173
    %1237 = vmatprep.subr.mxu0 0.0
    %1238 = vmatpush1.msra.mxu0 %v1171
    %1239 = vmatprep.subr.mxu0 0.0
    %1240 = vmatpush2.msra.mxu0 0.0
    %1241 = vmatprep.subr.mxu0 0.0
    %1242 = vmatpush2.msra.mxu0 0.0
    %1243 = vmatprep.subr.mxu0 0.0
    %1244 = vmatpush2.msra.mxu0 0.0
    %1245 = vmatprep.subr.mxu0 0.0
    %1246 = vmatpush2.msra.mxu0 0.0
    %1247 = vmatprep.subr.mxu0 0.0
    %1248 = vmatpush2.msra.mxu0 0.0
    %1249 = vmatprep.subr.mxu0 0.0
    %1250 = vmatpush2.msra.mxu0 0.0
    %1251 = vmatprep.subr.mxu0 0.0
    %1252 = vmatpush2.msra.mxu0 0.0
    %1253 = vmatprep.subr.mxu0 0.0
    %1254 = vmatpush2.msra.mxu0 0.0
    %1255 = vmatprep.subr.mxu0 0.0
    %1256 = vmatpush2.msra.mxu0 0.0
    %1257 = vmatprep.subr.mxu0 0.0
    %1258 = vmatpush2.msra.mxu0 0.0
    %1259 = vmatprep.subr.mxu0 0.0
    %1260 = vmatpush2.msra.mxu0 0.0
    %1261 = vmatprep.subr.mxu0 0.0
    %1262 = vmatpush2.msra.mxu0 0.0
    %1263 = vmatprep.subr.mxu0 0.0
    %1264 = vmatpush2.msra.mxu0 0.0
    %1265 = vmatprep.subr.mxu0 0.0
    %1266 = vmatpush2.msra.mxu0 0.0
    %1267 = vmatprep.subr.mxu0 0.0
    %1268 = vmatpush2.msra.mxu0 0.0
    %1269 = vmatprep.subr.mxu0 0.0
    %1270 = vmatpush2.msra.mxu0 0.0
    %1271 = vmatprep.mubr.f32.mxu0 0.0
    %1272 = vmatmul.mubr.f32.gmra.mxu0 %v1188
    %v1273 = vpop.f32.mrf.mxu0
    %v1274 = vadd.f32 0.0, %v1273
    %v1275 = vpop.f32.mrf.mxu0
    %1276 = vmatprep.mubr.f32.mxu0 0.0
    %1277 = vmatmul.mubr.f32.gmra.mxu0 %v1191
    %v1278 = vpop.f32.mrf.mxu0
    %v1279 = vadd.f32 0.0, %v1278
    %v1280 = vpop.f32.mrf.mxu0
    %1281 = vmatprep.mubr.f32.mxu0 0.0
    %1282 = vmatmul.mubr.f32.gmra.mxu0 %v1194
    %v1283 = vpop.f32.mrf.mxu0
    %v1284 = vadd.f32 0.0, %v1283
    %v1285 = vpop.f32.mrf.mxu0
    %1286 = vmatprep.mubr.f32.mxu0 0.0
    %1287 = vmatmul.mubr.f32.gmra.mxu0 %v1197
    %v1288 = vpop.f32.mrf.mxu0
    %v1289 = vadd.f32 0.0, %v1288
    %v1290 = vpop.f32.mrf.mxu0
    %1291 = vmatprep.mubr.f32.mxu0 0.0
    %1292 = vmatmul.mubr.f32.gmra.mxu0 %v1200
    %v1293 = vpop.f32.mrf.mxu0
    %v1294 = vadd.f32 0.0, %v1293
    %v1295 = vpop.f32.mrf.mxu0
    %1296 = vmatprep.mubr.f32.mxu0 0.0
    %1297 = vmatmul.mubr.f32.gmra.mxu0 %v1203
    %v1298 = vpop.f32.mrf.mxu0
    %v1299 = vadd.f32 0.0, %v1298
    %v1300 = vpop.f32.mrf.mxu0
    %1301 = vdwg.mxu0
    %v1303 = vsel %vm640, %v1274, 0
    %v1306 = vsel %vm640, %v1279, 0
    %v1309 = vsel %vm640, %v1284, 0
    %v1312 = vsel %vm640, %v1289, 0
    %v1315 = vsel %vm640, %v1294, 0
    %v1318 = vsel %vm640, %v1299, 0
    %1320 = vmatprep.subr.mxu0 0.0
    %1321 = vmatpush1.msra.mxu0 0.0
    %1322 = vmatprep.subr.mxu0 0.0
    %1323 = vmatpush1.msra.mxu0 0.0
    %1324 = vmatprep.subr.mxu0 0.0
    %1325 = vmatpush1.msra.mxu0 0.0
    %1326 = vmatprep.subr.mxu0 0.0
    %1327 = vmatpush1.msra.mxu0 0.0
    %1328 = vmatprep.subr.mxu0 0.0
    %1329 = vmatpush1.msra.mxu0 0.0
    %1330 = vmatprep.subr.mxu0 0.0
    %1331 = vmatpush1.msra.mxu0 0.0
    %1332 = vmatprep.subr.mxu0 0.0
    %1333 = vmatpush1.msra.mxu0 0.0
    %1334 = vmatprep.subr.mxu0 0.0
    %1335 = vmatpush1.msra.mxu0 0.0
    %1336 = vmatprep.subr.mxu0 0.0
    %1337 = vmatpush1.msra.mxu0 0.0
    %1338 = vmatprep.subr.mxu0 0.0
    %1339 = vmatpush1.msra.mxu0 0.0
    %1340 = vmatprep.subr.mxu0 0.0
    %1341 = vmatpush1.msra.mxu0 0.0
    %1342 = vmatprep.subr.mxu0 0.0
    %1343 = vmatpush1.msra.mxu0 0.0
    %1344 = vmatprep.subr.mxu0 0.0
    %1345 = vmatpush1.msra.mxu0 0.0
    %1346 = vmatprep.subr.mxu0 0.0
    %1347 = vmatpush1.msra.mxu0 0.0
    %1348 = vmatprep.subr.mxu0 0.0
    %1349 = vmatpush1.msra.mxu0 0.0
    %1350 = vmatprep.subr.mxu0 0.0
    %1351 = vmatpush1.msra.mxu0 %v499
    %1352 = vmatprep.subr.mxu0 0.0
    %1353 = vmatpush2.msra.mxu0 0.0
    %1354 = vmatprep.subr.mxu0 0.0
    %1355 = vmatpush2.msra.mxu0 0.0
    %1356 = vmatprep.subr.mxu0 0.0
    %1357 = vmatpush2.msra.mxu0 0.0
    %1358 = vmatprep.subr.mxu0 0.0
    %1359 = vmatpush2.msra.mxu0 0.0
    %1360 = vmatprep.subr.mxu0 0.0
    %1361 = vmatpush2.msra.mxu0 0.0
    %1362 = vmatprep.subr.mxu0 0.0
    %1363 = vmatpush2.msra.mxu0 0.0
    %1364 = vmatprep.subr.mxu0 0.0
    %1365 = vmatpush2.msra.mxu0 0.0
    %1366 = vmatprep.subr.mxu0 0.0
    %1367 = vmatpush2.msra.mxu0 0.0
    %1368 = vmatprep.subr.mxu0 0.0
    %1369 = vmatpush2.msra.mxu0 0.0
    %1370 = vmatprep.subr.mxu0 0.0
    %1371 = vmatpush2.msra.mxu0 0.0
    %1372 = vmatprep.subr.mxu0 0.0
    %1373 = vmatpush2.msra.mxu0 0.0
    %1374 = vmatprep.subr.mxu0 0.0
    %1375 = vmatpush2.msra.mxu0 0.0
    %1376 = vmatprep.subr.mxu0 0.0
    %1377 = vmatpush2.msra.mxu0 0.0
    %1378 = vmatprep.subr.mxu0 0.0
    %1379 = vmatpush2.msra.mxu0 0.0
    %1380 = vmatprep.subr.mxu0 0.0
    %1381 = vmatpush2.msra.mxu0 0.0
    %1382 = vmatprep.subr.mxu0 0.0
    %1383 = vmatpush2.msra.mxu0 0.0
    %1384 = vmatprep.mubr.f32.mxu0 0.0
    %1385 = vmatmul.mubr.f32.gmra.mxu0 %v1303
    %v1386 = vpop.f32.mrf.mxu0
    %v1387 = vadd.f32 0.0, %v1386
    %v1388 = vpop.f32.mrf.mxu0
    %1389 = vmatprep.mubr.f32.mxu0 0.0
    %1390 = vmatmul.mubr.f32.gmra.mxu0 %v1306
    %v1391 = vpop.f32.mrf.mxu0
    %v1392 = vadd.f32 0.0, %v1391
    %v1393 = vpop.f32.mrf.mxu0
    %1394 = vmatprep.mubr.f32.mxu0 0.0
    %1395 = vmatmul.mubr.f32.gmra.mxu0 %v1309
    %v1396 = vpop.f32.mrf.mxu0
    %v1397 = vadd.f32 0.0, %v1396
    %v1398 = vpop.f32.mrf.mxu0
    %1399 = vmatprep.mubr.f32.mxu0 0.0
    %1400 = vmatmul.mubr.f32.gmra.mxu0 %v1312
    %v1401 = vpop.f32.mrf.mxu0
    %v1402 = vadd.f32 0.0, %v1401
    %v1403 = vpop.f32.mrf.mxu0
    %1404 = vmatprep.mubr.f32.mxu0 0.0
    %1405 = vmatmul.mubr.f32.gmra.mxu0 %v1315
    %v1406 = vpop.f32.mrf.mxu0
    %v1407 = vadd.f32 0.0, %v1406
    %v1408 = vpop.f32.mrf.mxu0
    %1409 = vmatprep.mubr.f32.mxu0 0.0
    %1410 = vmatmul.mubr.f32.gmra.mxu0 %v1318
    %v1411 = vpop.f32.mrf.mxu0
    %v1412 = vadd.f32 0.0, %v1411
    %v1413 = vpop.f32.mrf.mxu0
    %1414 = vdwg.mxu0
    %v1416 = vsel %vm640, %v933, 0
    %v1419 = vsel %vm640, %v938, 0
    %v1422 = vsel %vm640, %v943, 0
    %v1425 = vsel %vm640, %v948, 0
    %v1428 = vsel %vm640, %v953, 0
    %v1431 = vsel %vm640, %v958, 0
    %1433 = vmatprep.subr.mxu0 0.0
    %1434 = vmatpush1.msra.mxu0 0.0
    %1435 = vmatprep.subr.mxu0 0.0
    %1436 = vmatpush1.msra.mxu0 0.0
    %1437 = vmatprep.subr.mxu0 0.0
    %1438 = vmatpush1.msra.mxu0 0.0
    %1439 = vmatprep.subr.mxu0 0.0
    %1440 = vmatpush1.msra.mxu0 0.0
    %1441 = vmatprep.subr.mxu0 0.0
    %1442 = vmatpush1.msra.mxu0 0.0
    %1443 = vmatprep.subr.mxu0 0.0
    %1444 = vmatpush1.msra.mxu0 0.0
    %1445 = vmatprep.subr.mxu0 0.0
    %1446 = vmatpush1.msra.mxu0 0.0
    %1447 = vmatprep.subr.mxu0 0.0
    %1448 = vmatpush1.msra.mxu0 0.0
    %1449 = vmatprep.subr.mxu0 0.0
    %1450 = vmatpush1.msra.mxu0 0.0
    %1451 = vmatprep.subr.mxu0 0.0
    %1452 = vmatpush1.msra.mxu0 0.0
    %1453 = vmatprep.subr.mxu0 0.0
    %1454 = vmatpush1.msra.mxu0 0.0
    %1455 = vmatprep.subr.mxu0 0.0
    %1456 = vmatpush1.msra.mxu0 0.0
    %1457 = vmatprep.subr.mxu0 0.0
    %1458 = vmatpush1.msra.mxu0 0.0
    %1459 = vmatprep.subr.mxu0 0.0
    %1460 = vmatpush1.msra.mxu0 0.0
    %1461 = vmatprep.subr.mxu0 0.0
    %1462 = vmatpush1.msra.mxu0 0.0
    %1463 = vmatprep.subr.mxu0 0.0
    %1464 = vmatpush1.msra.mxu0 %v498
    %1465 = vmatprep.subr.mxu0 0.0
    %1466 = vmatpush2.msra.mxu0 0.0
    %1467 = vmatprep.subr.mxu0 0.0
    %1468 = vmatpush2.msra.mxu0 0.0
    %1469 = vmatprep.subr.mxu0 0.0
    %1470 = vmatpush2.msra.mxu0 0.0
    %1471 = vmatprep.subr.mxu0 0.0
    %1472 = vmatpush2.msra.mxu0 0.0
    %1473 = vmatprep.subr.mxu0 0.0
    %1474 = vmatpush2.msra.mxu0 0.0
    %1475 = vmatprep.subr.mxu0 0.0
    %1476 = vmatpush2.msra.mxu0 0.0
    %1477 = vmatprep.subr.mxu0 0.0
    %1478 = vmatpush2.msra.mxu0 0.0
    %1479 = vmatprep.subr.mxu0 0.0
    %1480 = vmatpush2.msra.mxu0 0.0
    %1481 = vmatprep.subr.mxu0 0.0
    %1482 = vmatpush2.msra.mxu0 0.0
    %1483 = vmatprep.subr.mxu0 0.0
    %1484 = vmatpush2.msra.mxu0 0.0
    %1485 = vmatprep.subr.mxu0 0.0
    %1486 = vmatpush2.msra.mxu0 0.0
    %1487 = vmatprep.subr.mxu0 0.0
    %1488 = vmatpush2.msra.mxu0 0.0
    %1489 = vmatprep.subr.mxu0 0.0
    %1490 = vmatpush2.msra.mxu0 0.0
    %1491 = vmatprep.subr.mxu0 0.0
    %1492 = vmatpush2.msra.mxu0 0.0
    %1493 = vmatprep.subr.mxu0 0.0
    %1494 = vmatpush2.msra.mxu0 0.0
    %1495 = vmatprep.subr.mxu0 0.0
    %1496 = vmatpush2.msra.mxu0 0.0
    %1497 = vmatprep.mubr.f32.mxu0 0.0
    %1498 = vmatmul.mubr.f32.gmra.mxu0 %v1416
    %v1499 = vpop.f32.mrf.mxu0
    %v1500 = vadd.f32 %v1387, %v1499
    %v1501 = vpop.f32.mrf.mxu0
    %1502 = vmatprep.mubr.f32.mxu0 0.0
    %1503 = vmatmul.mubr.f32.gmra.mxu0 %v1419
    %v1504 = vpop.f32.mrf.mxu0
    %v1505 = vadd.f32 %v1392, %v1504
    %v1506 = vpop.f32.mrf.mxu0
    %1507 = vmatprep.mubr.f32.mxu0 0.0
    %1508 = vmatmul.mubr.f32.gmra.mxu0 %v1422
    %v1509 = vpop.f32.mrf.mxu0
    %v1510 = vadd.f32 %v1397, %v1509
    %v1511 = vpop.f32.mrf.mxu0
    %1512 = vmatprep.mubr.f32.mxu0 0.0
    %1513 = vmatmul.mubr.f32.gmra.mxu0 %v1425
    %v1514 = vpop.f32.mrf.mxu0
    %v1515 = vadd.f32 %v1402, %v1514
    %v1516 = vpop.f32.mrf.mxu0
    %1517 = vmatprep.mubr.f32.mxu0 0.0
    %1518 = vmatmul.mubr.f32.gmra.mxu0 %v1428
    %v1519 = vpop.f32.mrf.mxu0
    %v1520 = vadd.f32 %v1407, %v1519
    %v1521 = vpop.f32.mrf.mxu0
    %1522 = vmatprep.mubr.f32.mxu0 0.0
    %1523 = vmatmul.mubr.f32.gmra.mxu0 %v1431
    %v1524 = vpop.f32.mrf.mxu0
    %v1525 = vadd.f32 %v1412, %v1524
    %v1526 = vpop.f32.mrf.mxu0
    %1527 = vdwg.mxu0
    %1528 = vrot.lane.b32.xlu0 %v594, 112
    %v1529 = vpop.permute.xlu0 %1528
    %1530 = vrot.lane.b32.xlu0 %v599, 112
    %v1531 = vpop.permute.xlu0 %1530
    %1532 = vrot.lane.b32.xlu0 %v604, 112
    %v1533 = vpop.permute.xlu0 %1532
    %1534 = vrot.lane.b32.xlu0 %v609, 112
    %v1535 = vpop.permute.xlu0 %1534
    %1536 = vrot.lane.b32.xlu0 %v614, 112
    %v1537 = vpop.permute.xlu0 %1536
    %1538 = vrot.lane.b32.xlu0 %v619, 112
    %v1539 = vpop.permute.xlu0 %1538
    %1540 = vrot.lane.b32.xlu0 %v594, 80
    %v1541 = vpop.permute.xlu0 %1540
    %1542 = vrot.lane.b32.xlu0 %v599, 80
    %v1543 = vpop.permute.xlu0 %1542
    %1544 = vrot.lane.b32.xlu0 %v604, 80
    %v1545 = vpop.permute.xlu0 %1544
    %1546 = vrot.lane.b32.xlu0 %v609, 80
    %v1547 = vpop.permute.xlu0 %1546
    %1548 = vrot.lane.b32.xlu0 %v614, 80
    %v1549 = vpop.permute.xlu0 %1548
    %1550 = vrot.lane.b32.xlu0 %v619, 80
    %v1551 = vpop.permute.xlu0 %1550
    %v1552 = vsel %vm640, %v1529, 0
    %v1554 = vsel %vm640, %v1531, 0
    %v1556 = vsel %vm640, %v1533, 0
    %v1558 = vsel %vm640, %v1535, 0
    %v1560 = vsel %vm640, %v1537, 0
    %v1562 = vsel %vm640, %v1539, 0
    %v1564 = vsel %vm640, %v1541, 0
    %v1566 = vsel %vm640, %v1543, 0
    %v1568 = vsel %vm640, %v1545, 0
    %v1570 = vsel %vm640, %v1547, 0
    %v1572 = vsel %vm640, %v1549, 0
    %v1574 = vsel %vm640, %v1551, 0
    %1576 = vmatprep.subr.mxu0 0.0
    %1577 = vmatpush1.xpose.msra.mxu0 0.0
    %1578 = vmatprep.subr.mxu0 0.0
    %1579 = vmatpush1.xpose.msra.mxu0 0.0
    %1580 = vmatprep.subr.mxu0 0.0
    %1581 = vmatpush1.xpose.msra.mxu0 0.0
    %1582 = vmatprep.subr.mxu0 0.0
    %1583 = vmatpush1.xpose.msra.mxu0 0.0
    %1584 = vmatprep.subr.mxu0 0.0
    %1585 = vmatpush1.xpose.msra.mxu0 0.0
    %1586 = vmatprep.subr.mxu0 0.0
    %1587 = vmatpush1.xpose.msra.mxu0 0.0
    %1588 = vmatprep.subr.mxu0 0.0
    %1589 = vmatpush1.xpose.msra.mxu0 0.0
    %1590 = vmatprep.subr.mxu0 0.0
    %1591 = vmatpush1.xpose.msra.mxu0 0.0
    %1592 = vmatprep.subr.mxu0 0.0
    %1593 = vmatpush1.xpose.msra.mxu0 0.0
    %1594 = vmatprep.subr.mxu0 0.0
    %1595 = vmatpush1.xpose.msra.mxu0 0.0
    %1596 = vmatprep.subr.mxu0 0.0
    %1597 = vmatpush1.xpose.msra.mxu0 %v1574
    %1598 = vmatprep.subr.mxu0 0.0
    %1599 = vmatpush1.xpose.msra.mxu0 %v1572
    %1600 = vmatprep.subr.mxu0 0.0
    %1601 = vmatpush1.xpose.msra.mxu0 %v1570
    %1602 = vmatprep.subr.mxu0 0.0
    %1603 = vmatpush1.xpose.msra.mxu0 %v1568
    %1604 = vmatprep.subr.mxu0 0.0
    %1605 = vmatpush1.xpose.msra.mxu0 %v1566
    %1606 = vmatprep.subr.mxu0 0.0
    %1607 = vmatpush1.xpose.msra.mxu0 %v1564
    %1608 = vmatprep.subr.mxu0 0.0
    %1609 = vmatpush2.xpose.msra.mxu0 0.0
    %1610 = vmatprep.subr.mxu0 0.0
    %1611 = vmatpush2.xpose.msra.mxu0 0.0
    %1612 = vmatprep.subr.mxu0 0.0
    %1613 = vmatpush2.xpose.msra.mxu0 0.0
    %1614 = vmatprep.subr.mxu0 0.0
    %1615 = vmatpush2.xpose.msra.mxu0 0.0
    %1616 = vmatprep.subr.mxu0 0.0
    %1617 = vmatpush2.xpose.msra.mxu0 0.0
    %1618 = vmatprep.subr.mxu0 0.0
    %1619 = vmatpush2.xpose.msra.mxu0 0.0
    %1620 = vmatprep.subr.mxu0 0.0
    %1621 = vmatpush2.xpose.msra.mxu0 0.0
    %1622 = vmatprep.subr.mxu0 0.0
    %1623 = vmatpush2.xpose.msra.mxu0 0.0
    %1624 = vmatprep.subr.mxu0 0.0
    %1625 = vmatpush2.xpose.msra.mxu0 0.0
    %1626 = vmatprep.subr.mxu0 0.0
    %1627 = vmatpush2.xpose.msra.mxu0 0.0
    %1628 = vmatprep.subr.mxu0 0.0
    %1629 = vmatpush2.xpose.msra.mxu0 0.0
    %1630 = vmatprep.subr.mxu0 0.0
    %1631 = vmatpush2.xpose.msra.mxu0 0.0
    %1632 = vmatprep.subr.mxu0 0.0
    %1633 = vmatpush2.xpose.msra.mxu0 0.0
    %1634 = vmatprep.subr.mxu0 0.0
    %1635 = vmatpush2.xpose.msra.mxu0 0.0
    %1636 = vmatprep.subr.mxu0 0.0
    %1637 = vmatpush2.xpose.msra.mxu0 0.0
    %1638 = vmatprep.subr.mxu0 0.0
    %1639 = vmatpush2.xpose.msra.mxu0 0.0
    %1640 = vmatprep.mubr.f32.mxu0 0.0
    %1641 = vmatmul.mubr.f32.gmra.mxu0 %v1552
    %v1642 = vpop.f32.mrf.mxu0
    %v1643 = vadd.f32 %v487, %v1642
    %v1644 = vpop.f32.mrf.mxu0
    %1645 = vmatprep.mubr.f32.mxu0 0.0
    %1646 = vmatmul.mubr.f32.gmra.mxu0 %v1554
    %v1647 = vpop.f32.mrf.mxu0
    %v1648 = vadd.f32 %v488, %v1647
    %v1649 = vpop.f32.mrf.mxu0
    %1650 = vmatprep.mubr.f32.mxu0 0.0
    %1651 = vmatmul.mubr.f32.gmra.mxu0 %v1556
    %v1652 = vpop.f32.mrf.mxu0
    %v1653 = vadd.f32 %v489, %v1652
    %v1654 = vpop.f32.mrf.mxu0
    %1655 = vmatprep.mubr.f32.mxu0 0.0
    %1656 = vmatmul.mubr.f32.gmra.mxu0 %v1558
    %v1657 = vpop.f32.mrf.mxu0
    %v1658 = vadd.f32 %v490, %v1657
    %v1659 = vpop.f32.mrf.mxu0
    %1660 = vmatprep.mubr.f32.mxu0 0.0
    %1661 = vmatmul.mubr.f32.gmra.mxu0 %v1560
    %v1662 = vpop.f32.mrf.mxu0
    %v1663 = vadd.f32 %v491, %v1662
    %v1664 = vpop.f32.mrf.mxu0
    %1665 = vmatprep.mubr.f32.mxu0 0.0
    %1666 = vmatmul.mubr.f32.gmra.mxu0 %v1562
    %v1667 = vpop.f32.mrf.mxu0
    %v1668 = vadd.f32 %v492, %v1667
    %v1669 = vpop.f32.mrf.mxu0
    %1670 = vdwg.mxu0
    %v1671 = vsel %vm760, %v1643, -inf
    %1672 = vmax.xlane.f32.xlu0 %v1671
    %v1673 = vpop.xlane.xlu0 %1672
    %v1674 = vsel %vm760, %v1648, -inf
    %1675 = vmax.xlane.f32.xlu0 %v1674
    %v1676 = vpop.xlane.xlu0 %1675
    %v1677 = vsel %vm760, %v1653, -inf
    %1678 = vmax.xlane.f32.xlu0 %v1677
    %v1679 = vpop.xlane.xlu0 %1678
    %v1680 = vsel %vm760, %v1658, -inf
    %1681 = vmax.xlane.f32.xlu0 %v1680
    %v1682 = vpop.xlane.xlu0 %1681
    %v1683 = vsel %vm760, %v1663, -inf
    %1684 = vmax.xlane.f32.xlu0 %v1683
    %v1685 = vpop.xlane.xlu0 %1684
    %v1686 = vsel %vm776, %v1668, -inf
    %1687 = vmax.xlane.f32.xlu0 %v1686
    %v1688 = vpop.xlane.xlu0 %1687
    %v1689 = vsub.f32 %v1643, %v1673
    %v1690 = vsub.f32 %v1648, %v1676
    %v1691 = vsub.f32 %v1653, %v1679
    %v1692 = vsub.f32 %v1658, %v1682
    %v1693 = vsub.f32 %v1663, %v1685
    %v1694 = vsub.f32 %v1668, %v1688
    %v1695 = vmul.f32 %v1689, 1.442695
    %v1696 = vpow.pop %v1695
    %v1697 = vmul.f32 %v1690, 1.442695
    %v1698 = vpow.pop %v1697
    %v1699 = vmul.f32 %v1691, 1.442695
    %v1700 = vpow.pop %v1699
    %v1701 = vmul.f32 %v1692, 1.442695
    %v1702 = vpow.pop %v1701
    %v1703 = vmul.f32 %v1693, 1.442695
    %v1704 = vpow.pop %v1703
    %v1705 = vmul.f32 %v1694, 1.442695
    %v1706 = vpow.pop %v1705
    %v1707 = vsel %vm760, %v1696, 0.0
    %1708 = vadd.xlane.f32.xlu0 %v1707
    %v1709 = vpop.xlane.xlu0 %1708
    %v1710 = vsel %vm760, %v1698, 0.0
    %1711 = vadd.xlane.f32.xlu0 %v1710
    %v1712 = vpop.xlane.xlu0 %1711
    %v1713 = vsel %vm760, %v1700, 0.0
    %1714 = vadd.xlane.f32.xlu0 %v1713
    %v1715 = vpop.xlane.xlu0 %1714
    %v1716 = vsel %vm760, %v1702, 0.0
    %1717 = vadd.xlane.f32.xlu0 %v1716
    %v1718 = vpop.xlane.xlu0 %1717
    %v1719 = vsel %vm760, %v1704, 0.0
    %1720 = vadd.xlane.f32.xlu0 %v1719
    %v1721 = vpop.xlane.xlu0 %1720
    %v1722 = vsel %vm776, %v1706, 0.0
    %1723 = vadd.xlane.f32.xlu0 %v1722
    %v1724 = vpop.xlane.xlu0 %1723
    %v1725 = vrcp.pop %v1709
    %v1726 = vrcp.pop %v1712
    %v1727 = vrcp.pop %v1715
    %v1728 = vrcp.pop %v1718
    %v1729 = vrcp.pop %v1721
    %v1730 = vrcp.pop %v1724
    %v1731 = vmul.f32 %v1696, %v1725
    %v1732 = vmul.f32 %v1698, %v1726
    %v1733 = vmul.f32 %v1700, %v1727
    %v1734 = vmul.f32 %v1702, %v1728
    %v1735 = vmul.f32 %v1704, %v1729
    %v1736 = vmul.f32 %v1706, %v1730
    %1737 = vrot.lane.b32.xlu0 %v594, 48
    %v1738 = vpop.permute.xlu0 %1737
    %1739 = vrot.lane.b32.xlu0 %v599, 48
    %v1740 = vpop.permute.xlu0 %1739
    %1741 = vrot.lane.b32.xlu0 %v604, 48
    %v1742 = vpop.permute.xlu0 %1741
    %1743 = vrot.lane.b32.xlu0 %v609, 48
    %v1744 = vpop.permute.xlu0 %1743
    %1745 = vrot.lane.b32.xlu0 %v614, 48
    %v1746 = vpop.permute.xlu0 %1745
    %1747 = vrot.lane.b32.xlu0 %v619, 48
    %v1748 = vpop.permute.xlu0 %1747
    %v1755 = vsel %vm760, %v1731, 0
    %v1758 = vsel %vm760, %v1732, 0
    %v1761 = vsel %vm760, %v1733, 0
    %v1764 = vsel %vm760, %v1734, 0
    %v1767 = vsel %vm760, %v1735, 0
    %v1770 = vsel %vm760, %v1736, 0
    %v1772 = vsel %vm863, %v1748, 0
    %1774 = vmatprep.subr.mxu0 0.0
    %1775 = vmatpush1.msra.mxu0 0.0
    %1776 = vmatprep.subr.mxu0 0.0
    %1777 = vmatpush1.msra.mxu0 0.0
    %1778 = vmatprep.subr.mxu0 0.0
    %1779 = vmatpush1.msra.mxu0 0.0
    %1780 = vmatprep.subr.mxu0 0.0
    %1781 = vmatpush1.msra.mxu0 0.0
    %1782 = vmatprep.subr.mxu0 0.0
    %1783 = vmatpush1.msra.mxu0 0.0
    %1784 = vmatprep.subr.mxu0 0.0
    %1785 = vmatpush1.msra.mxu0 0.0
    %1786 = vmatprep.subr.mxu0 0.0
    %1787 = vmatpush1.msra.mxu0 0.0
    %1788 = vmatprep.subr.mxu0 0.0
    %1789 = vmatpush1.msra.mxu0 0.0
    %1790 = vmatprep.subr.mxu0 0.0
    %1791 = vmatpush1.msra.mxu0 0.0
    %1792 = vmatprep.subr.mxu0 0.0
    %1793 = vmatpush1.msra.mxu0 0.0
    %1794 = vmatprep.subr.mxu0 0.0
    %1795 = vmatpush1.msra.mxu0 %v1772
    %1796 = vmatprep.subr.mxu0 0.0
    %1797 = vmatpush1.msra.mxu0 %v1746
    %1798 = vmatprep.subr.mxu0 0.0
    %1799 = vmatpush1.msra.mxu0 %v1744
    %1800 = vmatprep.subr.mxu0 0.0
    %1801 = vmatpush1.msra.mxu0 %v1742
    %1802 = vmatprep.subr.mxu0 0.0
    %1803 = vmatpush1.msra.mxu0 %v1740
    %1804 = vmatprep.subr.mxu0 0.0
    %1805 = vmatpush1.msra.mxu0 %v1738
    %1806 = vmatprep.subr.mxu0 0.0
    %1807 = vmatpush2.msra.mxu0 0.0
    %1808 = vmatprep.subr.mxu0 0.0
    %1809 = vmatpush2.msra.mxu0 0.0
    %1810 = vmatprep.subr.mxu0 0.0
    %1811 = vmatpush2.msra.mxu0 0.0
    %1812 = vmatprep.subr.mxu0 0.0
    %1813 = vmatpush2.msra.mxu0 0.0
    %1814 = vmatprep.subr.mxu0 0.0
    %1815 = vmatpush2.msra.mxu0 0.0
    %1816 = vmatprep.subr.mxu0 0.0
    %1817 = vmatpush2.msra.mxu0 0.0
    %1818 = vmatprep.subr.mxu0 0.0
    %1819 = vmatpush2.msra.mxu0 0.0
    %1820 = vmatprep.subr.mxu0 0.0
    %1821 = vmatpush2.msra.mxu0 0.0
    %1822 = vmatprep.subr.mxu0 0.0
    %1823 = vmatpush2.msra.mxu0 0.0
    %1824 = vmatprep.subr.mxu0 0.0
    %1825 = vmatpush2.msra.mxu0 0.0
    %1826 = vmatprep.subr.mxu0 0.0
    %1827 = vmatpush2.msra.mxu0 0.0
    %1828 = vmatprep.subr.mxu0 0.0
    %1829 = vmatpush2.msra.mxu0 0.0
    %1830 = vmatprep.subr.mxu0 0.0
    %1831 = vmatpush2.msra.mxu0 0.0
    %1832 = vmatprep.subr.mxu0 0.0
    %1833 = vmatpush2.msra.mxu0 0.0
    %1834 = vmatprep.subr.mxu0 0.0
    %1835 = vmatpush2.msra.mxu0 0.0
    %1836 = vmatprep.subr.mxu0 0.0
    %1837 = vmatpush2.msra.mxu0 0.0
    %1838 = vmatprep.mubr.f32.mxu0 0.0
    %1839 = vmatmul.mubr.f32.gmra.mxu0 %v1755
    %v1840 = vpop.f32.mrf.mxu0
    %v1841 = vadd.f32 0.0, %v1840
    %v1842 = vpop.f32.mrf.mxu0
    %1843 = vmatprep.mubr.f32.mxu0 0.0
    %1844 = vmatmul.mubr.f32.gmra.mxu0 %v1758
    %v1845 = vpop.f32.mrf.mxu0
    %v1846 = vadd.f32 0.0, %v1845
    %v1847 = vpop.f32.mrf.mxu0
    %1848 = vmatprep.mubr.f32.mxu0 0.0
    %1849 = vmatmul.mubr.f32.gmra.mxu0 %v1761
    %v1850 = vpop.f32.mrf.mxu0
    %v1851 = vadd.f32 0.0, %v1850
    %v1852 = vpop.f32.mrf.mxu0
    %1853 = vmatprep.mubr.f32.mxu0 0.0
    %1854 = vmatmul.mubr.f32.gmra.mxu0 %v1764
    %v1855 = vpop.f32.mrf.mxu0
    %v1856 = vadd.f32 0.0, %v1855
    %v1857 = vpop.f32.mrf.mxu0
    %1858 = vmatprep.mubr.f32.mxu0 0.0
    %1859 = vmatmul.mubr.f32.gmra.mxu0 %v1767
    %v1860 = vpop.f32.mrf.mxu0
    %v1861 = vadd.f32 0.0, %v1860
    %v1862 = vpop.f32.mrf.mxu0
    %1863 = vmatprep.mubr.f32.mxu0 0.0
    %1864 = vmatmul.mubr.f32.gmra.mxu0 %v1770
    %v1865 = vpop.f32.mrf.mxu0
    %v1866 = vadd.f32 0.0, %v1865
    %v1867 = vpop.f32.mrf.mxu0
    %1868 = vdwg.mxu0
    %v1870 = vsel %vm640, %v1841, 0
    %v1873 = vsel %vm640, %v1846, 0
    %v1876 = vsel %vm640, %v1851, 0
    %v1879 = vsel %vm640, %v1856, 0
    %v1882 = vsel %vm640, %v1861, 0
    %v1885 = vsel %vm640, %v1866, 0
    %1887 = vmatprep.subr.mxu0 0.0
    %1888 = vmatpush1.msra.mxu0 0.0
    %1889 = vmatprep.subr.mxu0 0.0
    %1890 = vmatpush1.msra.mxu0 0.0
    %1891 = vmatprep.subr.mxu0 0.0
    %1892 = vmatpush1.msra.mxu0 0.0
    %1893 = vmatprep.subr.mxu0 0.0
    %1894 = vmatpush1.msra.mxu0 0.0
    %1895 = vmatprep.subr.mxu0 0.0
    %1896 = vmatpush1.msra.mxu0 0.0
    %1897 = vmatprep.subr.mxu0 0.0
    %1898 = vmatpush1.msra.mxu0 0.0
    %1899 = vmatprep.subr.mxu0 0.0
    %1900 = vmatpush1.msra.mxu0 0.0
    %1901 = vmatprep.subr.mxu0 0.0
    %1902 = vmatpush1.msra.mxu0 0.0
    %1903 = vmatprep.subr.mxu0 0.0
    %1904 = vmatpush1.msra.mxu0 0.0
    %1905 = vmatprep.subr.mxu0 0.0
    %1906 = vmatpush1.msra.mxu0 0.0
    %1907 = vmatprep.subr.mxu0 0.0
    %1908 = vmatpush1.msra.mxu0 0.0
    %1909 = vmatprep.subr.mxu0 0.0
    %1910 = vmatpush1.msra.mxu0 0.0
    %1911 = vmatprep.subr.mxu0 0.0
    %1912 = vmatpush1.msra.mxu0 0.0
    %1913 = vmatprep.subr.mxu0 0.0
    %1914 = vmatpush1.msra.mxu0 0.0
    %1915 = vmatprep.subr.mxu0 0.0
    %1916 = vmatpush1.msra.mxu0 0.0
    %1917 = vmatprep.subr.mxu0 0.0
    %1918 = vmatpush1.msra.mxu0 %v500
    %1919 = vmatprep.subr.mxu0 0.0
    %1920 = vmatpush2.msra.mxu0 0.0
    %1921 = vmatprep.subr.mxu0 0.0
    %1922 = vmatpush2.msra.mxu0 0.0
    %1923 = vmatprep.subr.mxu0 0.0
    %1924 = vmatpush2.msra.mxu0 0.0
    %1925 = vmatprep.subr.mxu0 0.0
    %1926 = vmatpush2.msra.mxu0 0.0
    %1927 = vmatprep.subr.mxu0 0.0
    %1928 = vmatpush2.msra.mxu0 0.0
    %1929 = vmatprep.subr.mxu0 0.0
    %1930 = vmatpush2.msra.mxu0 0.0
    %1931 = vmatprep.subr.mxu0 0.0
    %1932 = vmatpush2.msra.mxu0 0.0
    %1933 = vmatprep.subr.mxu0 0.0
    %1934 = vmatpush2.msra.mxu0 0.0
    %1935 = vmatprep.subr.mxu0 0.0
    %1936 = vmatpush2.msra.mxu0 0.0
    %1937 = vmatprep.subr.mxu0 0.0
    %1938 = vmatpush2.msra.mxu0 0.0
    %1939 = vmatprep.subr.mxu0 0.0
    %1940 = vmatpush2.msra.mxu0 0.0
    %1941 = vmatprep.subr.mxu0 0.0
    %1942 = vmatpush2.msra.mxu0 0.0
    %1943 = vmatprep.subr.mxu0 0.0
    %1944 = vmatpush2.msra.mxu0 0.0
    %1945 = vmatprep.subr.mxu0 0.0
    %1946 = vmatpush2.msra.mxu0 0.0
    %1947 = vmatprep.subr.mxu0 0.0
    %1948 = vmatpush2.msra.mxu0 0.0
    %1949 = vmatprep.subr.mxu0 0.0
    %1950 = vmatpush2.msra.mxu0 0.0
    %1951 = vmatprep.mubr.f32.mxu0 0.0
    %1952 = vmatmul.mubr.f32.gmra.mxu0 %v1870
    %v1953 = vpop.f32.mrf.mxu0
    %v1954 = vadd.f32 0.0, %v1953
    %v1955 = vpop.f32.mrf.mxu0
    %1956 = vmatprep.mubr.f32.mxu0 0.0
    %1957 = vmatmul.mubr.f32.gmra.mxu0 %v1873
    %v1958 = vpop.f32.mrf.mxu0
    %v1959 = vadd.f32 0.0, %v1958
    %v1960 = vpop.f32.mrf.mxu0
    %1961 = vmatprep.mubr.f32.mxu0 0.0
    %1962 = vmatmul.mubr.f32.gmra.mxu0 %v1876
    %v1963 = vpop.f32.mrf.mxu0
    %v1964 = vadd.f32 0.0, %v1963
    %v1965 = vpop.f32.mrf.mxu0
    %1966 = vmatprep.mubr.f32.mxu0 0.0
    %1967 = vmatmul.mubr.f32.gmra.mxu0 %v1879
    %v1968 = vpop.f32.mrf.mxu0
    %v1969 = vadd.f32 0.0, %v1968
    %v1970 = vpop.f32.mrf.mxu0
    %1971 = vmatprep.mubr.f32.mxu0 0.0
    %1972 = vmatmul.mubr.f32.gmra.mxu0 %v1882
    %v1973 = vpop.f32.mrf.mxu0
    %v1974 = vadd.f32 0.0, %v1973
    %v1975 = vpop.f32.mrf.mxu0
    %1976 = vmatprep.mubr.f32.mxu0 0.0
    %1977 = vmatmul.mubr.f32.gmra.mxu0 %v1885
    %v1978 = vpop.f32.mrf.mxu0
    %v1979 = vadd.f32 0.0, %v1978
    %v1980 = vpop.f32.mrf.mxu0
    %1981 = vdwg.mxu0
    %v1982 = vadd.f32 %v1500, %v1954
    %v1983 = vadd.f32 %v1505, %v1959
    %v1984 = vadd.f32 %v1510, %v1964
    %v1985 = vadd.f32 %v1515, %v1969
    %v1986 = vadd.f32 %v1520, %v1974
    %v1987 = vadd.f32 %v1525, %v1979
    %1988 = vrot.lane.b32.xlu0 %v594, 104
    %v1989 = vpop.permute.xlu0 %1988
    %1990 = vrot.lane.b32.xlu0 %v599, 104
    %v1991 = vpop.permute.xlu0 %1990
    %1992 = vrot.lane.b32.xlu0 %v604, 104
    %v1993 = vpop.permute.xlu0 %1992
    %1994 = vrot.lane.b32.xlu0 %v609, 104
    %v1995 = vpop.permute.xlu0 %1994
    %1996 = vrot.lane.b32.xlu0 %v614, 104
    %v1997 = vpop.permute.xlu0 %1996
    %1998 = vrot.lane.b32.xlu0 %v619, 104
    %v1999 = vpop.permute.xlu0 %1998
    %2000 = vrot.lane.b32.xlu0 %v594, 72
    %v2001 = vpop.permute.xlu0 %2000
    %2002 = vrot.lane.b32.xlu0 %v599, 72
    %v2003 = vpop.permute.xlu0 %2002
    %2004 = vrot.lane.b32.xlu0 %v604, 72
    %v2005 = vpop.permute.xlu0 %2004
    %2006 = vrot.lane.b32.xlu0 %v609, 72
    %v2007 = vpop.permute.xlu0 %2006
    %2008 = vrot.lane.b32.xlu0 %v614, 72
    %v2009 = vpop.permute.xlu0 %2008
    %2010 = vrot.lane.b32.xlu0 %v619, 72
    %v2011 = vpop.permute.xlu0 %2010
    %v2012 = vsel %vm640, %v1989, 0
    %v2014 = vsel %vm640, %v1991, 0
    %v2016 = vsel %vm640, %v1993, 0
    %v2018 = vsel %vm640, %v1995, 0
    %v2020 = vsel %vm640, %v1997, 0
    %v2022 = vsel %vm640, %v1999, 0
    %v2024 = vsel %vm640, %v2001, 0
    %v2026 = vsel %vm640, %v2003, 0
    %v2028 = vsel %vm640, %v2005, 0
    %v2030 = vsel %vm640, %v2007, 0
    %v2032 = vsel %vm640, %v2009, 0
    %v2034 = vsel %vm640, %v2011, 0
    %2036 = vmatprep.subr.mxu0 0.0
    %2037 = vmatpush1.xpose.msra.mxu0 0.0
    %2038 = vmatprep.subr.mxu0 0.0
    %2039 = vmatpush1.xpose.msra.mxu0 0.0
    %2040 = vmatprep.subr.mxu0 0.0
    %2041 = vmatpush1.xpose.msra.mxu0 0.0
    %2042 = vmatprep.subr.mxu0 0.0
    %2043 = vmatpush1.xpose.msra.mxu0 0.0
    %2044 = vmatprep.subr.mxu0 0.0
    %2045 = vmatpush1.xpose.msra.mxu0 0.0
    %2046 = vmatprep.subr.mxu0 0.0
    %2047 = vmatpush1.xpose.msra.mxu0 0.0
    %2048 = vmatprep.subr.mxu0 0.0
    %2049 = vmatpush1.xpose.msra.mxu0 0.0
    %2050 = vmatprep.subr.mxu0 0.0
    %2051 = vmatpush1.xpose.msra.mxu0 0.0
    %2052 = vmatprep.subr.mxu0 0.0
    %2053 = vmatpush1.xpose.msra.mxu0 0.0
    %2054 = vmatprep.subr.mxu0 0.0
    %2055 = vmatpush1.xpose.msra.mxu0 0.0
    %2056 = vmatprep.subr.mxu0 0.0
    %2057 = vmatpush1.xpose.msra.mxu0 %v2034
    %2058 = vmatprep.subr.mxu0 0.0
    %2059 = vmatpush1.xpose.msra.mxu0 %v2032
    %2060 = vmatprep.subr.mxu0 0.0
    %2061 = vmatpush1.xpose.msra.mxu0 %v2030
    %2062 = vmatprep.subr.mxu0 0.0
    %2063 = vmatpush1.xpose.msra.mxu0 %v2028
    %2064 = vmatprep.subr.mxu0 0.0
    %2065 = vmatpush1.xpose.msra.mxu0 %v2026
    %2066 = vmatprep.subr.mxu0 0.0
    %2067 = vmatpush1.xpose.msra.mxu0 %v2024
    %2068 = vmatprep.subr.mxu0 0.0
    %2069 = vmatpush2.xpose.msra.mxu0 0.0
    %2070 = vmatprep.subr.mxu0 0.0
    %2071 = vmatpush2.xpose.msra.mxu0 0.0
    %2072 = vmatprep.subr.mxu0 0.0
    %2073 = vmatpush2.xpose.msra.mxu0 0.0
    %2074 = vmatprep.subr.mxu0 0.0
    %2075 = vmatpush2.xpose.msra.mxu0 0.0
    %2076 = vmatprep.subr.mxu0 0.0
    %2077 = vmatpush2.xpose.msra.mxu0 0.0
    %2078 = vmatprep.subr.mxu0 0.0
    %2079 = vmatpush2.xpose.msra.mxu0 0.0
    %2080 = vmatprep.subr.mxu0 0.0
    %2081 = vmatpush2.xpose.msra.mxu0 0.0
    %2082 = vmatprep.subr.mxu0 0.0
    %2083 = vmatpush2.xpose.msra.mxu0 0.0
    %2084 = vmatprep.subr.mxu0 0.0
    %2085 = vmatpush2.xpose.msra.mxu0 0.0
    %2086 = vmatprep.subr.mxu0 0.0
    %2087 = vmatpush2.xpose.msra.mxu0 0.0
    %2088 = vmatprep.subr.mxu0 0.0
    %2089 = vmatpush2.xpose.msra.mxu0 0.0
    %2090 = vmatprep.subr.mxu0 0.0
    %2091 = vmatpush2.xpose.msra.mxu0 0.0
    %2092 = vmatprep.subr.mxu0 0.0
    %2093 = vmatpush2.xpose.msra.mxu0 0.0
    %2094 = vmatprep.subr.mxu0 0.0
    %2095 = vmatpush2.xpose.msra.mxu0 0.0
    %2096 = vmatprep.subr.mxu0 0.0
    %2097 = vmatpush2.xpose.msra.mxu0 0.0
    %2098 = vmatprep.subr.mxu0 0.0
    %2099 = vmatpush2.xpose.msra.mxu0 0.0
    %2100 = vmatprep.mubr.f32.mxu0 0.0
    %2101 = vmatmul.mubr.f32.gmra.mxu0 %v2012
    %v2102 = vpop.f32.mrf.mxu0
    %v2103 = vadd.f32 %v487, %v2102
    %v2104 = vpop.f32.mrf.mxu0
    %2105 = vmatprep.mubr.f32.mxu0 0.0
    %2106 = vmatmul.mubr.f32.gmra.mxu0 %v2014
    %v2107 = vpop.f32.mrf.mxu0
    %v2108 = vadd.f32 %v488, %v2107
    %v2109 = vpop.f32.mrf.mxu0
    %2110 = vmatprep.mubr.f32.mxu0 0.0
    %2111 = vmatmul.mubr.f32.gmra.mxu0 %v2016
    %v2112 = vpop.f32.mrf.mxu0
    %v2113 = vadd.f32 %v489, %v2112
    %v2114 = vpop.f32.mrf.mxu0
    %2115 = vmatprep.mubr.f32.mxu0 0.0
    %2116 = vmatmul.mubr.f32.gmra.mxu0 %v2018
    %v2117 = vpop.f32.mrf.mxu0
    %v2118 = vadd.f32 %v490, %v2117
    %v2119 = vpop.f32.mrf.mxu0
    %2120 = vmatprep.mubr.f32.mxu0 0.0
    %2121 = vmatmul.mubr.f32.gmra.mxu0 %v2020
    %v2122 = vpop.f32.mrf.mxu0
    %v2123 = vadd.f32 %v491, %v2122
    %v2124 = vpop.f32.mrf.mxu0
    %2125 = vmatprep.mubr.f32.mxu0 0.0
    %2126 = vmatmul.mubr.f32.gmra.mxu0 %v2022
    %v2127 = vpop.f32.mrf.mxu0
    %v2128 = vadd.f32 %v492, %v2127
    %v2129 = vpop.f32.mrf.mxu0
    %2130 = vdwg.mxu0
    %v2131 = vsel %vm760, %v2103, -inf
    %2132 = vmax.xlane.f32.xlu0 %v2131
    %v2133 = vpop.xlane.xlu0 %2132
    %v2134 = vsel %vm760, %v2108, -inf
    %2135 = vmax.xlane.f32.xlu0 %v2134
    %v2136 = vpop.xlane.xlu0 %2135
    %v2137 = vsel %vm760, %v2113, -inf
    %2138 = vmax.xlane.f32.xlu0 %v2137
    %v2139 = vpop.xlane.xlu0 %2138
    %v2140 = vsel %vm760, %v2118, -inf
    %2141 = vmax.xlane.f32.xlu0 %v2140
    %v2142 = vpop.xlane.xlu0 %2141
    %v2143 = vsel %vm760, %v2123, -inf
    %2144 = vmax.xlane.f32.xlu0 %v2143
    %v2145 = vpop.xlane.xlu0 %2144
    %v2146 = vsel %vm776, %v2128, -inf
    %2147 = vmax.xlane.f32.xlu0 %v2146
    %v2148 = vpop.xlane.xlu0 %2147
    %v2149 = vsub.f32 %v2103, %v2133
    %v2150 = vsub.f32 %v2108, %v2136
    %v2151 = vsub.f32 %v2113, %v2139
    %v2152 = vsub.f32 %v2118, %v2142
    %v2153 = vsub.f32 %v2123, %v2145
    %v2154 = vsub.f32 %v2128, %v2148
    %v2155 = vmul.f32 %v2149, 1.442695
    %v2156 = vpow.pop %v2155
    %v2157 = vmul.f32 %v2150, 1.442695
    %v2158 = vpow.pop %v2157
    %v2159 = vmul.f32 %v2151, 1.442695
    %v2160 = vpow.pop %v2159
    %v2161 = vmul.f32 %v2152, 1.442695
    %v2162 = vpow.pop %v2161
    %v2163 = vmul.f32 %v2153, 1.442695
    %v2164 = vpow.pop %v2163
    %v2165 = vmul.f32 %v2154, 1.442695
    %v2166 = vpow.pop %v2165
    %v2167 = vsel %vm760, %v2156, 0.0
    %2168 = vadd.xlane.f32.xlu0 %v2167
    %v2169 = vpop.xlane.xlu0 %2168
    %v2170 = vsel %vm760, %v2158, 0.0
    %2171 = vadd.xlane.f32.xlu0 %v2170
    %v2172 = vpop.xlane.xlu0 %2171
    %v2173 = vsel %vm760, %v2160, 0.0
    %2174 = vadd.xlane.f32.xlu0 %v2173
    %v2175 = vpop.xlane.xlu0 %2174
    %v2176 = vsel %vm760, %v2162, 0.0
    %2177 = vadd.xlane.f32.xlu0 %v2176
    %v2178 = vpop.xlane.xlu0 %2177
    %v2179 = vsel %vm760, %v2164, 0.0
    %2180 = vadd.xlane.f32.xlu0 %v2179
    %v2181 = vpop.xlane.xlu0 %2180
    %v2182 = vsel %vm776, %v2166, 0.0
    %2183 = vadd.xlane.f32.xlu0 %v2182
    %v2184 = vpop.xlane.xlu0 %2183
    %v2185 = vrcp.pop %v2169
    %v2186 = vrcp.pop %v2172
    %v2187 = vrcp.pop %v2175
    %v2188 = vrcp.pop %v2178
    %v2189 = vrcp.pop %v2181
    %v2190 = vrcp.pop %v2184
    %v2191 = vmul.f32 %v2156, %v2185
    %v2192 = vmul.f32 %v2158, %v2186
    %v2193 = vmul.f32 %v2160, %v2187
    %v2194 = vmul.f32 %v2162, %v2188
    %v2195 = vmul.f32 %v2164, %v2189
    %v2196 = vmul.f32 %v2166, %v2190
    %2197 = vrot.lane.b32.xlu0 %v594, 40
    %v2198 = vpop.permute.xlu0 %2197
    %2199 = vrot.lane.b32.xlu0 %v599, 40
    %v2200 = vpop.permute.xlu0 %2199
    %2201 = vrot.lane.b32.xlu0 %v604, 40
    %v2202 = vpop.permute.xlu0 %2201
    %2203 = vrot.lane.b32.xlu0 %v609, 40
    %v2204 = vpop.permute.xlu0 %2203
    %2205 = vrot.lane.b32.xlu0 %v614, 40
    %v2206 = vpop.permute.xlu0 %2205
    %2207 = vrot.lane.b32.xlu0 %v619, 40
    %v2208 = vpop.permute.xlu0 %2207
    %v2215 = vsel %vm760, %v2191, 0
    %v2218 = vsel %vm760, %v2192, 0
    %v2221 = vsel %vm760, %v2193, 0
    %v2224 = vsel %vm760, %v2194, 0
    %v2227 = vsel %vm760, %v2195, 0
    %v2230 = vsel %vm760, %v2196, 0
    %v2232 = vsel %vm863, %v2208, 0
    %2234 = vmatprep.subr.mxu0 0.0
    %2235 = vmatpush1.msra.mxu0 0.0
    %2236 = vmatprep.subr.mxu0 0.0
    %2237 = vmatpush1.msra.mxu0 0.0
    %2238 = vmatprep.subr.mxu0 0.0
    %2239 = vmatpush1.msra.mxu0 0.0
    %2240 = vmatprep.subr.mxu0 0.0
    %2241 = vmatpush1.msra.mxu0 0.0
    %2242 = vmatprep.subr.mxu0 0.0
    %2243 = vmatpush1.msra.mxu0 0.0
    %2244 = vmatprep.subr.mxu0 0.0
    %2245 = vmatpush1.msra.mxu0 0.0
    %2246 = vmatprep.subr.mxu0 0.0
    %2247 = vmatpush1.msra.mxu0 0.0
    %2248 = vmatprep.subr.mxu0 0.0
    %2249 = vmatpush1.msra.mxu0 0.0
    %2250 = vmatprep.subr.mxu0 0.0
    %2251 = vmatpush1.msra.mxu0 0.0
    %2252 = vmatprep.subr.mxu0 0.0
    %2253 = vmatpush1.msra.mxu0 0.0
    %2254 = vmatprep.subr.mxu0 0.0
    %2255 = vmatpush1.msra.mxu0 %v2232
    %2256 = vmatprep.subr.mxu0 0.0
    %2257 = vmatpush1.msra.mxu0 %v2206
    %2258 = vmatprep.subr.mxu0 0.0
    %2259 = vmatpush1.msra.mxu0 %v2204
    %2260 = vmatprep.subr.mxu0 0.0
    %2261 = vmatpush1.msra.mxu0 %v2202
    %2262 = vmatprep.subr.mxu0 0.0
    %2263 = vmatpush1.msra.mxu0 %v2200
    %2264 = vmatprep.subr.mxu0 0.0
    %2265 = vmatpush1.msra.mxu0 %v2198
    %2266 = vmatprep.subr.mxu0 0.0
    %2267 = vmatpush2.msra.mxu0 0.0
    %2268 = vmatprep.subr.mxu0 0.0
    %2269 = vmatpush2.msra.mxu0 0.0
    %2270 = vmatprep.subr.mxu0 0.0
    %2271 = vmatpush2.msra.mxu0 0.0
    %2272 = vmatprep.subr.mxu0 0.0
    %2273 = vmatpush2.msra.mxu0 0.0
    %2274 = vmatprep.subr.mxu0 0.0
    %2275 = vmatpush2.msra.mxu0 0.0
    %2276 = vmatprep.subr.mxu0 0.0
    %2277 = vmatpush2.msra.mxu0 0.0
    %2278 = vmatprep.subr.mxu0 0.0
    %2279 = vmatpush2.msra.mxu0 0.0
    %2280 = vmatprep.subr.mxu0 0.0
    %2281 = vmatpush2.msra.mxu0 0.0
    %2282 = vmatprep.subr.mxu0 0.0
    %2283 = vmatpush2.msra.mxu0 0.0
    %2284 = vmatprep.subr.mxu0 0.0
    %2285 = vmatpush2.msra.mxu0 0.0
    %2286 = vmatprep.subr.mxu0 0.0
    %2287 = vmatpush2.msra.mxu0 0.0
    %2288 = vmatprep.subr.mxu0 0.0
    %2289 = vmatpush2.msra.mxu0 0.0
    %2290 = vmatprep.subr.mxu0 0.0
    %2291 = vmatpush2.msra.mxu0 0.0
    %2292 = vmatprep.subr.mxu0 0.0
    %2293 = vmatpush2.msra.mxu0 0.0
    %2294 = vmatprep.subr.mxu0 0.0
    %2295 = vmatpush2.msra.mxu0 0.0
    %2296 = vmatprep.subr.mxu0 0.0
    %2297 = vmatpush2.msra.mxu0 0.0
    %2298 = vmatprep.mubr.f32.mxu0 0.0
    %2299 = vmatmul.mubr.f32.gmra.mxu0 %v2215
    %v2300 = vpop.f32.mrf.mxu0
    %v2301 = vadd.f32 0.0, %v2300
    %v2302 = vpop.f32.mrf.mxu0
    %2303 = vmatprep.mubr.f32.mxu0 0.0
    %2304 = vmatmul.mubr.f32.gmra.mxu0 %v2218
    %v2305 = vpop.f32.mrf.mxu0
    %v2306 = vadd.f32 0.0, %v2305
    %v2307 = vpop.f32.mrf.mxu0
    %2308 = vmatprep.mubr.f32.mxu0 0.0
    %2309 = vmatmul.mubr.f32.gmra.mxu0 %v2221
    %v2310 = vpop.f32.mrf.mxu0
    %v2311 = vadd.f32 0.0, %v2310
    %v2312 = vpop.f32.mrf.mxu0
    %2313 = vmatprep.mubr.f32.mxu0 0.0
    %2314 = vmatmul.mubr.f32.gmra.mxu0 %v2224
    %v2315 = vpop.f32.mrf.mxu0
    %v2316 = vadd.f32 0.0, %v2315
    %v2317 = vpop.f32.mrf.mxu0
    %2318 = vmatprep.mubr.f32.mxu0 0.0
    %2319 = vmatmul.mubr.f32.gmra.mxu0 %v2227
    %v2320 = vpop.f32.mrf.mxu0
    %v2321 = vadd.f32 0.0, %v2320
    %v2322 = vpop.f32.mrf.mxu0
    %2323 = vmatprep.mubr.f32.mxu0 0.0
    %2324 = vmatmul.mubr.f32.gmra.mxu0 %v2230
    %v2325 = vpop.f32.mrf.mxu0
    %v2326 = vadd.f32 0.0, %v2325
    %v2327 = vpop.f32.mrf.mxu0
    %2328 = vdwg.mxu0
    %v2330 = vsel %vm640, %v2301, 0
    %v2333 = vsel %vm640, %v2306, 0
    %v2336 = vsel %vm640, %v2311, 0
    %v2339 = vsel %vm640, %v2316, 0
    %v2342 = vsel %vm640, %v2321, 0
    %v2345 = vsel %vm640, %v2326, 0
    %2347 = vmatprep.subr.mxu0 0.0
    %2348 = vmatpush1.msra.mxu0 0.0
    %2349 = vmatprep.subr.mxu0 0.0
    %2350 = vmatpush1.msra.mxu0 0.0
    %2351 = vmatprep.subr.mxu0 0.0
    %2352 = vmatpush1.msra.mxu0 0.0
    %2353 = vmatprep.subr.mxu0 0.0
    %2354 = vmatpush1.msra.mxu0 0.0
    %2355 = vmatprep.subr.mxu0 0.0
    %2356 = vmatpush1.msra.mxu0 0.0
    %2357 = vmatprep.subr.mxu0 0.0
    %2358 = vmatpush1.msra.mxu0 0.0
    %2359 = vmatprep.subr.mxu0 0.0
    %2360 = vmatpush1.msra.mxu0 0.0
    %2361 = vmatprep.subr.mxu0 0.0
    %2362 = vmatpush1.msra.mxu0 0.0
    %2363 = vmatprep.subr.mxu0 0.0
    %2364 = vmatpush1.msra.mxu0 0.0
    %2365 = vmatprep.subr.mxu0 0.0
    %2366 = vmatpush1.msra.mxu0 0.0
    %2367 = vmatprep.subr.mxu0 0.0
    %2368 = vmatpush1.msra.mxu0 0.0
    %2369 = vmatprep.subr.mxu0 0.0
    %2370 = vmatpush1.msra.mxu0 0.0
    %2371 = vmatprep.subr.mxu0 0.0
    %2372 = vmatpush1.msra.mxu0 0.0
    %2373 = vmatprep.subr.mxu0 0.0
    %2374 = vmatpush1.msra.mxu0 0.0
    %2375 = vmatprep.subr.mxu0 0.0
    %2376 = vmatpush1.msra.mxu0 0.0
    %2377 = vmatprep.subr.mxu0 0.0
    %2378 = vmatpush1.msra.mxu0 %v501
    %2379 = vmatprep.subr.mxu0 0.0
    %2380 = vmatpush2.msra.mxu0 0.0
    %2381 = vmatprep.subr.mxu0 0.0
    %2382 = vmatpush2.msra.mxu0 0.0
    %2383 = vmatprep.subr.mxu0 0.0
    %2384 = vmatpush2.msra.mxu0 0.0
    %2385 = vmatprep.subr.mxu0 0.0
    %2386 = vmatpush2.msra.mxu0 0.0
    %2387 = vmatprep.subr.mxu0 0.0
    %2388 = vmatpush2.msra.mxu0 0.0
    %2389 = vmatprep.subr.mxu0 0.0
    %2390 = vmatpush2.msra.mxu0 0.0
    %2391 = vmatprep.subr.mxu0 0.0
    %2392 = vmatpush2.msra.mxu0 0.0
    %2393 = vmatprep.subr.mxu0 0.0
    %2394 = vmatpush2.msra.mxu0 0.0
    %2395 = vmatprep.subr.mxu0 0.0
    %2396 = vmatpush2.msra.mxu0 0.0
    %2397 = vmatprep.subr.mxu0 0.0
    %2398 = vmatpush2.msra.mxu0 0.0
    %2399 = vmatprep.subr.mxu0 0.0
    %2400 = vmatpush2.msra.mxu0 0.0
    %2401 = vmatprep.subr.mxu0 0.0
    %2402 = vmatpush2.msra.mxu0 0.0
    %2403 = vmatprep.subr.mxu0 0.0
    %2404 = vmatpush2.msra.mxu0 0.0
    %2405 = vmatprep.subr.mxu0 0.0
    %2406 = vmatpush2.msra.mxu0 0.0
    %2407 = vmatprep.subr.mxu0 0.0
    %2408 = vmatpush2.msra.mxu0 0.0
    %2409 = vmatprep.subr.mxu0 0.0
    %2410 = vmatpush2.msra.mxu0 0.0
    %2411 = vmatprep.mubr.f32.mxu0 0.0
    %2412 = vmatmul.mubr.f32.gmra.mxu0 %v2330
    %v2413 = vpop.f32.mrf.mxu0
    %v2414 = vadd.f32 0.0, %v2413
    %v2415 = vpop.f32.mrf.mxu0
    %2416 = vmatprep.mubr.f32.mxu0 0.0
    %2417 = vmatmul.mubr.f32.gmra.mxu0 %v2333
    %v2418 = vpop.f32.mrf.mxu0
    %v2419 = vadd.f32 0.0, %v2418
    %v2420 = vpop.f32.mrf.mxu0
    %2421 = vmatprep.mubr.f32.mxu0 0.0
    %2422 = vmatmul.mubr.f32.gmra.mxu0 %v2336
    %v2423 = vpop.f32.mrf.mxu0
    %v2424 = vadd.f32 0.0, %v2423
    %v2425 = vpop.f32.mrf.mxu0
    %2426 = vmatprep.mubr.f32.mxu0 0.0
    %2427 = vmatmul.mubr.f32.gmra.mxu0 %v2339
    %v2428 = vpop.f32.mrf.mxu0
    %v2429 = vadd.f32 0.0, %v2428
    %v2430 = vpop.f32.mrf.mxu0
    %2431 = vmatprep.mubr.f32.mxu0 0.0
    %2432 = vmatmul.mubr.f32.gmra.mxu0 %v2342
    %v2433 = vpop.f32.mrf.mxu0
    %v2434 = vadd.f32 0.0, %v2433
    %v2435 = vpop.f32.mrf.mxu0
    %2436 = vmatprep.mubr.f32.mxu0 0.0
    %2437 = vmatmul.mubr.f32.gmra.mxu0 %v2345
    %v2438 = vpop.f32.mrf.mxu0
    %v2439 = vadd.f32 0.0, %v2438
    %v2440 = vpop.f32.mrf.mxu0
    %2441 = vdwg.mxu0
    %v2442 = vadd.f32 %v1982, %v2414
    %v2443 = vadd.f32 %v1983, %v2419
    %v2444 = vadd.f32 %v1984, %v2424
    %v2445 = vadd.f32 %v1985, %v2429
    %v2446 = vadd.f32 %v1986, %v2434
    %v2447 = vadd.f32 %v1987, %v2439
    %v2449 = vlaneseq
    %v2450 = vshrl.u32 %v2449, 7
    %v2451 = vsub.s32 0, %v2450
    %v2452 = vrot.slane %v502, %v2451
    %v2454 = vadd.f32 %v2442, %v2452
    %v2455 = vadd.f32 %v2443, %v2452
    %v2456 = vadd.f32 %v2444, %v2452
    %v2457 = vadd.f32 %v2445, %v2452
    %v2458 = vadd.f32 %v2446, %v2452
    %v2459 = vadd.f32 %v2447, %v2452
    %v2460 = vadd.f32 %v481, %v2454
    %v2461 = vadd.f32 %v482, %v2455
    %v2462 = vadd.f32 %v483, %v2456
    %v2463 = vadd.f32 %v484, %v2457
    %v2464 = vadd.f32 %v485, %v2458
    %v2465 = vadd.f32 %v486, %v2459
    %v2466 = vld [vmem:[%s13] sm:$0x1]
    %v2467 = vld [vmem:[%s14] sm:$0x1]
    %v2468 = vsel %vm247, %v2460, 0.0
    %2469 = vadd.xlane.f32.xlu0 %v2468
    %v2470 = vpop.xlane.xlu0 %2469
    %v2471 = vsel %vm247, %v2461, 0.0
    %2472 = vadd.xlane.f32.xlu0 %v2471
    %v2473 = vpop.xlane.xlu0 %2472
    %v2474 = vsel %vm247, %v2462, 0.0
    %2475 = vadd.xlane.f32.xlu0 %v2474
    %v2476 = vpop.xlane.xlu0 %2475
    %v2477 = vsel %vm247, %v2463, 0.0
    %2478 = vadd.xlane.f32.xlu0 %v2477
    %v2479 = vpop.xlane.xlu0 %2478
    %v2480 = vsel %vm247, %v2464, 0.0
    %2481 = vadd.xlane.f32.xlu0 %v2480
    %v2482 = vpop.xlane.xlu0 %2481
    %vm2483 = vcmask 257024
    %v2484 = vsel %vm2483, %v2465, 0.0
    %2485 = vadd.xlane.f32.xlu0 %v2484
    %v2486 = vpop.xlane.xlu0 %2485
    %v2487 = vrcp.pop 32.0
    %v2488 = vmul.f32 %v2470, %v2487
    %v2489 = vmul.f32 %v2473, %v2487
    %v2490 = vmul.f32 %v2476, %v2487
    %v2491 = vmul.f32 %v2479, %v2487
    %v2492 = vmul.f32 %v2482, %v2487
    %v2493 = vmul.f32 %v2486, %v2487
    %v2494 = vsub.f32 %v2460, %v2488
    %v2495 = vsub.f32 %v2461, %v2489
    %v2496 = vsub.f32 %v2462, %v2490
    %v2497 = vsub.f32 %v2463, %v2491
    %v2498 = vsub.f32 %v2464, %v2492
    %v2499 = vsub.f32 %v2465, %v2493
    %v2500 = vmul.f32 %v2494, %v2494
    %v2501 = vmul.f32 %v2495, %v2495
    %v2502 = vmul.f32 %v2496, %v2496
    %v2503 = vmul.f32 %v2497, %v2497
    %v2504 = vmul.f32 %v2498, %v2498
    %v2505 = vmul.f32 %v2499, %v2499
    %v2506 = vsel %vm247, %v2500, 0.0
    %2507 = vadd.xlane.f32.xlu0 %v2506
    %v2508 = vpop.xlane.xlu0 %2507
    %v2509 = vsel %vm247, %v2501, 0.0
    %2510 = vadd.xlane.f32.xlu0 %v2509
    %v2511 = vpop.xlane.xlu0 %2510
    %v2512 = vsel %vm247, %v2502, 0.0
    %2513 = vadd.xlane.f32.xlu0 %v2512
    %v2514 = vpop.xlane.xlu0 %2513
    %v2515 = vsel %vm247, %v2503, 0.0
    %2516 = vadd.xlane.f32.xlu0 %v2515
    %v2517 = vpop.xlane.xlu0 %2516
    %v2518 = vsel %vm247, %v2504, 0.0
    %2519 = vadd.xlane.f32.xlu0 %v2518
    %v2520 = vpop.xlane.xlu0 %2519
    %v2521 = vsel %vm2483, %v2505, 0.0
    %2522 = vadd.xlane.f32.xlu0 %v2521
    %v2523 = vpop.xlane.xlu0 %2522
    %v2524 = vmul.f32 %v2508, %v2487
    %v2525 = vmul.f32 %v2511, %v2487
    %v2526 = vmul.f32 %v2514, %v2487
    %v2527 = vmul.f32 %v2517, %v2487
    %v2528 = vmul.f32 %v2520, %v2487
    %v2529 = vmul.f32 %v2523, %v2487
    %v2530 = vadd.f32 %v2524, 1e-05
    %v2531 = vadd.f32 %v2525, 1e-05
    %v2532 = vadd.f32 %v2526, 1e-05
    %v2533 = vadd.f32 %v2527, 1e-05
    %v2534 = vadd.f32 %v2528, 1e-05
    %v2535 = vadd.f32 %v2529, 1e-05
    %v2536 = vrsqrt.pop %v2530
    %v2537 = vrsqrt.pop %v2531
    %v2538 = vrsqrt.pop %v2532
    %v2539 = vrsqrt.pop %v2533
    %v2540 = vrsqrt.pop %v2534
    %v2541 = vrsqrt.pop %v2535
    %v2542 = vmul.f32 %v2494, %v2536
    %v2543 = vmul.f32 %v2495, %v2537
    %v2544 = vmul.f32 %v2496, %v2538
    %v2545 = vmul.f32 %v2497, %v2539
    %v2546 = vmul.f32 %v2498, %v2540
    %v2547 = vmul.f32 %v2499, %v2541
    %v2549 = vlaneseq
    %v2550 = vshrl.u32 %v2549, 7
    %v2551 = vsub.s32 0, %v2550
    %v2552 = vrot.slane %v2466, %v2551
    %v2554 = vmul.f32 %v2542, %v2552
    %v2555 = vmul.f32 %v2543, %v2552
    %v2556 = vmul.f32 %v2544, %v2552
    %v2557 = vmul.f32 %v2545, %v2552
    %v2558 = vmul.f32 %v2546, %v2552
    %v2559 = vmul.f32 %v2547, %v2552
    %v2561 = vlaneseq
    %v2562 = vshrl.u32 %v2561, 7
    %v2563 = vsub.s32 0, %v2562
    %v2564 = vrot.slane %v2467, %v2563
    %v2566 = vadd.f32 %v2554, %v2564
    %v2567 = vadd.f32 %v2555, %v2564
    %v2568 = vadd.f32 %v2556, %v2564
    %v2569 = vadd.f32 %v2557, %v2564
    %v2570 = vadd.f32 %v2558, %v2564
    %v2571 = vadd.f32 %v2559, %v2564
    %v2572 = vld [vmem:[%s15] sm:$0xff]
    %v2573 = vld [vmem:[%s15 + $0x8] sm:$0xff]
    %v2574 = vld [vmem:[%s15 + $0x10] sm:$0xff]
    %v2575 = vld [vmem:[%s15 + $0x18] sm:$0xff]
    %v2576 = vld [vmem:[%s16] sm:$0x1]
    %v2578 = vlaneseq
    %v2579 = vshrl.u32 %v2578, 7
    %v2580 = vsub.s32 0, %v2579
    %v2581 = vrot.slane %v2576, %v2580
    %v2584 = vsel %vm247, %v2566, 0
    %v2587 = vsel %vm247, %v2567, 0
    %v2590 = vsel %vm247, %v2568, 0
    %v2593 = vsel %vm247, %v2569, 0
    %v2596 = vsel %vm247, %v2570, 0
    %v2599 = vsel %vm247, %v2571, 0
    %2601 = vmatprep.subr.mxu0 0.0
    %2602 = vmatpush1.msra.mxu0 0.0
    %2603 = vmatprep.subr.mxu0 0.0
    %2604 = vmatpush1.msra.mxu0 0.0
    %2605 = vmatprep.subr.mxu0 0.0
    %2606 = vmatpush1.msra.mxu0 0.0
    %2607 = vmatprep.subr.mxu0 0.0
    %2608 = vmatpush1.msra.mxu0 0.0
    %2609 = vmatprep.subr.mxu0 0.0
    %2610 = vmatpush1.msra.mxu0 0.0
    %2611 = vmatprep.subr.mxu0 0.0
    %2612 = vmatpush1.msra.mxu0 0.0
    %2613 = vmatprep.subr.mxu0 0.0
    %2614 = vmatpush1.msra.mxu0 0.0
    %2615 = vmatprep.subr.mxu0 0.0
    %2616 = vmatpush1.msra.mxu0 0.0
    %2617 = vmatprep.subr.mxu0 0.0
    %2618 = vmatpush1.msra.mxu0 0.0
    %2619 = vmatprep.subr.mxu0 0.0
    %2620 = vmatpush1.msra.mxu0 0.0
    %2621 = vmatprep.subr.mxu0 0.0
    %2622 = vmatpush1.msra.mxu0 0.0
    %2623 = vmatprep.subr.mxu0 0.0
    %2624 = vmatpush1.msra.mxu0 0.0
    %2625 = vmatprep.subr.mxu0 0.0
    %2626 = vmatpush1.msra.mxu0 %v2575
    %2627 = vmatprep.subr.mxu0 0.0
    %2628 = vmatpush1.msra.mxu0 %v2574
    %2629 = vmatprep.subr.mxu0 0.0
    %2630 = vmatpush1.msra.mxu0 %v2573
    %2631 = vmatprep.subr.mxu0 0.0
    %2632 = vmatpush1.msra.mxu0 %v2572
    %2633 = vmatprep.subr.mxu0 0.0
    %2634 = vmatpush2.msra.mxu0 0.0
    %2635 = vmatprep.subr.mxu0 0.0
    %2636 = vmatpush2.msra.mxu0 0.0
    %2637 = vmatprep.subr.mxu0 0.0
    %2638 = vmatpush2.msra.mxu0 0.0
    %2639 = vmatprep.subr.mxu0 0.0
    %2640 = vmatpush2.msra.mxu0 0.0
    %2641 = vmatprep.subr.mxu0 0.0
    %2642 = vmatpush2.msra.mxu0 0.0
    %2643 = vmatprep.subr.mxu0 0.0
    %2644 = vmatpush2.msra.mxu0 0.0
    %2645 = vmatprep.subr.mxu0 0.0
    %2646 = vmatpush2.msra.mxu0 0.0
    %2647 = vmatprep.subr.mxu0 0.0
    %2648 = vmatpush2.msra.mxu0 0.0
    %2649 = vmatprep.subr.mxu0 0.0
    %2650 = vmatpush2.msra.mxu0 0.0
    %2651 = vmatprep.subr.mxu0 0.0
    %2652 = vmatpush2.msra.mxu0 0.0
    %2653 = vmatprep.subr.mxu0 0.0
    %2654 = vmatpush2.msra.mxu0 0.0
    %2655 = vmatprep.subr.mxu0 0.0
    %2656 = vmatpush2.msra.mxu0 0.0
    %2657 = vmatprep.subr.mxu0 0.0
    %2658 = vmatpush2.msra.mxu0 0.0
    %2659 = vmatprep.subr.mxu0 0.0
    %2660 = vmatpush2.msra.mxu0 0.0
    %2661 = vmatprep.subr.mxu0 0.0
    %2662 = vmatpush2.msra.mxu0 0.0
    %2663 = vmatprep.subr.mxu0 0.0
    %2664 = vmatpush2.msra.mxu0 0.0
    %2665 = vmatprep.mubr.f32.mxu0 0.0
    %2666 = vmatmul.mubr.f32.gmra.mxu0 %v2584
    %v2667 = vpop.f32.mrf.mxu0
    %v2668 = vadd.f32 %v2581, %v2667
    %v2669 = vpop.f32.mrf.mxu0
    %2670 = vmatprep.mubr.f32.mxu0 0.0
    %2671 = vmatmul.mubr.f32.gmra.mxu0 %v2587
    %v2672 = vpop.f32.mrf.mxu0
    %v2673 = vadd.f32 %v2581, %v2672
    %v2674 = vpop.f32.mrf.mxu0
    %2675 = vmatprep.mubr.f32.mxu0 0.0
    %2676 = vmatmul.mubr.f32.gmra.mxu0 %v2590
    %v2677 = vpop.f32.mrf.mxu0
    %v2678 = vadd.f32 %v2581, %v2677
    %v2679 = vpop.f32.mrf.mxu0
    %2680 = vmatprep.mubr.f32.mxu0 0.0
    %2681 = vmatmul.mubr.f32.gmra.mxu0 %v2593
    %v2682 = vpop.f32.mrf.mxu0
    %v2683 = vadd.f32 %v2581, %v2682
    %v2684 = vpop.f32.mrf.mxu0
    %2685 = vmatprep.mubr.f32.mxu0 0.0
    %2686 = vmatmul.mubr.f32.gmra.mxu0 %v2596
    %v2687 = vpop.f32.mrf.mxu0
    %v2688 = vadd.f32 %v2581, %v2687
    %v2689 = vpop.f32.mrf.mxu0
    %2690 = vmatprep.mubr.f32.mxu0 0.0
    %2691 = vmatmul.mubr.f32.gmra.mxu0 %v2599
    %v2692 = vpop.f32.mrf.mxu0
    %v2693 = vadd.f32 %v2581, %v2692
    %v2694 = vpop.f32.mrf.mxu0
    %2695 = vdwg.mxu0
    %v2696 = vmax.f32 %v2668, 0.0
    %v2697 = vmax.f32 %v2673, 0.0
    %v2698 = vmax.f32 %v2678, 0.0
    %v2699 = vmax.f32 %v2683, 0.0
    %v2700 = vmax.f32 %v2688, 0.0
    %v2701 = vmax.f32 %v2693, 0.0
    %v2702 = vld [vmem:[%s17] sm:$0xff]
    %v2703 = vld [vmem:[%s17 + $0x8] sm:$0xff]
    %v2704 = vld [vmem:[%s17 + $0x10] sm:$0xff]
    %v2705 = vld [vmem:[%s17 + $0x18] sm:$0xff]
    %v2706 = vld [vmem:[%s17 + $0x20] sm:$0xff]
    %v2707 = vld [vmem:[%s17 + $0x28] sm:$0xff]
    %v2708 = vld [vmem:[%s17 + $0x30] sm:$0xff]
    %v2709 = vld [vmem:[%s17 + $0x38] sm:$0xff]
    %v2710 = vld [vmem:[%s18] sm:$0x1]
    %v2712 = vlaneseq
    %v2713 = vshrl.u32 %v2712, 7
    %v2714 = vsub.s32 0, %v2713
    %v2715 = vrot.slane %v2710, %v2714
    %vm2717 = vcmask 523264
    %v2719 = vsel %vm2717, %v2696, 0
    %v2722 = vsel %vm2717, %v2697, 0
    %v2725 = vsel %vm2717, %v2698, 0
    %v2728 = vsel %vm2717, %v2699, 0
    %v2731 = vsel %vm2717, %v2700, 0
    %v2734 = vsel %vm2717, %v2701, 0
    %2736 = vmatprep.subr.mxu0 0.0
    %2737 = vmatpush1.msra.mxu0 0.0
    %2738 = vmatprep.subr.mxu0 0.0
    %2739 = vmatpush1.msra.mxu0 0.0
    %2740 = vmatprep.subr.mxu0 0.0
    %2741 = vmatpush1.msra.mxu0 0.0
    %2742 = vmatprep.subr.mxu0 0.0
    %2743 = vmatpush1.msra.mxu0 0.0
    %2744 = vmatprep.subr.mxu0 0.0
    %2745 = vmatpush1.msra.mxu0 0.0
    %2746 = vmatprep.subr.mxu0 0.0
    %2747 = vmatpush1.msra.mxu0 0.0
    %2748 = vmatprep.subr.mxu0 0.0
    %2749 = vmatpush1.msra.mxu0 0.0
    %2750 = vmatprep.subr.mxu0 0.0
    %2751 = vmatpush1.msra.mxu0 0.0
    %2752 = vmatprep.subr.mxu0 0.0
    %2753 = vmatpush1.msra.mxu0 %v2709
    %2754 = vmatprep.subr.mxu0 0.0
    %2755 = vmatpush1.msra.mxu0 %v2708
    %2756 = vmatprep.subr.mxu0 0.0
    %2757 = vmatpush1.msra.mxu0 %v2707
    %2758 = vmatprep.subr.mxu0 0.0
    %2759 = vmatpush1.msra.mxu0 %v2706
    %2760 = vmatprep.subr.mxu0 0.0
    %2761 = vmatpush1.msra.mxu0 %v2705
    %2762 = vmatprep.subr.mxu0 0.0
    %2763 = vmatpush1.msra.mxu0 %v2704
    %2764 = vmatprep.subr.mxu0 0.0
    %2765 = vmatpush1.msra.mxu0 %v2703
    %2766 = vmatprep.subr.mxu0 0.0
    %2767 = vmatpush1.msra.mxu0 %v2702
    %2768 = vmatprep.subr.mxu0 0.0
    %2769 = vmatpush2.msra.mxu0 0.0
    %2770 = vmatprep.subr.mxu0 0.0
    %2771 = vmatpush2.msra.mxu0 0.0
    %2772 = vmatprep.subr.mxu0 0.0
    %2773 = vmatpush2.msra.mxu0 0.0
    %2774 = vmatprep.subr.mxu0 0.0
    %2775 = vmatpush2.msra.mxu0 0.0
    %2776 = vmatprep.subr.mxu0 0.0
    %2777 = vmatpush2.msra.mxu0 0.0
    %2778 = vmatprep.subr.mxu0 0.0
    %2779 = vmatpush2.msra.mxu0 0.0
    %2780 = vmatprep.subr.mxu0 0.0
    %2781 = vmatpush2.msra.mxu0 0.0
    %2782 = vmatprep.subr.mxu0 0.0
    %2783 = vmatpush2.msra.mxu0 0.0
    %2784 = vmatprep.subr.mxu0 0.0
    %2785 = vmatpush2.msra.mxu0 0.0
    %2786 = vmatprep.subr.mxu0 0.0
    %2787 = vmatpush2.msra.mxu0 0.0
    %2788 = vmatprep.subr.mxu0 0.0
    %2789 = vmatpush2.msra.mxu0 0.0
    %2790 = vmatprep.subr.mxu0 0.0
    %2791 = vmatpush2.msra.mxu0 0.0
    %2792 = vmatprep.subr.mxu0 0.0
    %2793 = vmatpush2.msra.mxu0 0.0
    %2794 = vmatprep.subr.mxu0 0.0
    %2795 = vmatpush2.msra.mxu0 0.0
    %2796 = vmatprep.subr.mxu0 0.0
    %2797 = vmatpush2.msra.mxu0 0.0
    %2798 = vmatprep.subr.mxu0 0.0
    %2799 = vmatpush2.msra.mxu0 0.0
    %2800 = vmatprep.mubr.f32.mxu0 0.0
    %2801 = vmatmul.mubr.f32.gmra.mxu0 %v2719
    %v2802 = vpop.f32.mrf.mxu0
    %v2803 = vadd.f32 %v2715, %v2802
    %v2804 = vpop.f32.mrf.mxu0
    %2805 = vmatprep.mubr.f32.mxu0 0.0
    %2806 = vmatmul.mubr.f32.gmra.mxu0 %v2722
    %v2807 = vpop.f32.mrf.mxu0
    %v2808 = vadd.f32 %v2715, %v2807
    %v2809 = vpop.f32.mrf.mxu0
    %2810 = vmatprep.mubr.f32.mxu0 0.0
    %2811 = vmatmul.mubr.f32.gmra.mxu0 %v2725
    %v2812 = vpop.f32.mrf.mxu0
    %v2813 = vadd.f32 %v2715, %v2812
    %v2814 = vpop.f32.mrf.mxu0
    %2815 = vmatprep.mubr.f32.mxu0 0.0
    %2816 = vmatmul.mubr.f32.gmra.mxu0 %v2728
    %v2817 = vpop.f32.mrf.mxu0
    %v2818 = vadd.f32 %v2715, %v2817
    %v2819 = vpop.f32.mrf.mxu0
    %2820 = vmatprep.mubr.f32.mxu0 0.0
    %2821 = vmatmul.mubr.f32.gmra.mxu0 %v2731
    %v2822 = vpop.f32.mrf.mxu0
    %v2823 = vadd.f32 %v2715, %v2822
    %v2824 = vpop.f32.mrf.mxu0
    %2825 = vmatprep.mubr.f32.mxu0 0.0
    %2826 = vmatmul.mubr.f32.gmra.mxu0 %v2734
    %v2827 = vpop.f32.mrf.mxu0
    %v2828 = vadd.f32 %v2715, %v2827
    %v2829 = vpop.f32.mrf.mxu0
    %2830 = vdwg.mxu0
    %v2831 = vadd.f32 %v2566, %v2803
    %v2832 = vadd.f32 %v2567, %v2808
    %v2833 = vadd.f32 %v2568, %v2813
    %v2834 = vadd.f32 %v2569, %v2818
    %v2835 = vadd.f32 %v2570, %v2823
    %v2836 = vadd.f32 %v2571, %v2828
    %v2837 = vld [vmem:[%s19] sm:$0x1]
    %v2838 = vld [vmem:[%s20] sm:$0x1]
    %v2839 = vsel %vm247, %v2831, 0.0
    %2840 = vadd.xlane.f32.xlu0 %v2839
    %v2841 = vpop.xlane.xlu0 %2840
    %v2842 = vsel %vm247, %v2832, 0.0
    %2843 = vadd.xlane.f32.xlu0 %v2842
    %v2844 = vpop.xlane.xlu0 %2843
    %v2845 = vsel %vm247, %v2833, 0.0
    %2846 = vadd.xlane.f32.xlu0 %v2845
    %v2847 = vpop.xlane.xlu0 %2846
    %v2848 = vsel %vm247, %v2834, 0.0
    %2849 = vadd.xlane.f32.xlu0 %v2848
    %v2850 = vpop.xlane.xlu0 %2849
    %v2851 = vsel %vm247, %v2835, 0.0
    %2852 = vadd.xlane.f32.xlu0 %v2851
    %v2853 = vpop.xlane.xlu0 %2852
    %v2854 = vsel %vm2483, %v2836, 0.0
    %2855 = vadd.xlane.f32.xlu0 %v2854
    %v2856 = vpop.xlane.xlu0 %2855
    %v2857 = vmul.f32 %v2841, %v2487
    %v2858 = vmul.f32 %v2844, %v2487
    %v2859 = vmul.f32 %v2847, %v2487
    %v2860 = vmul.f32 %v2850, %v2487
    %v2861 = vmul.f32 %v2853, %v2487
    %v2862 = vmul.f32 %v2856, %v2487
    %v2863 = vsub.f32 %v2831, %v2857
    %v2864 = vsub.f32 %v2832, %v2858
    %v2865 = vsub.f32 %v2833, %v2859
    %v2866 = vsub.f32 %v2834, %v2860
    %v2867 = vsub.f32 %v2835, %v2861
    %v2868 = vsub.f32 %v2836, %v2862
    %v2869 = vmul.f32 %v2863, %v2863
    %v2870 = vmul.f32 %v2864, %v2864
    %v2871 = vmul.f32 %v2865, %v2865
    %v2872 = vmul.f32 %v2866, %v2866
    %v2873 = vmul.f32 %v2867, %v2867
    %v2874 = vmul.f32 %v2868, %v2868
    %v2875 = vsel %vm247, %v2869, 0.0
    %2876 = vadd.xlane.f32.xlu0 %v2875
    %v2877 = vpop.xlane.xlu0 %2876
    %v2878 = vsel %vm247, %v2870, 0.0
    %2879 = vadd.xlane.f32.xlu0 %v2878
    %v2880 = vpop.xlane.xlu0 %2879
    %v2881 = vsel %vm247, %v2871, 0.0
    %2882 = vadd.xlane.f32.xlu0 %v2881
    %v2883 = vpop.xlane.xlu0 %2882
    %v2884 = vsel %vm247, %v2872, 0.0
    %2885 = vadd.xlane.f32.xlu0 %v2884
    %v2886 = vpop.xlane.xlu0 %2885
    %v2887 = vsel %vm247, %v2873, 0.0
    %2888 = vadd.xlane.f32.xlu0 %v2887
    %v2889 = vpop.xlane.xlu0 %2888
    %v2890 = vsel %vm2483, %v2874, 0.0
    %2891 = vadd.xlane.f32.xlu0 %v2890
    %v2892 = vpop.xlane.xlu0 %2891
    %v2893 = vmul.f32 %v2877, %v2487
    %v2894 = vmul.f32 %v2880, %v2487
    %v2895 = vmul.f32 %v2883, %v2487
    %v2896 = vmul.f32 %v2886, %v2487
    %v2897 = vmul.f32 %v2889, %v2487
    %v2898 = vmul.f32 %v2892, %v2487
    %v2899 = vadd.f32 %v2893, 1e-05
    %v2900 = vadd.f32 %v2894, 1e-05
    %v2901 = vadd.f32 %v2895, 1e-05
    %v2902 = vadd.f32 %v2896, 1e-05
    %v2903 = vadd.f32 %v2897, 1e-05
    %v2904 = vadd.f32 %v2898, 1e-05
    %v2905 = vrsqrt.pop %v2899
    %v2906 = vrsqrt.pop %v2900
    %v2907 = vrsqrt.pop %v2901
    %v2908 = vrsqrt.pop %v2902
    %v2909 = vrsqrt.pop %v2903
    %v2910 = vrsqrt.pop %v2904
    %v2911 = vmul.f32 %v2863, %v2905
    %v2912 = vmul.f32 %v2864, %v2906
    %v2913 = vmul.f32 %v2865, %v2907
    %v2914 = vmul.f32 %v2866, %v2908
    %v2915 = vmul.f32 %v2867, %v2909
    %v2916 = vmul.f32 %v2868, %v2910
    %v2918 = vlaneseq
    %v2919 = vshrl.u32 %v2918, 7
    %v2920 = vsub.s32 0, %v2919
    %v2921 = vrot.slane %v2837, %v2920
    %v2923 = vmul.f32 %v2911, %v2921
    %v2924 = vmul.f32 %v2912, %v2921
    %v2925 = vmul.f32 %v2913, %v2921
    %v2926 = vmul.f32 %v2914, %v2921
    %v2927 = vmul.f32 %v2915, %v2921
    %v2928 = vmul.f32 %v2916, %v2921
    %v2930 = vlaneseq
    %v2931 = vshrl.u32 %v2930, 7
    %v2932 = vsub.s32 0, %v2931
    %v2933 = vrot.slane %v2838, %v2932
    %v2935 = vadd.f32 %v2923, %v2933
    %v2936 = vadd.f32 %v2924, %v2933
    %v2937 = vadd.f32 %v2925, %v2933
    %v2938 = vadd.f32 %v2926, %v2933
    %v2939 = vadd.f32 %v2927, %v2933
    %v2940 = vadd.f32 %v2928, %v2933
    %s2941 = scalar_lea.vmem %s9, 32
    %v2942 = vld [vmem:[%s2941] sm:$0xff]
    %v2943 = vld [vmem:[%s2941 + $0x8] sm:$0xff]
    %v2944 = vld [vmem:[%s2941 + $0x10] sm:$0xff]
    %v2945 = vld [vmem:[%s2941 + $0x18] sm:$0xff]
    %s2946 = scalar_lea.vmem %s10, 1
    %v2947 = vld [vmem:[%s2946] sm:$0x1]
    %s2948 = scalar_lea.vmem %s11, 32
    %v2949 = vld [vmem:[%s2948] sm:$0xff]
    %v2950 = vld [vmem:[%s2948 + $0x8] sm:$0xff]
    %v2951 = vld [vmem:[%s2948 + $0x10] sm:$0xff]
    %v2952 = vld [vmem:[%s2948 + $0x18] sm:$0xff]
    %s2953 = scalar_lea.vmem %s12, 1
    %v2954 = vld [vmem:[%s2953] sm:$0x1]
    %v2956 = vlaneseq
    %v2957 = vshrl.u32 %v2956, 7
    %v2958 = vsub.s32 0, %v2957
    %v2959 = vrot.slane %v2947, %v2958
    %v2962 = vsel %vm247, %v2935, 0
    %v2965 = vsel %vm247, %v2936, 0
    %v2968 = vsel %vm247, %v2937, 0
    %v2971 = vsel %vm247, %v2938, 0
    %v2974 = vsel %vm247, %v2939, 0
    %v2977 = vsel %vm247, %v2940, 0
    %2979 = vmatprep.subr.mxu0 0.0
    %2980 = vmatpush1.msra.mxu0 0.0
    %2981 = vmatprep.subr.mxu0 0.0
    %2982 = vmatpush1.msra.mxu0 0.0
    %2983 = vmatprep.subr.mxu0 0.0
    %2984 = vmatpush1.msra.mxu0 0.0
    %2985 = vmatprep.subr.mxu0 0.0
    %2986 = vmatpush1.msra.mxu0 0.0
    %2987 = vmatprep.subr.mxu0 0.0
    %2988 = vmatpush1.msra.mxu0 0.0
    %2989 = vmatprep.subr.mxu0 0.0
    %2990 = vmatpush1.msra.mxu0 0.0
    %2991 = vmatprep.subr.mxu0 0.0
    %2992 = vmatpush1.msra.mxu0 0.0
    %2993 = vmatprep.subr.mxu0 0.0
    %2994 = vmatpush1.msra.mxu0 0.0
    %2995 = vmatprep.subr.mxu0 0.0
    %2996 = vmatpush1.msra.mxu0 0.0
    %2997 = vmatprep.subr.mxu0 0.0
    %2998 = vmatpush1.msra.mxu0 0.0
    %2999 = vmatprep.subr.mxu0 0.0
    %3000 = vmatpush1.msra.mxu0 0.0
    %3001 = vmatprep.subr.mxu0 0.0
    %3002 = vmatpush1.msra.mxu0 0.0
    %3003 = vmatprep.subr.mxu0 0.0
    %3004 = vmatpush1.msra.mxu0 %v2945
    %3005 = vmatprep.subr.mxu0 0.0
    %3006 = vmatpush1.msra.mxu0 %v2944
    %3007 = vmatprep.subr.mxu0 0.0
    %3008 = vmatpush1.msra.mxu0 %v2943
    %3009 = vmatprep.subr.mxu0 0.0
    %3010 = vmatpush1.msra.mxu0 %v2942
    %3011 = vmatprep.subr.mxu0 0.0
    %3012 = vmatpush2.msra.mxu0 0.0
    %3013 = vmatprep.subr.mxu0 0.0
    %3014 = vmatpush2.msra.mxu0 0.0
    %3015 = vmatprep.subr.mxu0 0.0
    %3016 = vmatpush2.msra.mxu0 0.0
    %3017 = vmatprep.subr.mxu0 0.0
    %3018 = vmatpush2.msra.mxu0 0.0
    %3019 = vmatprep.subr.mxu0 0.0
    %3020 = vmatpush2.msra.mxu0 0.0
    %3021 = vmatprep.subr.mxu0 0.0
    %3022 = vmatpush2.msra.mxu0 0.0
    %3023 = vmatprep.subr.mxu0 0.0
    %3024 = vmatpush2.msra.mxu0 0.0
    %3025 = vmatprep.subr.mxu0 0.0
    %3026 = vmatpush2.msra.mxu0 0.0
    %3027 = vmatprep.subr.mxu0 0.0
    %3028 = vmatpush2.msra.mxu0 0.0
    %3029 = vmatprep.subr.mxu0 0.0
    %3030 = vmatpush2.msra.mxu0 0.0
    %3031 = vmatprep.subr.mxu0 0.0
    %3032 = vmatpush2.msra.mxu0 0.0
    %3033 = vmatprep.subr.mxu0 0.0
    %3034 = vmatpush2.msra.mxu0 0.0
    %3035 = vmatprep.subr.mxu0 0.0
    %3036 = vmatpush2.msra.mxu0 0.0
    %3037 = vmatprep.subr.mxu0 0.0
    %3038 = vmatpush2.msra.mxu0 0.0
    %3039 = vmatprep.subr.mxu0 0.0
    %3040 = vmatpush2.msra.mxu0 0.0
    %3041 = vmatprep.subr.mxu0 0.0
    %3042 = vmatpush2.msra.mxu0 0.0
    %3043 = vmatprep.mubr.f32.mxu0 0.0
    %3044 = vmatmul.mubr.f32.gmra.mxu0 %v2962
    %v3045 = vpop.f32.mrf.mxu0
    %v3046 = vadd.f32 %v2959, %v3045
    %v3047 = vpop.f32.mrf.mxu0
    %3048 = vmatprep.mubr.f32.mxu0 0.0
    %3049 = vmatmul.mubr.f32.gmra.mxu0 %v2965
    %v3050 = vpop.f32.mrf.mxu0
    %v3051 = vadd.f32 %v2959, %v3050
    %v3052 = vpop.f32.mrf.mxu0
    %3053 = vmatprep.mubr.f32.mxu0 0.0
    %3054 = vmatmul.mubr.f32.gmra.mxu0 %v2968
    %v3055 = vpop.f32.mrf.mxu0
    %v3056 = vadd.f32 %v2959, %v3055
    %v3057 = vpop.f32.mrf.mxu0
    %3058 = vmatprep.mubr.f32.mxu0 0.0
    %3059 = vmatmul.mubr.f32.gmra.mxu0 %v2971
    %v3060 = vpop.f32.mrf.mxu0
    %v3061 = vadd.f32 %v2959, %v3060
    %v3062 = vpop.f32.mrf.mxu0
    %3063 = vmatprep.mubr.f32.mxu0 0.0
    %3064 = vmatmul.mubr.f32.gmra.mxu0 %v2974
    %v3065 = vpop.f32.mrf.mxu0
    %v3066 = vadd.f32 %v2959, %v3065
    %v3067 = vpop.f32.mrf.mxu0
    %3068 = vmatprep.mubr.f32.mxu0 0.0
    %3069 = vmatmul.mubr.f32.gmra.mxu0 %v2977
    %v3070 = vpop.f32.mrf.mxu0
    %v3071 = vadd.f32 %v2959, %v3070
    %v3072 = vpop.f32.mrf.mxu0
    %3073 = vdwg.mxu0
    %3080 = vrot.lane.b32.xlu0 %v3046, 96
    %v3081 = vpop.permute.xlu0 %3080
    %3082 = vrot.lane.b32.xlu0 %v3051, 96
    %v3083 = vpop.permute.xlu0 %3082
    %3084 = vrot.lane.b32.xlu0 %v3056, 96
    %v3085 = vpop.permute.xlu0 %3084
    %3086 = vrot.lane.b32.xlu0 %v3061, 96
    %v3087 = vpop.permute.xlu0 %3086
    %3088 = vrot.lane.b32.xlu0 %v3066, 96
    %v3089 = vpop.permute.xlu0 %3088
    %3090 = vrot.lane.b32.xlu0 %v3071, 96
    %v3091 = vpop.permute.xlu0 %3090
    %v3092 = vsel %vm640, %v3046, 0
    %v3094 = vsel %vm640, %v3051, 0
    %v3096 = vsel %vm640, %v3056, 0
    %v3098 = vsel %vm640, %v3061, 0
    %v3100 = vsel %vm640, %v3066, 0
    %v3102 = vsel %vm640, %v3071, 0
    %v3104 = vsel %vm640, %v3081, 0
    %v3106 = vsel %vm640, %v3083, 0
    %v3108 = vsel %vm640, %v3085, 0
    %v3110 = vsel %vm640, %v3087, 0
    %v3112 = vsel %vm640, %v3089, 0
    %v3114 = vsel %vm640, %v3091, 0
    %3116 = vmatprep.subr.mxu0 0.0
    %3117 = vmatpush1.xpose.msra.mxu0 0.0
    %3118 = vmatprep.subr.mxu0 0.0
    %3119 = vmatpush1.xpose.msra.mxu0 0.0
    %3120 = vmatprep.subr.mxu0 0.0
    %3121 = vmatpush1.xpose.msra.mxu0 0.0
    %3122 = vmatprep.subr.mxu0 0.0
    %3123 = vmatpush1.xpose.msra.mxu0 0.0
    %3124 = vmatprep.subr.mxu0 0.0
    %3125 = vmatpush1.xpose.msra.mxu0 0.0
    %3126 = vmatprep.subr.mxu0 0.0
    %3127 = vmatpush1.xpose.msra.mxu0 0.0
    %3128 = vmatprep.subr.mxu0 0.0
    %3129 = vmatpush1.xpose.msra.mxu0 0.0
    %3130 = vmatprep.subr.mxu0 0.0
    %3131 = vmatpush1.xpose.msra.mxu0 0.0
    %3132 = vmatprep.subr.mxu0 0.0
    %3133 = vmatpush1.xpose.msra.mxu0 0.0
    %3134 = vmatprep.subr.mxu0 0.0
    %3135 = vmatpush1.xpose.msra.mxu0 0.0
    %3136 = vmatprep.subr.mxu0 0.0
    %3137 = vmatpush1.xpose.msra.mxu0 %v3114
    %3138 = vmatprep.subr.mxu0 0.0
    %3139 = vmatpush1.xpose.msra.mxu0 %v3112
    %3140 = vmatprep.subr.mxu0 0.0
    %3141 = vmatpush1.xpose.msra.mxu0 %v3110
    %3142 = vmatprep.subr.mxu0 0.0
    %3143 = vmatpush1.xpose.msra.mxu0 %v3108
    %3144 = vmatprep.subr.mxu0 0.0
    %3145 = vmatpush1.xpose.msra.mxu0 %v3106
    %3146 = vmatprep.subr.mxu0 0.0
    %3147 = vmatpush1.xpose.msra.mxu0 %v3104
    %3148 = vmatprep.subr.mxu0 0.0
    %3149 = vmatpush2.xpose.msra.mxu0 0.0
    %3150 = vmatprep.subr.mxu0 0.0
    %3151 = vmatpush2.xpose.msra.mxu0 0.0
    %3152 = vmatprep.subr.mxu0 0.0
    %3153 = vmatpush2.xpose.msra.mxu0 0.0
    %3154 = vmatprep.subr.mxu0 0.0
    %3155 = vmatpush2.xpose.msra.mxu0 0.0
    %3156 = vmatprep.subr.mxu0 0.0
    %3157 = vmatpush2.xpose.msra.mxu0 0.0
    %3158 = vmatprep.subr.mxu0 0.0
    %3159 = vmatpush2.xpose.msra.mxu0 0.0
    %3160 = vmatprep.subr.mxu0 0.0
    %3161 = vmatpush2.xpose.msra.mxu0 0.0
    %3162 = vmatprep.subr.mxu0 0.0
    %3163 = vmatpush2.xpose.msra.mxu0 0.0
    %3164 = vmatprep.subr.mxu0 0.0
    %3165 = vmatpush2.xpose.msra.mxu0 0.0
    %3166 = vmatprep.subr.mxu0 0.0
    %3167 = vmatpush2.xpose.msra.mxu0 0.0
    %3168 = vmatprep.subr.mxu0 0.0
    %3169 = vmatpush2.xpose.msra.mxu0 0.0
    %3170 = vmatprep.subr.mxu0 0.0
    %3171 = vmatpush2.xpose.msra.mxu0 0.0
    %3172 = vmatprep.subr.mxu0 0.0
    %3173 = vmatpush2.xpose.msra.mxu0 0.0
    %3174 = vmatprep.subr.mxu0 0.0
    %3175 = vmatpush2.xpose.msra.mxu0 0.0
    %3176 = vmatprep.subr.mxu0 0.0
    %3177 = vmatpush2.xpose.msra.mxu0 0.0
    %3178 = vmatprep.subr.mxu0 0.0
    %3179 = vmatpush2.xpose.msra.mxu0 0.0
    %3180 = vmatprep.mubr.f32.mxu0 0.0
    %3181 = vmatmul.mubr.f32.gmra.mxu0 %v3092
    %v3182 = vpop.f32.mrf.mxu0
    %v3183 = vadd.f32 %v487, %v3182
    %v3184 = vpop.f32.mrf.mxu0
    %3185 = vmatprep.mubr.f32.mxu0 0.0
    %3186 = vmatmul.mubr.f32.gmra.mxu0 %v3094
    %v3187 = vpop.f32.mrf.mxu0
    %v3188 = vadd.f32 %v488, %v3187
    %v3189 = vpop.f32.mrf.mxu0
    %3190 = vmatprep.mubr.f32.mxu0 0.0
    %3191 = vmatmul.mubr.f32.gmra.mxu0 %v3096
    %v3192 = vpop.f32.mrf.mxu0
    %v3193 = vadd.f32 %v489, %v3192
    %v3194 = vpop.f32.mrf.mxu0
    %3195 = vmatprep.mubr.f32.mxu0 0.0
    %3196 = vmatmul.mubr.f32.gmra.mxu0 %v3098
    %v3197 = vpop.f32.mrf.mxu0
    %v3198 = vadd.f32 %v490, %v3197
    %v3199 = vpop.f32.mrf.mxu0
    %3200 = vmatprep.mubr.f32.mxu0 0.0
    %3201 = vmatmul.mubr.f32.gmra.mxu0 %v3100
    %v3202 = vpop.f32.mrf.mxu0
    %v3203 = vadd.f32 %v491, %v3202
    %v3204 = vpop.f32.mrf.mxu0
    %3205 = vmatprep.mubr.f32.mxu0 0.0
    %3206 = vmatmul.mubr.f32.gmra.mxu0 %v3102
    %v3207 = vpop.f32.mrf.mxu0
    %v3208 = vadd.f32 %v492, %v3207
    %v3209 = vpop.f32.mrf.mxu0
    %3210 = vdwg.mxu0
    %v3211 = vsel %vm760, %v3183, -inf
    %3212 = vmax.xlane.f32.xlu0 %v3211
    %v3213 = vpop.xlane.xlu0 %3212
    %v3214 = vsel %vm760, %v3188, -inf
    %3215 = vmax.xlane.f32.xlu0 %v3214
    %v3216 = vpop.xlane.xlu0 %3215
    %v3217 = vsel %vm760, %v3193, -inf
    %3218 = vmax.xlane.f32.xlu0 %v3217
    %v3219 = vpop.xlane.xlu0 %3218
    %v3220 = vsel %vm760, %v3198, -inf
    %3221 = vmax.xlane.f32.xlu0 %v3220
    %v3222 = vpop.xlane.xlu0 %3221
    %v3223 = vsel %vm760, %v3203, -inf
    %3224 = vmax.xlane.f32.xlu0 %v3223
    %v3225 = vpop.xlane.xlu0 %3224
    %v3226 = vsel %vm776, %v3208, -inf
    %3227 = vmax.xlane.f32.xlu0 %v3226
    %v3228 = vpop.xlane.xlu0 %3227
    %v3229 = vsub.f32 %v3183, %v3213
    %v3230 = vsub.f32 %v3188, %v3216
    %v3231 = vsub.f32 %v3193, %v3219
    %v3232 = vsub.f32 %v3198, %v3222
    %v3233 = vsub.f32 %v3203, %v3225
    %v3234 = vsub.f32 %v3208, %v3228
    %v3235 = vmul.f32 %v3229, 1.442695
    %v3236 = vpow.pop %v3235
    %v3237 = vmul.f32 %v3230, 1.442695
    %v3238 = vpow.pop %v3237
    %v3239 = vmul.f32 %v3231, 1.442695
    %v3240 = vpow.pop %v3239
    %v3241 = vmul.f32 %v3232, 1.442695
    %v3242 = vpow.pop %v3241
    %v3243 = vmul.f32 %v3233, 1.442695
    %v3244 = vpow.pop %v3243
    %v3245 = vmul.f32 %v3234, 1.442695
    %v3246 = vpow.pop %v3245
    %v3247 = vsel %vm760, %v3236, 0.0
    %3248 = vadd.xlane.f32.xlu0 %v3247
    %v3249 = vpop.xlane.xlu0 %3248
    %v3250 = vsel %vm760, %v3238, 0.0
    %3251 = vadd.xlane.f32.xlu0 %v3250
    %v3252 = vpop.xlane.xlu0 %3251
    %v3253 = vsel %vm760, %v3240, 0.0
    %3254 = vadd.xlane.f32.xlu0 %v3253
    %v3255 = vpop.xlane.xlu0 %3254
    %v3256 = vsel %vm760, %v3242, 0.0
    %3257 = vadd.xlane.f32.xlu0 %v3256
    %v3258 = vpop.xlane.xlu0 %3257
    %v3259 = vsel %vm760, %v3244, 0.0
    %3260 = vadd.xlane.f32.xlu0 %v3259
    %v3261 = vpop.xlane.xlu0 %3260
    %v3262 = vsel %vm776, %v3246, 0.0
    %3263 = vadd.xlane.f32.xlu0 %v3262
    %v3264 = vpop.xlane.xlu0 %3263
    %v3265 = vrcp.pop %v3249
    %v3266 = vrcp.pop %v3252
    %v3267 = vrcp.pop %v3255
    %v3268 = vrcp.pop %v3258
    %v3269 = vrcp.pop %v3261
    %v3270 = vrcp.pop %v3264
    %v3271 = vmul.f32 %v3236, %v3265
    %v3272 = vmul.f32 %v3238, %v3266
    %v3273 = vmul.f32 %v3240, %v3267
    %v3274 = vmul.f32 %v3242, %v3268
    %v3275 = vmul.f32 %v3244, %v3269
    %v3276 = vmul.f32 %v3246, %v3270
    %3277 = vrot.lane.b32.xlu0 %v3046, 64
    %v3278 = vpop.permute.xlu0 %3277
    %3279 = vrot.lane.b32.xlu0 %v3051, 64
    %v3280 = vpop.permute.xlu0 %3279
    %3281 = vrot.lane.b32.xlu0 %v3056, 64
    %v3282 = vpop.permute.xlu0 %3281
    %3283 = vrot.lane.b32.xlu0 %v3061, 64
    %v3284 = vpop.permute.xlu0 %3283
    %3285 = vrot.lane.b32.xlu0 %v3066, 64
    %v3286 = vpop.permute.xlu0 %3285
    %3287 = vrot.lane.b32.xlu0 %v3071, 64
    %v3288 = vpop.permute.xlu0 %3287
    %v3295 = vsel %vm760, %v3271, 0
    %v3298 = vsel %vm760, %v3272, 0
    %v3301 = vsel %vm760, %v3273, 0
    %v3304 = vsel %vm760, %v3274, 0
    %v3307 = vsel %vm760, %v3275, 0
    %v3310 = vsel %vm760, %v3276, 0
    %v3312 = vsel %vm863, %v3288, 0
    %3314 = vmatprep.subr.mxu0 0.0
    %3315 = vmatpush1.msra.mxu0 0.0
    %3316 = vmatprep.subr.mxu0 0.0
    %3317 = vmatpush1.msra.mxu0 0.0
    %3318 = vmatprep.subr.mxu0 0.0
    %3319 = vmatpush1.msra.mxu0 0.0
    %3320 = vmatprep.subr.mxu0 0.0
    %3321 = vmatpush1.msra.mxu0 0.0
    %3322 = vmatprep.subr.mxu0 0.0
    %3323 = vmatpush1.msra.mxu0 0.0
    %3324 = vmatprep.subr.mxu0 0.0
    %3325 = vmatpush1.msra.mxu0 0.0
    %3326 = vmatprep.subr.mxu0 0.0
    %3327 = vmatpush1.msra.mxu0 0.0
    %3328 = vmatprep.subr.mxu0 0.0
    %3329 = vmatpush1.msra.mxu0 0.0
    %3330 = vmatprep.subr.mxu0 0.0
    %3331 = vmatpush1.msra.mxu0 0.0
    %3332 = vmatprep.subr.mxu0 0.0
    %3333 = vmatpush1.msra.mxu0 0.0
    %3334 = vmatprep.subr.mxu0 0.0
    %3335 = vmatpush1.msra.mxu0 %v3312
    %3336 = vmatprep.subr.mxu0 0.0
    %3337 = vmatpush1.msra.mxu0 %v3286
    %3338 = vmatprep.subr.mxu0 0.0
    %3339 = vmatpush1.msra.mxu0 %v3284
    %3340 = vmatprep.subr.mxu0 0.0
    %3341 = vmatpush1.msra.mxu0 %v3282
    %3342 = vmatprep.subr.mxu0 0.0
    %3343 = vmatpush1.msra.mxu0 %v3280
    %3344 = vmatprep.subr.mxu0 0.0
    %3345 = vmatpush1.msra.mxu0 %v3278
    %3346 = vmatprep.subr.mxu0 0.0
    %3347 = vmatpush2.msra.mxu0 0.0
    %3348 = vmatprep.subr.mxu0 0.0
    %3349 = vmatpush2.msra.mxu0 0.0
    %3350 = vmatprep.subr.mxu0 0.0
    %3351 = vmatpush2.msra.mxu0 0.0
    %3352 = vmatprep.subr.mxu0 0.0
    %3353 = vmatpush2.msra.mxu0 0.0
    %3354 = vmatprep.subr.mxu0 0.0
    %3355 = vmatpush2.msra.mxu0 0.0
    %3356 = vmatprep.subr.mxu0 0.0
    %3357 = vmatpush2.msra.mxu0 0.0
    %3358 = vmatprep.subr.mxu0 0.0
    %3359 = vmatpush2.msra.mxu0 0.0
    %3360 = vmatprep.subr.mxu0 0.0
    %3361 = vmatpush2.msra.mxu0 0.0
    %3362 = vmatprep.subr.mxu0 0.0
    %3363 = vmatpush2.msra.mxu0 0.0
    %3364 = vmatprep.subr.mxu0 0.0
    %3365 = vmatpush2.msra.mxu0 0.0
    %3366 = vmatprep.subr.mxu0 0.0
    %3367 = vmatpush2.msra.mxu0 0.0
    %3368 = vmatprep.subr.mxu0 0.0
    %3369 = vmatpush2.msra.mxu0 0.0
    %3370 = vmatprep.subr.mxu0 0.0
    %3371 = vmatpush2.msra.mxu0 0.0
    %3372 = vmatprep.subr.mxu0 0.0
    %3373 = vmatpush2.msra.mxu0 0.0
    %3374 = vmatprep.subr.mxu0 0.0
    %3375 = vmatpush2.msra.mxu0 0.0
    %3376 = vmatprep.subr.mxu0 0.0
    %3377 = vmatpush2.msra.mxu0 0.0
    %3378 = vmatprep.mubr.f32.mxu0 0.0
    %3379 = vmatmul.mubr.f32.gmra.mxu0 %v3295
    %v3380 = vpop.f32.mrf.mxu0
    %v3381 = vadd.f32 0.0, %v3380
    %v3382 = vpop.f32.mrf.mxu0
    %3383 = vmatprep.mubr.f32.mxu0 0.0
    %3384 = vmatmul.mubr.f32.gmra.mxu0 %v3298
    %v3385 = vpop.f32.mrf.mxu0
    %v3386 = vadd.f32 0.0, %v3385
    %v3387 = vpop.f32.mrf.mxu0
    %3388 = vmatprep.mubr.f32.mxu0 0.0
    %3389 = vmatmul.mubr.f32.gmra.mxu0 %v3301
    %v3390 = vpop.f32.mrf.mxu0
    %v3391 = vadd.f32 0.0, %v3390
    %v3392 = vpop.f32.mrf.mxu0
    %3393 = vmatprep.mubr.f32.mxu0 0.0
    %3394 = vmatmul.mubr.f32.gmra.mxu0 %v3304
    %v3395 = vpop.f32.mrf.mxu0
    %v3396 = vadd.f32 0.0, %v3395
    %v3397 = vpop.f32.mrf.mxu0
    %3398 = vmatprep.mubr.f32.mxu0 0.0
    %3399 = vmatmul.mubr.f32.gmra.mxu0 %v3307
    %v3400 = vpop.f32.mrf.mxu0
    %v3401 = vadd.f32 0.0, %v3400
    %v3402 = vpop.f32.mrf.mxu0
    %3403 = vmatprep.mubr.f32.mxu0 0.0
    %3404 = vmatmul.mubr.f32.gmra.mxu0 %v3310
    %v3405 = vpop.f32.mrf.mxu0
    %v3406 = vadd.f32 0.0, %v3405
    %v3407 = vpop.f32.mrf.mxu0
    %3408 = vdwg.mxu0
    %3409 = vrot.lane.b32.xlu0 %v3046, 120
    %v3410 = vpop.permute.xlu0 %3409
    %3411 = vrot.lane.b32.xlu0 %v3051, 120
    %v3412 = vpop.permute.xlu0 %3411
    %3413 = vrot.lane.b32.xlu0 %v3056, 120
    %v3414 = vpop.permute.xlu0 %3413
    %3415 = vrot.lane.b32.xlu0 %v3061, 120
    %v3416 = vpop.permute.xlu0 %3415
    %3417 = vrot.lane.b32.xlu0 %v3066, 120
    %v3418 = vpop.permute.xlu0 %3417
    %3419 = vrot.lane.b32.xlu0 %v3071, 120
    %v3420 = vpop.permute.xlu0 %3419
    %3421 = vrot.lane.b32.xlu0 %v3046, 88
    %v3422 = vpop.permute.xlu0 %3421
    %3423 = vrot.lane.b32.xlu0 %v3051, 88
    %v3424 = vpop.permute.xlu0 %3423
    %3425 = vrot.lane.b32.xlu0 %v3056, 88
    %v3426 = vpop.permute.xlu0 %3425
    %3427 = vrot.lane.b32.xlu0 %v3061, 88
    %v3428 = vpop.permute.xlu0 %3427
    %3429 = vrot.lane.b32.xlu0 %v3066, 88
    %v3430 = vpop.permute.xlu0 %3429
    %3431 = vrot.lane.b32.xlu0 %v3071, 88
    %v3432 = vpop.permute.xlu0 %3431
    %v3433 = vsel %vm640, %v3410, 0
    %v3435 = vsel %vm640, %v3412, 0
    %v3437 = vsel %vm640, %v3414, 0
    %v3439 = vsel %vm640, %v3416, 0
    %v3441 = vsel %vm640, %v3418, 0
    %v3443 = vsel %vm640, %v3420, 0
    %v3445 = vsel %vm640, %v3422, 0
    %v3447 = vsel %vm640, %v3424, 0
    %v3449 = vsel %vm640, %v3426, 0
    %v3451 = vsel %vm640, %v3428, 0
    %v3453 = vsel %vm640, %v3430, 0
    %v3455 = vsel %vm640, %v3432, 0
    %3457 = vmatprep.subr.mxu0 0.0
    %3458 = vmatpush1.xpose.msra.mxu0 0.0
    %3459 = vmatprep.subr.mxu0 0.0
    %3460 = vmatpush1.xpose.msra.mxu0 0.0
    %3461 = vmatprep.subr.mxu0 0.0
    %3462 = vmatpush1.xpose.msra.mxu0 0.0
    %3463 = vmatprep.subr.mxu0 0.0
    %3464 = vmatpush1.xpose.msra.mxu0 0.0
    %3465 = vmatprep.subr.mxu0 0.0
    %3466 = vmatpush1.xpose.msra.mxu0 0.0
    %3467 = vmatprep.subr.mxu0 0.0
    %3468 = vmatpush1.xpose.msra.mxu0 0.0
    %3469 = vmatprep.subr.mxu0 0.0
    %3470 = vmatpush1.xpose.msra.mxu0 0.0
    %3471 = vmatprep.subr.mxu0 0.0
    %3472 = vmatpush1.xpose.msra.mxu0 0.0
    %3473 = vmatprep.subr.mxu0 0.0
    %3474 = vmatpush1.xpose.msra.mxu0 0.0
    %3475 = vmatprep.subr.mxu0 0.0
    %3476 = vmatpush1.xpose.msra.mxu0 0.0
    %3477 = vmatprep.subr.mxu0 0.0
    %3478 = vmatpush1.xpose.msra.mxu0 %v3455
    %3479 = vmatprep.subr.mxu0 0.0
    %3480 = vmatpush1.xpose.msra.mxu0 %v3453
    %3481 = vmatprep.subr.mxu0 0.0
    %3482 = vmatpush1.xpose.msra.mxu0 %v3451
    %3483 = vmatprep.subr.mxu0 0.0
    %3484 = vmatpush1.xpose.msra.mxu0 %v3449
    %3485 = vmatprep.subr.mxu0 0.0
    %3486 = vmatpush1.xpose.msra.mxu0 %v3447
    %3487 = vmatprep.subr.mxu0 0.0
    %3488 = vmatpush1.xpose.msra.mxu0 %v3445
    %3489 = vmatprep.subr.mxu0 0.0
    %3490 = vmatpush2.xpose.msra.mxu0 0.0
    %3491 = vmatprep.subr.mxu0 0.0
    %3492 = vmatpush2.xpose.msra.mxu0 0.0
    %3493 = vmatprep.subr.mxu0 0.0
    %3494 = vmatpush2.xpose.msra.mxu0 0.0
    %3495 = vmatprep.subr.mxu0 0.0
    %3496 = vmatpush2.xpose.msra.mxu0 0.0
    %3497 = vmatprep.subr.mxu0 0.0
    %3498 = vmatpush2.xpose.msra.mxu0 0.0
    %3499 = vmatprep.subr.mxu0 0.0
    %3500 = vmatpush2.xpose.msra.mxu0 0.0
    %3501 = vmatprep.subr.mxu0 0.0
    %3502 = vmatpush2.xpose.msra.mxu0 0.0
    %3503 = vmatprep.subr.mxu0 0.0
    %3504 = vmatpush2.xpose.msra.mxu0 0.0
    %3505 = vmatprep.subr.mxu0 0.0
    %3506 = vmatpush2.xpose.msra.mxu0 0.0
    %3507 = vmatprep.subr.mxu0 0.0
    %3508 = vmatpush2.xpose.msra.mxu0 0.0
    %3509 = vmatprep.subr.mxu0 0.0
    %3510 = vmatpush2.xpose.msra.mxu0 0.0
    %3511 = vmatprep.subr.mxu0 0.0
    %3512 = vmatpush2.xpose.msra.mxu0 0.0
    %3513 = vmatprep.subr.mxu0 0.0
    %3514 = vmatpush2.xpose.msra.mxu0 0.0
    %3515 = vmatprep.subr.mxu0 0.0
    %3516 = vmatpush2.xpose.msra.mxu0 0.0
    %3517 = vmatprep.subr.mxu0 0.0
    %3518 = vmatpush2.xpose.msra.mxu0 0.0
    %3519 = vmatprep.subr.mxu0 0.0
    %3520 = vmatpush2.xpose.msra.mxu0 0.0
    %3521 = vmatprep.mubr.f32.mxu0 0.0
    %3522 = vmatmul.mubr.f32.gmra.mxu0 %v3433
    %v3523 = vpop.f32.mrf.mxu0
    %v3524 = vadd.f32 %v487, %v3523
    %v3525 = vpop.f32.mrf.mxu0
    %3526 = vmatprep.mubr.f32.mxu0 0.0
    %3527 = vmatmul.mubr.f32.gmra.mxu0 %v3435
    %v3528 = vpop.f32.mrf.mxu0
    %v3529 = vadd.f32 %v488, %v3528
    %v3530 = vpop.f32.mrf.mxu0
    %3531 = vmatprep.mubr.f32.mxu0 0.0
    %3532 = vmatmul.mubr.f32.gmra.mxu0 %v3437
    %v3533 = vpop.f32.mrf.mxu0
    %v3534 = vadd.f32 %v489, %v3533
    %v3535 = vpop.f32.mrf.mxu0
    %3536 = vmatprep.mubr.f32.mxu0 0.0
    %3537 = vmatmul.mubr.f32.gmra.mxu0 %v3439
    %v3538 = vpop.f32.mrf.mxu0
    %v3539 = vadd.f32 %v490, %v3538
    %v3540 = vpop.f32.mrf.mxu0
    %3541 = vmatprep.mubr.f32.mxu0 0.0
    %3542 = vmatmul.mubr.f32.gmra.mxu0 %v3441
    %v3543 = vpop.f32.mrf.mxu0
    %v3544 = vadd.f32 %v491, %v3543
    %v3545 = vpop.f32.mrf.mxu0
    %3546 = vmatprep.mubr.f32.mxu0 0.0
    %3547 = vmatmul.mubr.f32.gmra.mxu0 %v3443
    %v3548 = vpop.f32.mrf.mxu0
    %v3549 = vadd.f32 %v492, %v3548
    %v3550 = vpop.f32.mrf.mxu0
    %3551 = vdwg.mxu0
    %v3552 = vsel %vm760, %v3524, -inf
    %3553 = vmax.xlane.f32.xlu0 %v3552
    %v3554 = vpop.xlane.xlu0 %3553
    %v3555 = vsel %vm760, %v3529, -inf
    %3556 = vmax.xlane.f32.xlu0 %v3555
    %v3557 = vpop.xlane.xlu0 %3556
    %v3558 = vsel %vm760, %v3534, -inf
    %3559 = vmax.xlane.f32.xlu0 %v3558
    %v3560 = vpop.xlane.xlu0 %3559
    %v3561 = vsel %vm760, %v3539, -inf
    %3562 = vmax.xlane.f32.xlu0 %v3561
    %v3563 = vpop.xlane.xlu0 %3562
    %v3564 = vsel %vm760, %v3544, -inf
    %3565 = vmax.xlane.f32.xlu0 %v3564
    %v3566 = vpop.xlane.xlu0 %3565
    %v3567 = vsel %vm776, %v3549, -inf
    %3568 = vmax.xlane.f32.xlu0 %v3567
    %v3569 = vpop.xlane.xlu0 %3568
    %v3570 = vsub.f32 %v3524, %v3554
    %v3571 = vsub.f32 %v3529, %v3557
    %v3572 = vsub.f32 %v3534, %v3560
    %v3573 = vsub.f32 %v3539, %v3563
    %v3574 = vsub.f32 %v3544, %v3566
    %v3575 = vsub.f32 %v3549, %v3569
    %v3576 = vmul.f32 %v3570, 1.442695
    %v3577 = vpow.pop %v3576
    %v3578 = vmul.f32 %v3571, 1.442695
    %v3579 = vpow.pop %v3578
    %v3580 = vmul.f32 %v3572, 1.442695
    %v3581 = vpow.pop %v3580
    %v3582 = vmul.f32 %v3573, 1.442695
    %v3583 = vpow.pop %v3582
    %v3584 = vmul.f32 %v3574, 1.442695
    %v3585 = vpow.pop %v3584
    %v3586 = vmul.f32 %v3575, 1.442695
    %v3587 = vpow.pop %v3586
    %v3588 = vsel %vm760, %v3577, 0.0
    %3589 = vadd.xlane.f32.xlu0 %v3588
    %v3590 = vpop.xlane.xlu0 %3589
    %v3591 = vsel %vm760, %v3579, 0.0
    %3592 = vadd.xlane.f32.xlu0 %v3591
    %v3593 = vpop.xlane.xlu0 %3592
    %v3594 = vsel %vm760, %v3581, 0.0
    %3595 = vadd.xlane.f32.xlu0 %v3594
    %v3596 = vpop.xlane.xlu0 %3595
    %v3597 = vsel %vm760, %v3583, 0.0
    %3598 = vadd.xlane.f32.xlu0 %v3597
    %v3599 = vpop.xlane.xlu0 %3598
    %v3600 = vsel %vm760, %v3585, 0.0
    %3601 = vadd.xlane.f32.xlu0 %v3600
    %v3602 = vpop.xlane.xlu0 %3601
    %v3603 = vsel %vm776, %v3587, 0.0
    %3604 = vadd.xlane.f32.xlu0 %v3603
    %v3605 = vpop.xlane.xlu0 %3604
    %v3606 = vrcp.pop %v3590
    %v3607 = vrcp.pop %v3593
    %v3608 = vrcp.pop %v3596
    %v3609 = vrcp.pop %v3599
    %v3610 = vrcp.pop %v3602
    %v3611 = vrcp.pop %v3605
    %v3612 = vmul.f32 %v3577, %v3606
    %v3613 = vmul.f32 %v3579, %v3607
    %v3614 = vmul.f32 %v3581, %v3608
    %v3615 = vmul.f32 %v3583, %v3609
    %v3616 = vmul.f32 %v3585, %v3610
    %v3617 = vmul.f32 %v3587, %v3611
    %3618 = vrot.lane.b32.xlu0 %v3046, 56
    %v3619 = vpop.permute.xlu0 %3618
    %3620 = vrot.lane.b32.xlu0 %v3051, 56
    %v3621 = vpop.permute.xlu0 %3620
    %3622 = vrot.lane.b32.xlu0 %v3056, 56
    %v3623 = vpop.permute.xlu0 %3622
    %3624 = vrot.lane.b32.xlu0 %v3061, 56
    %v3625 = vpop.permute.xlu0 %3624
    %3626 = vrot.lane.b32.xlu0 %v3066, 56
    %v3627 = vpop.permute.xlu0 %3626
    %3628 = vrot.lane.b32.xlu0 %v3071, 56
    %v3629 = vpop.permute.xlu0 %3628
    %v3636 = vsel %vm760, %v3612, 0
    %v3639 = vsel %vm760, %v3613, 0
    %v3642 = vsel %vm760, %v3614, 0
    %v3645 = vsel %vm760, %v3615, 0
    %v3648 = vsel %vm760, %v3616, 0
    %v3651 = vsel %vm760, %v3617, 0
    %v3653 = vsel %vm863, %v3629, 0
    %3655 = vmatprep.subr.mxu0 0.0
    %3656 = vmatpush1.msra.mxu0 0.0
    %3657 = vmatprep.subr.mxu0 0.0
    %3658 = vmatpush1.msra.mxu0 0.0
    %3659 = vmatprep.subr.mxu0 0.0
    %3660 = vmatpush1.msra.mxu0 0.0
    %3661 = vmatprep.subr.mxu0 0.0
    %3662 = vmatpush1.msra.mxu0 0.0
    %3663 = vmatprep.subr.mxu0 0.0
    %3664 = vmatpush1.msra.mxu0 0.0
    %3665 = vmatprep.subr.mxu0 0.0
    %3666 = vmatpush1.msra.mxu0 0.0
    %3667 = vmatprep.subr.mxu0 0.0
    %3668 = vmatpush1.msra.mxu0 0.0
    %3669 = vmatprep.subr.mxu0 0.0
    %3670 = vmatpush1.msra.mxu0 0.0
    %3671 = vmatprep.subr.mxu0 0.0
    %3672 = vmatpush1.msra.mxu0 0.0
    %3673 = vmatprep.subr.mxu0 0.0
    %3674 = vmatpush1.msra.mxu0 0.0
    %3675 = vmatprep.subr.mxu0 0.0
    %3676 = vmatpush1.msra.mxu0 %v3653
    %3677 = vmatprep.subr.mxu0 0.0
    %3678 = vmatpush1.msra.mxu0 %v3627
    %3679 = vmatprep.subr.mxu0 0.0
    %3680 = vmatpush1.msra.mxu0 %v3625
    %3681 = vmatprep.subr.mxu0 0.0
    %3682 = vmatpush1.msra.mxu0 %v3623
    %3683 = vmatprep.subr.mxu0 0.0
    %3684 = vmatpush1.msra.mxu0 %v3621
    %3685 = vmatprep.subr.mxu0 0.0
    %3686 = vmatpush1.msra.mxu0 %v3619
    %3687 = vmatprep.subr.mxu0 0.0
    %3688 = vmatpush2.msra.mxu0 0.0
    %3689 = vmatprep.subr.mxu0 0.0
    %3690 = vmatpush2.msra.mxu0 0.0
    %3691 = vmatprep.subr.mxu0 0.0
    %3692 = vmatpush2.msra.mxu0 0.0
    %3693 = vmatprep.subr.mxu0 0.0
    %3694 = vmatpush2.msra.mxu0 0.0
    %3695 = vmatprep.subr.mxu0 0.0
    %3696 = vmatpush2.msra.mxu0 0.0
    %3697 = vmatprep.subr.mxu0 0.0
    %3698 = vmatpush2.msra.mxu0 0.0
    %3699 = vmatprep.subr.mxu0 0.0
    %3700 = vmatpush2.msra.mxu0 0.0
    %3701 = vmatprep.subr.mxu0 0.0
    %3702 = vmatpush2.msra.mxu0 0.0
    %3703 = vmatprep.subr.mxu0 0.0
    %3704 = vmatpush2.msra.mxu0 0.0
    %3705 = vmatprep.subr.mxu0 0.0
    %3706 = vmatpush2.msra.mxu0 0.0
    %3707 = vmatprep.subr.mxu0 0.0
    %3708 = vmatpush2.msra.mxu0 0.0
    %3709 = vmatprep.subr.mxu0 0.0
    %3710 = vmatpush2.msra.mxu0 0.0
    %3711 = vmatprep.subr.mxu0 0.0
    %3712 = vmatpush2.msra.mxu0 0.0
    %3713 = vmatprep.subr.mxu0 0.0
    %3714 = vmatpush2.msra.mxu0 0.0
    %3715 = vmatprep.subr.mxu0 0.0
    %3716 = vmatpush2.msra.mxu0 0.0
    %3717 = vmatprep.subr.mxu0 0.0
    %3718 = vmatpush2.msra.mxu0 0.0
    %3719 = vmatprep.mubr.f32.mxu0 0.0
    %3720 = vmatmul.mubr.f32.gmra.mxu0 %v3636
    %v3721 = vpop.f32.mrf.mxu0
    %v3722 = vadd.f32 0.0, %v3721
    %v3723 = vpop.f32.mrf.mxu0
    %3724 = vmatprep.mubr.f32.mxu0 0.0
    %3725 = vmatmul.mubr.f32.gmra.mxu0 %v3639
    %v3726 = vpop.f32.mrf.mxu0
    %v3727 = vadd.f32 0.0, %v3726
    %v3728 = vpop.f32.mrf.mxu0
    %3729 = vmatprep.mubr.f32.mxu0 0.0
    %3730 = vmatmul.mubr.f32.gmra.mxu0 %v3642
    %v3731 = vpop.f32.mrf.mxu0
    %v3732 = vadd.f32 0.0, %v3731
    %v3733 = vpop.f32.mrf.mxu0
    %3734 = vmatprep.mubr.f32.mxu0 0.0
    %3735 = vmatmul.mubr.f32.gmra.mxu0 %v3645
    %v3736 = vpop.f32.mrf.mxu0
    %v3737 = vadd.f32 0.0, %v3736
    %v3738 = vpop.f32.mrf.mxu0
    %3739 = vmatprep.mubr.f32.mxu0 0.0
    %3740 = vmatmul.mubr.f32.gmra.mxu0 %v3648
    %v3741 = vpop.f32.mrf.mxu0
    %v3742 = vadd.f32 0.0, %v3741
    %v3743 = vpop.f32.mrf.mxu0
    %3744 = vmatprep.mubr.f32.mxu0 0.0
    %3745 = vmatmul.mubr.f32.gmra.mxu0 %v3651
    %v3746 = vpop.f32.mrf.mxu0
    %v3747 = vadd.f32 0.0, %v3746
    %v3748 = vpop.f32.mrf.mxu0
    %3749 = vdwg.mxu0
    %v3751 = vsel %vm640, %v3722, 0
    %v3754 = vsel %vm640, %v3727, 0
    %v3757 = vsel %vm640, %v3732, 0
    %v3760 = vsel %vm640, %v3737, 0
    %v3763 = vsel %vm640, %v3742, 0
    %v3766 = vsel %vm640, %v3747, 0
    %3768 = vmatprep.subr.mxu0 0.0
    %3769 = vmatpush1.msra.mxu0 0.0
    %3770 = vmatprep.subr.mxu0 0.0
    %3771 = vmatpush1.msra.mxu0 0.0
    %3772 = vmatprep.subr.mxu0 0.0
    %3773 = vmatpush1.msra.mxu0 0.0
    %3774 = vmatprep.subr.mxu0 0.0
    %3775 = vmatpush1.msra.mxu0 0.0
    %3776 = vmatprep.subr.mxu0 0.0
    %3777 = vmatpush1.msra.mxu0 0.0
    %3778 = vmatprep.subr.mxu0 0.0
    %3779 = vmatpush1.msra.mxu0 0.0
    %3780 = vmatprep.subr.mxu0 0.0
    %3781 = vmatpush1.msra.mxu0 0.0
    %3782 = vmatprep.subr.mxu0 0.0
    %3783 = vmatpush1.msra.mxu0 0.0
    %3784 = vmatprep.subr.mxu0 0.0
    %3785 = vmatpush1.msra.mxu0 0.0
    %3786 = vmatprep.subr.mxu0 0.0
    %3787 = vmatpush1.msra.mxu0 0.0
    %3788 = vmatprep.subr.mxu0 0.0
    %3789 = vmatpush1.msra.mxu0 0.0
    %3790 = vmatprep.subr.mxu0 0.0
    %3791 = vmatpush1.msra.mxu0 0.0
    %3792 = vmatprep.subr.mxu0 0.0
    %3793 = vmatpush1.msra.mxu0 0.0
    %3794 = vmatprep.subr.mxu0 0.0
    %3795 = vmatpush1.msra.mxu0 0.0
    %3796 = vmatprep.subr.mxu0 0.0
    %3797 = vmatpush1.msra.mxu0 0.0
    %3798 = vmatprep.subr.mxu0 0.0
    %3799 = vmatpush1.msra.mxu0 %v2950
    %3800 = vmatprep.subr.mxu0 0.0
    %3801 = vmatpush2.msra.mxu0 0.0
    %3802 = vmatprep.subr.mxu0 0.0
    %3803 = vmatpush2.msra.mxu0 0.0
    %3804 = vmatprep.subr.mxu0 0.0
    %3805 = vmatpush2.msra.mxu0 0.0
    %3806 = vmatprep.subr.mxu0 0.0
    %3807 = vmatpush2.msra.mxu0 0.0
    %3808 = vmatprep.subr.mxu0 0.0
    %3809 = vmatpush2.msra.mxu0 0.0
    %3810 = vmatprep.subr.mxu0 0.0
    %3811 = vmatpush2.msra.mxu0 0.0
    %3812 = vmatprep.subr.mxu0 0.0
    %3813 = vmatpush2.msra.mxu0 0.0
    %3814 = vmatprep.subr.mxu0 0.0
    %3815 = vmatpush2.msra.mxu0 0.0
    %3816 = vmatprep.subr.mxu0 0.0
    %3817 = vmatpush2.msra.mxu0 0.0
    %3818 = vmatprep.subr.mxu0 0.0
    %3819 = vmatpush2.msra.mxu0 0.0
    %3820 = vmatprep.subr.mxu0 0.0
    %3821 = vmatpush2.msra.mxu0 0.0
    %3822 = vmatprep.subr.mxu0 0.0
    %3823 = vmatpush2.msra.mxu0 0.0
    %3824 = vmatprep.subr.mxu0 0.0
    %3825 = vmatpush2.msra.mxu0 0.0
    %3826 = vmatprep.subr.mxu0 0.0
    %3827 = vmatpush2.msra.mxu0 0.0
    %3828 = vmatprep.subr.mxu0 0.0
    %3829 = vmatpush2.msra.mxu0 0.0
    %3830 = vmatprep.subr.mxu0 0.0
    %3831 = vmatpush2.msra.mxu0 0.0
    %3832 = vmatprep.mubr.f32.mxu0 0.0
    %3833 = vmatmul.mubr.f32.gmra.mxu0 %v3751
    %v3834 = vpop.f32.mrf.mxu0
    %v3835 = vadd.f32 0.0, %v3834
    %v3836 = vpop.f32.mrf.mxu0
    %3837 = vmatprep.mubr.f32.mxu0 0.0
    %3838 = vmatmul.mubr.f32.gmra.mxu0 %v3754
    %v3839 = vpop.f32.mrf.mxu0
    %v3840 = vadd.f32 0.0, %v3839
    %v3841 = vpop.f32.mrf.mxu0
    %3842 = vmatprep.mubr.f32.mxu0 0.0
    %3843 = vmatmul.mubr.f32.gmra.mxu0 %v3757
    %v3844 = vpop.f32.mrf.mxu0
    %v3845 = vadd.f32 0.0, %v3844
    %v3846 = vpop.f32.mrf.mxu0
    %3847 = vmatprep.mubr.f32.mxu0 0.0
    %3848 = vmatmul.mubr.f32.gmra.mxu0 %v3760
    %v3849 = vpop.f32.mrf.mxu0
    %v3850 = vadd.f32 0.0, %v3849
    %v3851 = vpop.f32.mrf.mxu0
    %3852 = vmatprep.mubr.f32.mxu0 0.0
    %3853 = vmatmul.mubr.f32.gmra.mxu0 %v3763
    %v3854 = vpop.f32.mrf.mxu0
    %v3855 = vadd.f32 0.0, %v3854
    %v3856 = vpop.f32.mrf.mxu0
    %3857 = vmatprep.mubr.f32.mxu0 0.0
    %3858 = vmatmul.mubr.f32.gmra.mxu0 %v3766
    %v3859 = vpop.f32.mrf.mxu0
    %v3860 = vadd.f32 0.0, %v3859
    %v3861 = vpop.f32.mrf.mxu0
    %3862 = vdwg.mxu0
    %v3864 = vsel %vm640, %v3381, 0
    %v3867 = vsel %vm640, %v3386, 0
    %v3870 = vsel %vm640, %v3391, 0
    %v3873 = vsel %vm640, %v3396, 0
    %v3876 = vsel %vm640, %v3401, 0
    %v3879 = vsel %vm640, %v3406, 0
    %3881 = vmatprep.subr.mxu0 0.0
    %3882 = vmatpush1.msra.mxu0 0.0
    %3883 = vmatprep.subr.mxu0 0.0
    %3884 = vmatpush1.msra.mxu0 0.0
    %3885 = vmatprep.subr.mxu0 0.0
    %3886 = vmatpush1.msra.mxu0 0.0
    %3887 = vmatprep.subr.mxu0 0.0
    %3888 = vmatpush1.msra.mxu0 0.0
    %3889 = vmatprep.subr.mxu0 0.0
    %3890 = vmatpush1.msra.mxu0 0.0
    %3891 = vmatprep.subr.mxu0 0.0
    %3892 = vmatpush1.msra.mxu0 0.0
    %3893 = vmatprep.subr.mxu0 0.0
    %3894 = vmatpush1.msra.mxu0 0.0
    %3895 = vmatprep.subr.mxu0 0.0
    %3896 = vmatpush1.msra.mxu0 0.0
    %3897 = vmatprep.subr.mxu0 0.0
    %3898 = vmatpush1.msra.mxu0 0.0
    %3899 = vmatprep.subr.mxu0 0.0
    %3900 = vmatpush1.msra.mxu0 0.0
    %3901 = vmatprep.subr.mxu0 0.0
    %3902 = vmatpush1.msra.mxu0 0.0
    %3903 = vmatprep.subr.mxu0 0.0
    %3904 = vmatpush1.msra.mxu0 0.0
    %3905 = vmatprep.subr.mxu0 0.0
    %3906 = vmatpush1.msra.mxu0 0.0
    %3907 = vmatprep.subr.mxu0 0.0
    %3908 = vmatpush1.msra.mxu0 0.0
    %3909 = vmatprep.subr.mxu0 0.0
    %3910 = vmatpush1.msra.mxu0 0.0
    %3911 = vmatprep.subr.mxu0 0.0
    %3912 = vmatpush1.msra.mxu0 %v2949
    %3913 = vmatprep.subr.mxu0 0.0
    %3914 = vmatpush2.msra.mxu0 0.0
    %3915 = vmatprep.subr.mxu0 0.0
    %3916 = vmatpush2.msra.mxu0 0.0
    %3917 = vmatprep.subr.mxu0 0.0
    %3918 = vmatpush2.msra.mxu0 0.0
    %3919 = vmatprep.subr.mxu0 0.0
    %3920 = vmatpush2.msra.mxu0 0.0
    %3921 = vmatprep.subr.mxu0 0.0
    %3922 = vmatpush2.msra.mxu0 0.0
    %3923 = vmatprep.subr.mxu0 0.0
    %3924 = vmatpush2.msra.mxu0 0.0
    %3925 = vmatprep.subr.mxu0 0.0
    %3926 = vmatpush2.msra.mxu0 0.0
    %3927 = vmatprep.subr.mxu0 0.0
    %3928 = vmatpush2.msra.mxu0 0.0
    %3929 = vmatprep.subr.mxu0 0.0
    %3930 = vmatpush2.msra.mxu0 0.0
    %3931 = vmatprep.subr.mxu0 0.0
    %3932 = vmatpush2.msra.mxu0 0.0
    %3933 = vmatprep.subr.mxu0 0.0
    %3934 = vmatpush2.msra.mxu0 0.0
    %3935 = vmatprep.subr.mxu0 0.0
    %3936 = vmatpush2.msra.mxu0 0.0
    %3937 = vmatprep.subr.mxu0 0.0
    %3938 = vmatpush2.msra.mxu0 0.0
    %3939 = vmatprep.subr.mxu0 0.0
    %3940 = vmatpush2.msra.mxu0 0.0
    %3941 = vmatprep.subr.mxu0 0.0
    %3942 = vmatpush2.msra.mxu0 0.0
    %3943 = vmatprep.subr.mxu0 0.0
    %3944 = vmatpush2.msra.mxu0 0.0
    %3945 = vmatprep.mubr.f32.mxu0 0.0
    %3946 = vmatmul.mubr.f32.gmra.mxu0 %v3864
    %v3947 = vpop.f32.mrf.mxu0
    %v3948 = vadd.f32 %v3835, %v3947
    %v3949 = vpop.f32.mrf.mxu0
    %3950 = vmatprep.mubr.f32.mxu0 0.0
    %3951 = vmatmul.mubr.f32.gmra.mxu0 %v3867
    %v3952 = vpop.f32.mrf.mxu0
    %v3953 = vadd.f32 %v3840, %v3952
    %v3954 = vpop.f32.mrf.mxu0
    %3955 = vmatprep.mubr.f32.mxu0 0.0
    %3956 = vmatmul.mubr.f32.gmra.mxu0 %v3870
    %v3957 = vpop.f32.mrf.mxu0
    %v3958 = vadd.f32 %v3845, %v3957
    %v3959 = vpop.f32.mrf.mxu0
    %3960 = vmatprep.mubr.f32.mxu0 0.0
    %3961 = vmatmul.mubr.f32.gmra.mxu0 %v3873
    %v3962 = vpop.f32.mrf.mxu0
    %v3963 = vadd.f32 %v3850, %v3962
    %v3964 = vpop.f32.mrf.mxu0
    %3965 = vmatprep.mubr.f32.mxu0 0.0
    %3966 = vmatmul.mubr.f32.gmra.mxu0 %v3876
    %v3967 = vpop.f32.mrf.mxu0
    %v3968 = vadd.f32 %v3855, %v3967
    %v3969 = vpop.f32.mrf.mxu0
    %3970 = vmatprep.mubr.f32.mxu0 0.0
    %3971 = vmatmul.mubr.f32.gmra.mxu0 %v3879
    %v3972 = vpop.f32.mrf.mxu0
    %v3973 = vadd.f32 %v3860, %v3972
    %v3974 = vpop.f32.mrf.mxu0
    %3975 = vdwg.mxu0
    %3976 = vrot.lane.b32.xlu0 %v3046, 112
    %v3977 = vpop.permute.xlu0 %3976
    %3978 = vrot.lane.b32.xlu0 %v3051, 112
    %v3979 = vpop.permute.xlu0 %3978
    %3980 = vrot.lane.b32.xlu0 %v3056, 112
    %v3981 = vpop.permute.xlu0 %3980
    %3982 = vrot.lane.b32.xlu0 %v3061, 112
    %v3983 = vpop.permute.xlu0 %3982
    %3984 = vrot.lane.b32.xlu0 %v3066, 112
    %v3985 = vpop.permute.xlu0 %3984
    %3986 = vrot.lane.b32.xlu0 %v3071, 112
    %v3987 = vpop.permute.xlu0 %3986
    %3988 = vrot.lane.b32.xlu0 %v3046, 80
    %v3989 = vpop.permute.xlu0 %3988
    %3990 = vrot.lane.b32.xlu0 %v3051, 80
    %v3991 = vpop.permute.xlu0 %3990
    %3992 = vrot.lane.b32.xlu0 %v3056, 80
    %v3993 = vpop.permute.xlu0 %3992
    %3994 = vrot.lane.b32.xlu0 %v3061, 80
    %v3995 = vpop.permute.xlu0 %3994
    %3996 = vrot.lane.b32.xlu0 %v3066, 80
    %v3997 = vpop.permute.xlu0 %3996
    %3998 = vrot.lane.b32.xlu0 %v3071, 80
    %v3999 = vpop.permute.xlu0 %3998
    %v4000 = vsel %vm640, %v3977, 0
    %v4002 = vsel %vm640, %v3979, 0
    %v4004 = vsel %vm640, %v3981, 0
    %v4006 = vsel %vm640, %v3983, 0
    %v4008 = vsel %vm640, %v3985, 0
    %v4010 = vsel %vm640, %v3987, 0
    %v4012 = vsel %vm640, %v3989, 0
    %v4014 = vsel %vm640, %v3991, 0
    %v4016 = vsel %vm640, %v3993, 0
    %v4018 = vsel %vm640, %v3995, 0
    %v4020 = vsel %vm640, %v3997, 0
    %v4022 = vsel %vm640, %v3999, 0
    %4024 = vmatprep.subr.mxu0 0.0
    %4025 = vmatpush1.xpose.msra.mxu0 0.0
    %4026 = vmatprep.subr.mxu0 0.0
    %4027 = vmatpush1.xpose.msra.mxu0 0.0
    %4028 = vmatprep.subr.mxu0 0.0
    %4029 = vmatpush1.xpose.msra.mxu0 0.0
    %4030 = vmatprep.subr.mxu0 0.0
    %4031 = vmatpush1.xpose.msra.mxu0 0.0
    %4032 = vmatprep.subr.mxu0 0.0
    %4033 = vmatpush1.xpose.msra.mxu0 0.0
    %4034 = vmatprep.subr.mxu0 0.0
    %4035 = vmatpush1.xpose.msra.mxu0 0.0
    %4036 = vmatprep.subr.mxu0 0.0
    %4037 = vmatpush1.xpose.msra.mxu0 0.0
    %4038 = vmatprep.subr.mxu0 0.0
    %4039 = vmatpush1.xpose.msra.mxu0 0.0
    %4040 = vmatprep.subr.mxu0 0.0
    %4041 = vmatpush1.xpose.msra.mxu0 0.0
    %4042 = vmatprep.subr.mxu0 0.0
    %4043 = vmatpush1.xpose.msra.mxu0 0.0
    %4044 = vmatprep.subr.mxu0 0.0
    %4045 = vmatpush1.xpose.msra.mxu0 %v4022
    %4046 = vmatprep.subr.mxu0 0.0
    %4047 = vmatpush1.xpose.msra.mxu0 %v4020
    %4048 = vmatprep.subr.mxu0 0.0
    %4049 = vmatpush1.xpose.msra.mxu0 %v4018
    %4050 = vmatprep.subr.mxu0 0.0
    %4051 = vmatpush1.xpose.msra.mxu0 %v4016
    %4052 = vmatprep.subr.mxu0 0.0
    %4053 = vmatpush1.xpose.msra.mxu0 %v4014
    %4054 = vmatprep.subr.mxu0 0.0
    %4055 = vmatpush1.xpose.msra.mxu0 %v4012
    %4056 = vmatprep.subr.mxu0 0.0
    %4057 = vmatpush2.xpose.msra.mxu0 0.0
    %4058 = vmatprep.subr.mxu0 0.0
    %4059 = vmatpush2.xpose.msra.mxu0 0.0
    %4060 = vmatprep.subr.mxu0 0.0
    %4061 = vmatpush2.xpose.msra.mxu0 0.0
    %4062 = vmatprep.subr.mxu0 0.0
    %4063 = vmatpush2.xpose.msra.mxu0 0.0
    %4064 = vmatprep.subr.mxu0 0.0
    %4065 = vmatpush2.xpose.msra.mxu0 0.0
    %4066 = vmatprep.subr.mxu0 0.0
    %4067 = vmatpush2.xpose.msra.mxu0 0.0
    %4068 = vmatprep.subr.mxu0 0.0
    %4069 = vmatpush2.xpose.msra.mxu0 0.0
    %4070 = vmatprep.subr.mxu0 0.0
    %4071 = vmatpush2.xpose.msra.mxu0 0.0
    %4072 = vmatprep.subr.mxu0 0.0
    %4073 = vmatpush2.xpose.msra.mxu0 0.0
    %4074 = vmatprep.subr.mxu0 0.0
    %4075 = vmatpush2.xpose.msra.mxu0 0.0
    %4076 = vmatprep.subr.mxu0 0.0
    %4077 = vmatpush2.xpose.msra.mxu0 0.0
    %4078 = vmatprep.subr.mxu0 0.0
    %4079 = vmatpush2.xpose.msra.mxu0 0.0
    %4080 = vmatprep.subr.mxu0 0.0
    %4081 = vmatpush2.xpose.msra.mxu0 0.0
    %4082 = vmatprep.subr.mxu0 0.0
    %4083 = vmatpush2.xpose.msra.mxu0 0.0
    %4084 = vmatprep.subr.mxu0 0.0
    %4085 = vmatpush2.xpose.msra.mxu0 0.0
    %4086 = vmatprep.subr.mxu0 0.0
    %4087 = vmatpush2.xpose.msra.mxu0 0.0
    %4088 = vmatprep.mubr.f32.mxu0 0.0
    %4089 = vmatmul.mubr.f32.gmra.mxu0 %v4000
    %v4090 = vpop.f32.mrf.mxu0
    %v4091 = vadd.f32 %v487, %v4090
    %v4092 = vpop.f32.mrf.mxu0
    %4093 = vmatprep.mubr.f32.mxu0 0.0
    %4094 = vmatmul.mubr.f32.gmra.mxu0 %v4002
    %v4095 = vpop.f32.mrf.mxu0
    %v4096 = vadd.f32 %v488, %v4095
    %v4097 = vpop.f32.mrf.mxu0
    %4098 = vmatprep.mubr.f32.mxu0 0.0
    %4099 = vmatmul.mubr.f32.gmra.mxu0 %v4004
    %v4100 = vpop.f32.mrf.mxu0
    %v4101 = vadd.f32 %v489, %v4100
    %v4102 = vpop.f32.mrf.mxu0
    %4103 = vmatprep.mubr.f32.mxu0 0.0
    %4104 = vmatmul.mubr.f32.gmra.mxu0 %v4006
    %v4105 = vpop.f32.mrf.mxu0
    %v4106 = vadd.f32 %v490, %v4105
    %v4107 = vpop.f32.mrf.mxu0
    %4108 = vmatprep.mubr.f32.mxu0 0.0
    %4109 = vmatmul.mubr.f32.gmra.mxu0 %v4008
    %v4110 = vpop.f32.mrf.mxu0
    %v4111 = vadd.f32 %v491, %v4110
    %v4112 = vpop.f32.mrf.mxu0
    %4113 = vmatprep.mubr.f32.mxu0 0.0
    %4114 = vmatmul.mubr.f32.gmra.mxu0 %v4010
    %v4115 = vpop.f32.mrf.mxu0
    %v4116 = vadd.f32 %v492, %v4115
    %v4117 = vpop.f32.mrf.mxu0
    %4118 = vdwg.mxu0
    %v4119 = vsel %vm760, %v4091, -inf
    %4120 = vmax.xlane.f32.xlu0 %v4119
    %v4121 = vpop.xlane.xlu0 %4120
    %v4122 = vsel %vm760, %v4096, -inf
    %4123 = vmax.xlane.f32.xlu0 %v4122
    %v4124 = vpop.xlane.xlu0 %4123
    %v4125 = vsel %vm760, %v4101, -inf
    %4126 = vmax.xlane.f32.xlu0 %v4125
    %v4127 = vpop.xlane.xlu0 %4126
    %v4128 = vsel %vm760, %v4106, -inf
    %4129 = vmax.xlane.f32.xlu0 %v4128
    %v4130 = vpop.xlane.xlu0 %4129
    %v4131 = vsel %vm760, %v4111, -inf
    %4132 = vmax.xlane.f32.xlu0 %v4131
    %v4133 = vpop.xlane.xlu0 %4132
    %v4134 = vsel %vm776, %v4116, -inf
    %4135 = vmax.xlane.f32.xlu0 %v4134
    %v4136 = vpop.xlane.xlu0 %4135
    %v4137 = vsub.f32 %v4091, %v4121
    %v4138 = vsub.f32 %v4096, %v4124
    %v4139 = vsub.f32 %v4101, %v4127
    %v4140 = vsub.f32 %v4106, %v4130
    %v4141 = vsub.f32 %v4111, %v4133
    %v4142 = vsub.f32 %v4116, %v4136
    %v4143 = vmul.f32 %v4137, 1.442695
    %v4144 = vpow.pop %v4143
    %v4145 = vmul.f32 %v4138, 1.442695
    %v4146 = vpow.pop %v4145
    %v4147 = vmul.f32 %v4139, 1.442695
    %v4148 = vpow.pop %v4147
    %v4149 = vmul.f32 %v4140, 1.442695
    %v4150 = vpow.pop %v4149
    %v4151 = vmul.f32 %v4141, 1.442695
    %v4152 = vpow.pop %v4151
    %v4153 = vmul.f32 %v4142, 1.442695
    %v4154 = vpow.pop %v4153
    %v4155 = vsel %vm760, %v4144, 0.0
    %4156 = vadd.xlane.f32.xlu0 %v4155
    %v4157 = vpop.xlane.xlu0 %4156
    %v4158 = vsel %vm760, %v4146, 0.0
    %4159 = vadd.xlane.f32.xlu0 %v4158
    %v4160 = vpop.xlane.xlu0 %4159
    %v4161 = vsel %vm760, %v4148, 0.0
    %4162 = vadd.xlane.f32.xlu0 %v4161
    %v4163 = vpop.xlane.xlu0 %4162
    %v4164 = vsel %vm760, %v4150, 0.0
    %4165 = vadd.xlane.f32.xlu0 %v4164
    %v4166 = vpop.xlane.xlu0 %4165
    %v4167 = vsel %vm760, %v4152, 0.0
    %4168 = vadd.xlane.f32.xlu0 %v4167
    %v4169 = vpop.xlane.xlu0 %4168
    %v4170 = vsel %vm776, %v4154, 0.0
    %4171 = vadd.xlane.f32.xlu0 %v4170
    %v4172 = vpop.xlane.xlu0 %4171
    %v4173 = vrcp.pop %v4157
    %v4174 = vrcp.pop %v4160
    %v4175 = vrcp.pop %v4163
    %v4176 = vrcp.pop %v4166
    %v4177 = vrcp.pop %v4169
    %v4178 = vrcp.pop %v4172
    %v4179 = vmul.f32 %v4144, %v4173
    %v4180 = vmul.f32 %v4146, %v4174
    %v4181 = vmul.f32 %v4148, %v4175
    %v4182 = vmul.f32 %v4150, %v4176
    %v4183 = vmul.f32 %v4152, %v4177
    %v4184 = vmul.f32 %v4154, %v4178
    %4185 = vrot.lane.b32.xlu0 %v3046, 48
    %v4186 = vpop.permute.xlu0 %4185
    %4187 = vrot.lane.b32.xlu0 %v3051, 48
    %v4188 = vpop.permute.xlu0 %4187
    %4189 = vrot.lane.b32.xlu0 %v3056, 48
    %v4190 = vpop.permute.xlu0 %4189
    %4191 = vrot.lane.b32.xlu0 %v3061, 48
    %v4192 = vpop.permute.xlu0 %4191
    %4193 = vrot.lane.b32.xlu0 %v3066, 48
    %v4194 = vpop.permute.xlu0 %4193
    %4195 = vrot.lane.b32.xlu0 %v3071, 48
    %v4196 = vpop.permute.xlu0 %4195
    %v4203 = vsel %vm760, %v4179, 0
    %v4206 = vsel %vm760, %v4180, 0
    %v4209 = vsel %vm760, %v4181, 0
    %v4212 = vsel %vm760, %v4182, 0
    %v4215 = vsel %vm760, %v4183, 0
    %v4218 = vsel %vm760, %v4184, 0
    %v4220 = vsel %vm863, %v4196, 0
    %4222 = vmatprep.subr.mxu0 0.0
    %4223 = vmatpush1.msra.mxu0 0.0
    %4224 = vmatprep.subr.mxu0 0.0
    %4225 = vmatpush1.msra.mxu0 0.0
    %4226 = vmatprep.subr.mxu0 0.0
    %4227 = vmatpush1.msra.mxu0 0.0
    %4228 = vmatprep.subr.mxu0 0.0
    %4229 = vmatpush1.msra.mxu0 0.0
    %4230 = vmatprep.subr.mxu0 0.0
    %4231 = vmatpush1.msra.mxu0 0.0
    %4232 = vmatprep.subr.mxu0 0.0
    %4233 = vmatpush1.msra.mxu0 0.0
    %4234 = vmatprep.subr.mxu0 0.0
    %4235 = vmatpush1.msra.mxu0 0.0
    %4236 = vmatprep.subr.mxu0 0.0
    %4237 = vmatpush1.msra.mxu0 0.0
    %4238 = vmatprep.subr.mxu0 0.0
    %4239 = vmatpush1.msra.mxu0 0.0
    %4240 = vmatprep.subr.mxu0 0.0
    %4241 = vmatpush1.msra.mxu0 0.0
    %4242 = vmatprep.subr.mxu0 0.0
    %4243 = vmatpush1.msra.mxu0 %v4220
    %4244 = vmatprep.subr.mxu0 0.0
    %4245 = vmatpush1.msra.mxu0 %v4194
    %4246 = vmatprep.subr.mxu0 0.0
    %4247 = vmatpush1.msra.mxu0 %v4192
    %4248 = vmatprep.subr.mxu0 0.0
    %4249 = vmatpush1.msra.mxu0 %v4190
    %4250 = vmatprep.subr.mxu0 0.0
    %4251 = vmatpush1.msra.mxu0 %v4188
    %4252 = vmatprep.subr.mxu0 0.0
    %4253 = vmatpush1.msra.mxu0 %v4186
    %4254 = vmatprep.subr.mxu0 0.0
    %4255 = vmatpush2.msra.mxu0 0.0
    %4256 = vmatprep.subr.mxu0 0.0
    %4257 = vmatpush2.msra.mxu0 0.0
    %4258 = vmatprep.subr.mxu0 0.0
    %4259 = vmatpush2.msra.mxu0 0.0
    %4260 = vmatprep.subr.mxu0 0.0
    %4261 = vmatpush2.msra.mxu0 0.0
    %4262 = vmatprep.subr.mxu0 0.0
    %4263 = vmatpush2.msra.mxu0 0.0
    %4264 = vmatprep.subr.mxu0 0.0
    %4265 = vmatpush2.msra.mxu0 0.0
    %4266 = vmatprep.subr.mxu0 0.0
    %4267 = vmatpush2.msra.mxu0 0.0
    %4268 = vmatprep.subr.mxu0 0.0
    %4269 = vmatpush2.msra.mxu0 0.0
    %4270 = vmatprep.subr.mxu0 0.0
    %4271 = vmatpush2.msra.mxu0 0.0
    %4272 = vmatprep.subr.mxu0 0.0
    %4273 = vmatpush2.msra.mxu0 0.0
    %4274 = vmatprep.subr.mxu0 0.0
    %4275 = vmatpush2.msra.mxu0 0.0
    %4276 = vmatprep.subr.mxu0 0.0
    %4277 = vmatpush2.msra.mxu0 0.0
    %4278 = vmatprep.subr.mxu0 0.0
    %4279 = vmatpush2.msra.mxu0 0.0
    %4280 = vmatprep.subr.mxu0 0.0
    %4281 = vmatpush2.msra.mxu0 0.0
    %4282 = vmatprep.subr.mxu0 0.0
    %4283 = vmatpush2.msra.mxu0 0.0
    %4284 = vmatprep.subr.mxu0 0.0
    %4285 = vmatpush2.msra.mxu0 0.0
    %4286 = vmatprep.mubr.f32.mxu0 0.0
    %4287 = vmatmul.mubr.f32.gmra.mxu0 %v4203
    %v4288 = vpop.f32.mrf.mxu0
    %v4289 = vadd.f32 0.0, %v4288
    %v4290 = vpop.f32.mrf.mxu0
    %4291 = vmatprep.mubr.f32.mxu0 0.0
    %4292 = vmatmul.mubr.f32.gmra.mxu0 %v4206
    %v4293 = vpop.f32.mrf.mxu0
    %v4294 = vadd.f32 0.0, %v4293
    %v4295 = vpop.f32.mrf.mxu0
    %4296 = vmatprep.mubr.f32.mxu0 0.0
    %4297 = vmatmul.mubr.f32.gmra.mxu0 %v4209
    %v4298 = vpop.f32.mrf.mxu0
    %v4299 = vadd.f32 0.0, %v4298
    %v4300 = vpop.f32.mrf.mxu0
    %4301 = vmatprep.mubr.f32.mxu0 0.0
    %4302 = vmatmul.mubr.f32.gmra.mxu0 %v4212
    %v4303 = vpop.f32.mrf.mxu0
    %v4304 = vadd.f32 0.0, %v4303
    %v4305 = vpop.f32.mrf.mxu0
    %4306 = vmatprep.mubr.f32.mxu0 0.0
    %4307 = vmatmul.mubr.f32.gmra.mxu0 %v4215
    %v4308 = vpop.f32.mrf.mxu0
    %v4309 = vadd.f32 0.0, %v4308
    %v4310 = vpop.f32.mrf.mxu0
    %4311 = vmatprep.mubr.f32.mxu0 0.0
    %4312 = vmatmul.mubr.f32.gmra.mxu0 %v4218
    %v4313 = vpop.f32.mrf.mxu0
    %v4314 = vadd.f32 0.0, %v4313
    %v4315 = vpop.f32.mrf.mxu0
    %4316 = vdwg.mxu0
    %v4318 = vsel %vm640, %v4289, 0
    %v4321 = vsel %vm640, %v4294, 0
    %v4324 = vsel %vm640, %v4299, 0
    %v4327 = vsel %vm640, %v4304, 0
    %v4330 = vsel %vm640, %v4309, 0
    %v4333 = vsel %vm640, %v4314, 0
    %4335 = vmatprep.subr.mxu0 0.0
    %4336 = vmatpush1.msra.mxu0 0.0
    %4337 = vmatprep.subr.mxu0 0.0
    %4338 = vmatpush1.msra.mxu0 0.0
    %4339 = vmatprep.subr.mxu0 0.0
    %4340 = vmatpush1.msra.mxu0 0.0
    %4341 = vmatprep.subr.mxu0 0.0
    %4342 = vmatpush1.msra.mxu0 0.0
    %4343 = vmatprep.subr.mxu0 0.0
    %4344 = vmatpush1.msra.mxu0 0.0
    %4345 = vmatprep.subr.mxu0 0.0
    %4346 = vmatpush1.msra.mxu0 0.0
    %4347 = vmatprep.subr.mxu0 0.0
    %4348 = vmatpush1.msra.mxu0 0.0
    %4349 = vmatprep.subr.mxu0 0.0
    %4350 = vmatpush1.msra.mxu0 0.0
    %4351 = vmatprep.subr.mxu0 0.0
    %4352 = vmatpush1.msra.mxu0 0.0
    %4353 = vmatprep.subr.mxu0 0.0
    %4354 = vmatpush1.msra.mxu0 0.0
    %4355 = vmatprep.subr.mxu0 0.0
    %4356 = vmatpush1.msra.mxu0 0.0
    %4357 = vmatprep.subr.mxu0 0.0
    %4358 = vmatpush1.msra.mxu0 0.0
    %4359 = vmatprep.subr.mxu0 0.0
    %4360 = vmatpush1.msra.mxu0 0.0
    %4361 = vmatprep.subr.mxu0 0.0
    %4362 = vmatpush1.msra.mxu0 0.0
    %4363 = vmatprep.subr.mxu0 0.0
    %4364 = vmatpush1.msra.mxu0 0.0
    %4365 = vmatprep.subr.mxu0 0.0
    %4366 = vmatpush1.msra.mxu0 %v2951
    %4367 = vmatprep.subr.mxu0 0.0
    %4368 = vmatpush2.msra.mxu0 0.0
    %4369 = vmatprep.subr.mxu0 0.0
    %4370 = vmatpush2.msra.mxu0 0.0
    %4371 = vmatprep.subr.mxu0 0.0
    %4372 = vmatpush2.msra.mxu0 0.0
    %4373 = vmatprep.subr.mxu0 0.0
    %4374 = vmatpush2.msra.mxu0 0.0
    %4375 = vmatprep.subr.mxu0 0.0
    %4376 = vmatpush2.msra.mxu0 0.0
    %4377 = vmatprep.subr.mxu0 0.0
    %4378 = vmatpush2.msra.mxu0 0.0
    %4379 = vmatprep.subr.mxu0 0.0
    %4380 = vmatpush2.msra.mxu0 0.0
    %4381 = vmatprep.subr.mxu0 0.0
    %4382 = vmatpush2.msra.mxu0 0.0
    %4383 = vmatprep.subr.mxu0 0.0
    %4384 = vmatpush2.msra.mxu0 0.0
    %4385 = vmatprep.subr.mxu0 0.0
    %4386 = vmatpush2.msra.mxu0 0.0
    %4387 = vmatprep.subr.mxu0 0.0
    %4388 = vmatpush2.msra.mxu0 0.0
    %4389 = vmatprep.subr.mxu0 0.0
    %4390 = vmatpush2.msra.mxu0 0.0
    %4391 = vmatprep.subr.mxu0 0.0
    %4392 = vmatpush2.msra.mxu0 0.0
    %4393 = vmatprep.subr.mxu0 0.0
    %4394 = vmatpush2.msra.mxu0 0.0
    %4395 = vmatprep.subr.mxu0 0.0
    %4396 = vmatpush2.msra.mxu0 0.0
    %4397 = vmatprep.subr.mxu0 0.0
    %4398 = vmatpush2.msra.mxu0 0.0
    %4399 = vmatprep.mubr.f32.mxu0 0.0
    %4400 = vmatmul.mubr.f32.gmra.mxu0 %v4318
    %v4401 = vpop.f32.mrf.mxu0
    %v4402 = vadd.f32 0.0, %v4401
    %v4403 = vpop.f32.mrf.mxu0
    %4404 = vmatprep.mubr.f32.mxu0 0.0
    %4405 = vmatmul.mubr.f32.gmra.mxu0 %v4321
    %v4406 = vpop.f32.mrf.mxu0
    %v4407 = vadd.f32 0.0, %v4406
    %v4408 = vpop.f32.mrf.mxu0
    %4409 = vmatprep.mubr.f32.mxu0 0.0
    %4410 = vmatmul.mubr.f32.gmra.mxu0 %v4324
    %v4411 = vpop.f32.mrf.mxu0
    %v4412 = vadd.f32 0.0, %v4411
    %v4413 = vpop.f32.mrf.mxu0
    %4414 = vmatprep.mubr.f32.mxu0 0.0
    %4415 = vmatmul.mubr.f32.gmra.mxu0 %v4327
    %v4416 = vpop.f32.mrf.mxu0
    %v4417 = vadd.f32 0.0, %v4416
    %v4418 = vpop.f32.mrf.mxu0
    %4419 = vmatprep.mubr.f32.mxu0 0.0
    %4420 = vmatmul.mubr.f32.gmra.mxu0 %v4330
    %v4421 = vpop.f32.mrf.mxu0
    %v4422 = vadd.f32 0.0, %v4421
    %v4423 = vpop.f32.mrf.mxu0
    %4424 = vmatprep.mubr.f32.mxu0 0.0
    %4425 = vmatmul.mubr.f32.gmra.mxu0 %v4333
    %v4426 = vpop.f32.mrf.mxu0
    %v4427 = vadd.f32 0.0, %v4426
    %v4428 = vpop.f32.mrf.mxu0
    %4429 = vdwg.mxu0
    %v4430 = vadd.f32 %v3948, %v4402
    %v4431 = vadd.f32 %v3953, %v4407
    %v4432 = vadd.f32 %v3958, %v4412
    %v4433 = vadd.f32 %v3963, %v4417
    %v4434 = vadd.f32 %v3968, %v4422
    %v4435 = vadd.f32 %v3973, %v4427
    %4436 = vrot.lane.b32.xlu0 %v3046, 104
    %v4437 = vpop.permute.xlu0 %4436
    %4438 = vrot.lane.b32.xlu0 %v3051, 104
    %v4439 = vpop.permute.xlu0 %4438
    %4440 = vrot.lane.b32.xlu0 %v3056, 104
    %v4441 = vpop.permute.xlu0 %4440
    %4442 = vrot.lane.b32.xlu0 %v3061, 104
    %v4443 = vpop.permute.xlu0 %4442
    %4444 = vrot.lane.b32.xlu0 %v3066, 104
    %v4445 = vpop.permute.xlu0 %4444
    %4446 = vrot.lane.b32.xlu0 %v3071, 104
    %v4447 = vpop.permute.xlu0 %4446
    %4448 = vrot.lane.b32.xlu0 %v3046, 72
    %v4449 = vpop.permute.xlu0 %4448
    %4450 = vrot.lane.b32.xlu0 %v3051, 72
    %v4451 = vpop.permute.xlu0 %4450
    %4452 = vrot.lane.b32.xlu0 %v3056, 72
    %v4453 = vpop.permute.xlu0 %4452
    %4454 = vrot.lane.b32.xlu0 %v3061, 72
    %v4455 = vpop.permute.xlu0 %4454
    %4456 = vrot.lane.b32.xlu0 %v3066, 72
    %v4457 = vpop.permute.xlu0 %4456
    %4458 = vrot.lane.b32.xlu0 %v3071, 72
    %v4459 = vpop.permute.xlu0 %4458
    %v4460 = vsel %vm640, %v4437, 0
    %v4462 = vsel %vm640, %v4439, 0
    %v4464 = vsel %vm640, %v4441, 0
    %v4466 = vsel %vm640, %v4443, 0
    %v4468 = vsel %vm640, %v4445, 0
    %v4470 = vsel %vm640, %v4447, 0
    %v4472 = vsel %vm640, %v4449, 0
    %v4474 = vsel %vm640, %v4451, 0
    %v4476 = vsel %vm640, %v4453, 0
    %v4478 = vsel %vm640, %v4455, 0
    %v4480 = vsel %vm640, %v4457, 0
    %v4482 = vsel %vm640, %v4459, 0
    %4484 = vmatprep.subr.mxu0 0.0
    %4485 = vmatpush1.xpose.msra.mxu0 0.0
    %4486 = vmatprep.subr.mxu0 0.0
    %4487 = vmatpush1.xpose.msra.mxu0 0.0
    %4488 = vmatprep.subr.mxu0 0.0
    %4489 = vmatpush1.xpose.msra.mxu0 0.0
    %4490 = vmatprep.subr.mxu0 0.0
    %4491 = vmatpush1.xpose.msra.mxu0 0.0
    %4492 = vmatprep.subr.mxu0 0.0
    %4493 = vmatpush1.xpose.msra.mxu0 0.0
    %4494 = vmatprep.subr.mxu0 0.0
    %4495 = vmatpush1.xpose.msra.mxu0 0.0
    %4496 = vmatprep.subr.mxu0 0.0
    %4497 = vmatpush1.xpose.msra.mxu0 0.0
    %4498 = vmatprep.subr.mxu0 0.0
    %4499 = vmatpush1.xpose.msra.mxu0 0.0
    %4500 = vmatprep.subr.mxu0 0.0
    %4501 = vmatpush1.xpose.msra.mxu0 0.0
    %4502 = vmatprep.subr.mxu0 0.0
    %4503 = vmatpush1.xpose.msra.mxu0 0.0
    %4504 = vmatprep.subr.mxu0 0.0
    %4505 = vmatpush1.xpose.msra.mxu0 %v4482
    %4506 = vmatprep.subr.mxu0 0.0
    %4507 = vmatpush1.xpose.msra.mxu0 %v4480
    %4508 = vmatprep.subr.mxu0 0.0
    %4509 = vmatpush1.xpose.msra.mxu0 %v4478
    %4510 = vmatprep.subr.mxu0 0.0
    %4511 = vmatpush1.xpose.msra.mxu0 %v4476
    %4512 = vmatprep.subr.mxu0 0.0
    %4513 = vmatpush1.xpose.msra.mxu0 %v4474
    %4514 = vmatprep.subr.mxu0 0.0
    %4515 = vmatpush1.xpose.msra.mxu0 %v4472
    %4516 = vmatprep.subr.mxu0 0.0
    %4517 = vmatpush2.xpose.msra.mxu0 0.0
    %4518 = vmatprep.subr.mxu0 0.0
    %4519 = vmatpush2.xpose.msra.mxu0 0.0
    %4520 = vmatprep.subr.mxu0 0.0
    %4521 = vmatpush2.xpose.msra.mxu0 0.0
    %4522 = vmatprep.subr.mxu0 0.0
    %4523 = vmatpush2.xpose.msra.mxu0 0.0
    %4524 = vmatprep.subr.mxu0 0.0
    %4525 = vmatpush2.xpose.msra.mxu0 0.0
    %4526 = vmatprep.subr.mxu0 0.0
    %4527 = vmatpush2.xpose.msra.mxu0 0.0
    %4528 = vmatprep.subr.mxu0 0.0
    %4529 = vmatpush2.xpose.msra.mxu0 0.0
    %4530 = vmatprep.subr.mxu0 0.0
    %4531 = vmatpush2.xpose.msra.mxu0 0.0
    %4532 = vmatprep.subr.mxu0 0.0
    %4533 = vmatpush2.xpose.msra.mxu0 0.0
    %4534 = vmatprep.subr.mxu0 0.0
    %4535 = vmatpush2.xpose.msra.mxu0 0.0
    %4536 = vmatprep.subr.mxu0 0.0
    %4537 = vmatpush2.xpose.msra.mxu0 0.0
    %4538 = vmatprep.subr.mxu0 0.0
    %4539 = vmatpush2.xpose.msra.mxu0 0.0
    %4540 = vmatprep.subr.mxu0 0.0
    %4541 = vmatpush2.xpose.msra.mxu0 0.0
    %4542 = vmatprep.subr.mxu0 0.0
    %4543 = vmatpush2.xpose.msra.mxu0 0.0
    %4544 = vmatprep.subr.mxu0 0.0
    %4545 = vmatpush2.xpose.msra.mxu0 0.0
    %4546 = vmatprep.subr.mxu0 0.0
    %4547 = vmatpush2.xpose.msra.mxu0 0.0
    %4548 = vmatprep.mubr.f32.mxu0 0.0
    %4549 = vmatmul.mubr.f32.gmra.mxu0 %v4460
    %v4550 = vpop.f32.mrf.mxu0
    %v4551 = vadd.f32 %v487, %v4550
    %v4552 = vpop.f32.mrf.mxu0
    %4553 = vmatprep.mubr.f32.mxu0 0.0
    %4554 = vmatmul.mubr.f32.gmra.mxu0 %v4462
    %v4555 = vpop.f32.mrf.mxu0
    %v4556 = vadd.f32 %v488, %v4555
    %v4557 = vpop.f32.mrf.mxu0
    %4558 = vmatprep.mubr.f32.mxu0 0.0
    %4559 = vmatmul.mubr.f32.gmra.mxu0 %v4464
    %v4560 = vpop.f32.mrf.mxu0
    %v4561 = vadd.f32 %v489, %v4560
    %v4562 = vpop.f32.mrf.mxu0
    %4563 = vmatprep.mubr.f32.mxu0 0.0
    %4564 = vmatmul.mubr.f32.gmra.mxu0 %v4466
    %v4565 = vpop.f32.mrf.mxu0
    %v4566 = vadd.f32 %v490, %v4565
    %v4567 = vpop.f32.mrf.mxu0
    %4568 = vmatprep.mubr.f32.mxu0 0.0
    %4569 = vmatmul.mubr.f32.gmra.mxu0 %v4468
    %v4570 = vpop.f32.mrf.mxu0
    %v4571 = vadd.f32 %v491, %v4570
    %v4572 = vpop.f32.mrf.mxu0
    %4573 = vmatprep.mubr.f32.mxu0 0.0
    %4574 = vmatmul.mubr.f32.gmra.mxu0 %v4470
    %v4575 = vpop.f32.mrf.mxu0
    %v4576 = vadd.f32 %v492, %v4575
    %v4577 = vpop.f32.mrf.mxu0
    %4578 = vdwg.mxu0
    %v4579 = vsel %vm760, %v4551, -inf
    %4580 = vmax.xlane.f32.xlu0 %v4579
    %v4581 = vpop.xlane.xlu0 %4580
    %v4582 = vsel %vm760, %v4556, -inf
    %4583 = vmax.xlane.f32.xlu0 %v4582
    %v4584 = vpop.xlane.xlu0 %4583
    %v4585 = vsel %vm760, %v4561, -inf
    %4586 = vmax.xlane.f32.xlu0 %v4585
    %v4587 = vpop.xlane.xlu0 %4586
    %v4588 = vsel %vm760, %v4566, -inf
    %4589 = vmax.xlane.f32.xlu0 %v4588
    %v4590 = vpop.xlane.xlu0 %4589
    %v4591 = vsel %vm760, %v4571, -inf
    %4592 = vmax.xlane.f32.xlu0 %v4591
    %v4593 = vpop.xlane.xlu0 %4592
    %v4594 = vsel %vm776, %v4576, -inf
    %4595 = vmax.xlane.f32.xlu0 %v4594
    %v4596 = vpop.xlane.xlu0 %4595
    %v4597 = vsub.f32 %v4551, %v4581
    %v4598 = vsub.f32 %v4556, %v4584
    %v4599 = vsub.f32 %v4561, %v4587
    %v4600 = vsub.f32 %v4566, %v4590
    %v4601 = vsub.f32 %v4571, %v4593
    %v4602 = vsub.f32 %v4576, %v4596
    %v4603 = vmul.f32 %v4597, 1.442695
    %v4604 = vpow.pop %v4603
    %v4605 = vmul.f32 %v4598, 1.442695
    %v4606 = vpow.pop %v4605
    %v4607 = vmul.f32 %v4599, 1.442695
    %v4608 = vpow.pop %v4607
    %v4609 = vmul.f32 %v4600, 1.442695
    %v4610 = vpow.pop %v4609
    %v4611 = vmul.f32 %v4601, 1.442695
    %v4612 = vpow.pop %v4611
    %v4613 = vmul.f32 %v4602, 1.442695
    %v4614 = vpow.pop %v4613
    %v4615 = vsel %vm760, %v4604, 0.0
    %4616 = vadd.xlane.f32.xlu0 %v4615
    %v4617 = vpop.xlane.xlu0 %4616
    %v4618 = vsel %vm760, %v4606, 0.0
    %4619 = vadd.xlane.f32.xlu0 %v4618
    %v4620 = vpop.xlane.xlu0 %4619
    %v4621 = vsel %vm760, %v4608, 0.0
    %4622 = vadd.xlane.f32.xlu0 %v4621
    %v4623 = vpop.xlane.xlu0 %4622
    %v4624 = vsel %vm760, %v4610, 0.0
    %4625 = vadd.xlane.f32.xlu0 %v4624
    %v4626 = vpop.xlane.xlu0 %4625
    %v4627 = vsel %vm760, %v4612, 0.0
    %4628 = vadd.xlane.f32.xlu0 %v4627
    %v4629 = vpop.xlane.xlu0 %4628
    %v4630 = vsel %vm776, %v4614, 0.0
    %4631 = vadd.xlane.f32.xlu0 %v4630
    %v4632 = vpop.xlane.xlu0 %4631
    %v4633 = vrcp.pop %v4617
    %v4634 = vrcp.pop %v4620
    %v4635 = vrcp.pop %v4623
    %v4636 = vrcp.pop %v4626
    %v4637 = vrcp.pop %v4629
    %v4638 = vrcp.pop %v4632
    %v4639 = vmul.f32 %v4604, %v4633
    %v4640 = vmul.f32 %v4606, %v4634
    %v4641 = vmul.f32 %v4608, %v4635
    %v4642 = vmul.f32 %v4610, %v4636
    %v4643 = vmul.f32 %v4612, %v4637
    %v4644 = vmul.f32 %v4614, %v4638
    %4645 = vrot.lane.b32.xlu0 %v3046, 40
    %v4646 = vpop.permute.xlu0 %4645
    %4647 = vrot.lane.b32.xlu0 %v3051, 40
    %v4648 = vpop.permute.xlu0 %4647
    %4649 = vrot.lane.b32.xlu0 %v3056, 40
    %v4650 = vpop.permute.xlu0 %4649
    %4651 = vrot.lane.b32.xlu0 %v3061, 40
    %v4652 = vpop.permute.xlu0 %4651
    %4653 = vrot.lane.b32.xlu0 %v3066, 40
    %v4654 = vpop.permute.xlu0 %4653
    %4655 = vrot.lane.b32.xlu0 %v3071, 40
    %v4656 = vpop.permute.xlu0 %4655
    %v4663 = vsel %vm760, %v4639, 0
    %v4666 = vsel %vm760, %v4640, 0
    %v4669 = vsel %vm760, %v4641, 0
    %v4672 = vsel %vm760, %v4642, 0
    %v4675 = vsel %vm760, %v4643, 0
    %v4678 = vsel %vm760, %v4644, 0
    %v4680 = vsel %vm863, %v4656, 0
    %4682 = vmatprep.subr.mxu0 0.0
    %4683 = vmatpush1.msra.mxu0 0.0
    %4684 = vmatprep.subr.mxu0 0.0
    %4685 = vmatpush1.msra.mxu0 0.0
    %4686 = vmatprep.subr.mxu0 0.0
    %4687 = vmatpush1.msra.mxu0 0.0
    %4688 = vmatprep.subr.mxu0 0.0
    %4689 = vmatpush1.msra.mxu0 0.0
    %4690 = vmatprep.subr.mxu0 0.0
    %4691 = vmatpush1.msra.mxu0 0.0
    %4692 = vmatprep.subr.mxu0 0.0
    %4693 = vmatpush1.msra.mxu0 0.0
    %4694 = vmatprep.subr.mxu0 0.0
    %4695 = vmatpush1.msra.mxu0 0.0
    %4696 = vmatprep.subr.mxu0 0.0
    %4697 = vmatpush1.msra.mxu0 0.0
    %4698 = vmatprep.subr.mxu0 0.0
    %4699 = vmatpush1.msra.mxu0 0.0
    %4700 = vmatprep.subr.mxu0 0.0
    %4701 = vmatpush1.msra.mxu0 0.0
    %4702 = vmatprep.subr.mxu0 0.0
    %4703 = vmatpush1.msra.mxu0 %v4680
    %4704 = vmatprep.subr.mxu0 0.0
    %4705 = vmatpush1.msra.mxu0 %v4654
    %4706 = vmatprep.subr.mxu0 0.0
    %4707 = vmatpush1.msra.mxu0 %v4652
    %4708 = vmatprep.subr.mxu0 0.0
    %4709 = vmatpush1.msra.mxu0 %v4650
    %4710 = vmatprep.subr.mxu0 0.0
    %4711 = vmatpush1.msra.mxu0 %v4648
    %4712 = vmatprep.subr.mxu0 0.0
    %4713 = vmatpush1.msra.mxu0 %v4646
    %4714 = vmatprep.subr.mxu0 0.0
    %4715 = vmatpush2.msra.mxu0 0.0
    %4716 = vmatprep.subr.mxu0 0.0
    %4717 = vmatpush2.msra.mxu0 0.0
    %4718 = vmatprep.subr.mxu0 0.0
    %4719 = vmatpush2.msra.mxu0 0.0
    %4720 = vmatprep.subr.mxu0 0.0
    %4721 = vmatpush2.msra.mxu0 0.0
    %4722 = vmatprep.subr.mxu0 0.0
    %4723 = vmatpush2.msra.mxu0 0.0
    %4724 = vmatprep.subr.mxu0 0.0
    %4725 = vmatpush2.msra.mxu0 0.0
    %4726 = vmatprep.subr.mxu0 0.0
    %4727 = vmatpush2.msra.mxu0 0.0
    %4728 = vmatprep.subr.mxu0 0.0
    %4729 = vmatpush2.msra.mxu0 0.0
    %4730 = vmatprep.subr.mxu0 0.0
    %4731 = vmatpush2.msra.mxu0 0.0
    %4732 = vmatprep.subr.mxu0 0.0
    %4733 = vmatpush2.msra.mxu0 0.0
    %4734 = vmatprep.subr.mxu0 0.0
    %4735 = vmatpush2.msra.mxu0 0.0
    %4736 = vmatprep.subr.mxu0 0.0
    %4737 = vmatpush2.msra.mxu0 0.0
    %4738 = vmatprep.subr.mxu0 0.0
    %4739 = vmatpush2.msra.mxu0 0.0
    %4740 = vmatprep.subr.mxu0 0.0
    %4741 = vmatpush2.msra.mxu0 0.0
    %4742 = vmatprep.subr.mxu0 0.0
    %4743 = vmatpush2.msra.mxu0 0.0
    %4744 = vmatprep.subr.mxu0 0.0
    %4745 = vmatpush2.msra.mxu0 0.0
    %4746 = vmatprep.mubr.f32.mxu0 0.0
    %4747 = vmatmul.mubr.f32.gmra.mxu0 %v4663
    %v4748 = vpop.f32.mrf.mxu0
    %v4749 = vadd.f32 0.0, %v4748
    %v4750 = vpop.f32.mrf.mxu0
    %4751 = vmatprep.mubr.f32.mxu0 0.0
    %4752 = vmatmul.mubr.f32.gmra.mxu0 %v4666
    %v4753 = vpop.f32.mrf.mxu0
    %v4754 = vadd.f32 0.0, %v4753
    %v4755 = vpop.f32.mrf.mxu0
    %4756 = vmatprep.mubr.f32.mxu0 0.0
    %4757 = vmatmul.mubr.f32.gmra.mxu0 %v4669
    %v4758 = vpop.f32.mrf.mxu0
    %v4759 = vadd.f32 0.0, %v4758
    %v4760 = vpop.f32.mrf.mxu0
    %4761 = vmatprep.mubr.f32.mxu0 0.0
    %4762 = vmatmul.mubr.f32.gmra.mxu0 %v4672
    %v4763 = vpop.f32.mrf.mxu0
    %v4764 = vadd.f32 0.0, %v4763
    %v4765 = vpop.f32.mrf.mxu0
    %4766 = vmatprep.mubr.f32.mxu0 0.0
    %4767 = vmatmul.mubr.f32.gmra.mxu0 %v4675
    %v4768 = vpop.f32.mrf.mxu0
    %v4769 = vadd.f32 0.0, %v4768
    %v4770 = vpop.f32.mrf.mxu0
    %4771 = vmatprep.mubr.f32.mxu0 0.0
    %4772 = vmatmul.mubr.f32.gmra.mxu0 %v4678
    %v4773 = vpop.f32.mrf.mxu0
    %v4774 = vadd.f32 0.0, %v4773
    %v4775 = vpop.f32.mrf.mxu0
    %4776 = vdwg.mxu0
    %v4778 = vsel %vm640, %v4749, 0
    %v4781 = vsel %vm640, %v4754, 0
    %v4784 = vsel %vm640, %v4759, 0
    %v4787 = vsel %vm640, %v4764, 0
    %v4790 = vsel %vm640, %v4769, 0
    %v4793 = vsel %vm640, %v4774, 0
    %4795 = vmatprep.subr.mxu0 0.0
    %4796 = vmatpush1.msra.mxu0 0.0
    %4797 = vmatprep.subr.mxu0 0.0
    %4798 = vmatpush1.msra.mxu0 0.0
    %4799 = vmatprep.subr.mxu0 0.0
    %4800 = vmatpush1.msra.mxu0 0.0
    %4801 = vmatprep.subr.mxu0 0.0
    %4802 = vmatpush1.msra.mxu0 0.0
    %4803 = vmatprep.subr.mxu0 0.0
    %4804 = vmatpush1.msra.mxu0 0.0
    %4805 = vmatprep.subr.mxu0 0.0
    %4806 = vmatpush1.msra.mxu0 0.0
    %4807 = vmatprep.subr.mxu0 0.0
    %4808 = vmatpush1.msra.mxu0 0.0
    %4809 = vmatprep.subr.mxu0 0.0
    %4810 = vmatpush1.msra.mxu0 0.0
    %4811 = vmatprep.subr.mxu0 0.0
    %4812 = vmatpush1.msra.mxu0 0.0
    %4813 = vmatprep.subr.mxu0 0.0
    %4814 = vmatpush1.msra.mxu0 0.0
    %4815 = vmatprep.subr.mxu0 0.0
    %4816 = vmatpush1.msra.mxu0 0.0
    %4817 = vmatprep.subr.mxu0 0.0
    %4818 = vmatpush1.msra.mxu0 0.0
    %4819 = vmatprep.subr.mxu0 0.0
    %4820 = vmatpush1.msra.mxu0 0.0
    %4821 = vmatprep.subr.mxu0 0.0
    %4822 = vmatpush1.msra.mxu0 0.0
    %4823 = vmatprep.subr.mxu0 0.0
    %4824 = vmatpush1.msra.mxu0 0.0
    %4825 = vmatprep.subr.mxu0 0.0
    %4826 = vmatpush1.msra.mxu0 %v2952
    %4827 = vmatprep.subr.mxu0 0.0
    %4828 = vmatpush2.msra.mxu0 0.0
    %4829 = vmatprep.subr.mxu0 0.0
    %4830 = vmatpush2.msra.mxu0 0.0
    %4831 = vmatprep.subr.mxu0 0.0
    %4832 = vmatpush2.msra.mxu0 0.0
    %4833 = vmatprep.subr.mxu0 0.0
    %4834 = vmatpush2.msra.mxu0 0.0
    %4835 = vmatprep.subr.mxu0 0.0
    %4836 = vmatpush2.msra.mxu0 0.0
    %4837 = vmatprep.subr.mxu0 0.0
    %4838 = vmatpush2.msra.mxu0 0.0
    %4839 = vmatprep.subr.mxu0 0.0
    %4840 = vmatpush2.msra.mxu0 0.0
    %4841 = vmatprep.subr.mxu0 0.0
    %4842 = vmatpush2.msra.mxu0 0.0
    %4843 = vmatprep.subr.mxu0 0.0
    %4844 = vmatpush2.msra.mxu0 0.0
    %4845 = vmatprep.subr.mxu0 0.0
    %4846 = vmatpush2.msra.mxu0 0.0
    %4847 = vmatprep.subr.mxu0 0.0
    %4848 = vmatpush2.msra.mxu0 0.0
    %4849 = vmatprep.subr.mxu0 0.0
    %4850 = vmatpush2.msra.mxu0 0.0
    %4851 = vmatprep.subr.mxu0 0.0
    %4852 = vmatpush2.msra.mxu0 0.0
    %4853 = vmatprep.subr.mxu0 0.0
    %4854 = vmatpush2.msra.mxu0 0.0
    %4855 = vmatprep.subr.mxu0 0.0
    %4856 = vmatpush2.msra.mxu0 0.0
    %4857 = vmatprep.subr.mxu0 0.0
    %4858 = vmatpush2.msra.mxu0 0.0
    %4859 = vmatprep.mubr.f32.mxu0 0.0
    %4860 = vmatmul.mubr.f32.gmra.mxu0 %v4778
    %v4861 = vpop.f32.mrf.mxu0
    %v4862 = vadd.f32 0.0, %v4861
    %v4863 = vpop.f32.mrf.mxu0
    %4864 = vmatprep.mubr.f32.mxu0 0.0
    %4865 = vmatmul.mubr.f32.gmra.mxu0 %v4781
    %v4866 = vpop.f32.mrf.mxu0
    %v4867 = vadd.f32 0.0, %v4866
    %v4868 = vpop.f32.mrf.mxu0
    %4869 = vmatprep.mubr.f32.mxu0 0.0
    %4870 = vmatmul.mubr.f32.gmra.mxu0 %v4784
    %v4871 = vpop.f32.mrf.mxu0
    %v4872 = vadd.f32 0.0, %v4871
    %v4873 = vpop.f32.mrf.mxu0
    %4874 = vmatprep.mubr.f32.mxu0 0.0
    %4875 = vmatmul.mubr.f32.gmra.mxu0 %v4787
    %v4876 = vpop.f32.mrf.mxu0
    %v4877 = vadd.f32 0.0, %v4876
    %v4878 = vpop.f32.mrf.mxu0
    %4879 = vmatprep.mubr.f32.mxu0 0.0
    %4880 = vmatmul.mubr.f32.gmra.mxu0 %v4790
    %v4881 = vpop.f32.mrf.mxu0
    %v4882 = vadd.f32 0.0, %v4881
    %v4883 = vpop.f32.mrf.mxu0
    %4884 = vmatprep.mubr.f32.mxu0 0.0
    %4885 = vmatmul.mubr.f32.gmra.mxu0 %v4793
    %v4886 = vpop.f32.mrf.mxu0
    %v4887 = vadd.f32 0.0, %v4886
    %v4888 = vpop.f32.mrf.mxu0
    %4889 = vdwg.mxu0
    %v4890 = vadd.f32 %v4430, %v4862
    %v4891 = vadd.f32 %v4431, %v4867
    %v4892 = vadd.f32 %v4432, %v4872
    %v4893 = vadd.f32 %v4433, %v4877
    %v4894 = vadd.f32 %v4434, %v4882
    %v4895 = vadd.f32 %v4435, %v4887
    %v4897 = vlaneseq
    %v4898 = vshrl.u32 %v4897, 7
    %v4899 = vsub.s32 0, %v4898
    %v4900 = vrot.slane %v2954, %v4899
    %v4902 = vadd.f32 %v4890, %v4900
    %v4903 = vadd.f32 %v4891, %v4900
    %v4904 = vadd.f32 %v4892, %v4900
    %v4905 = vadd.f32 %v4893, %v4900
    %v4906 = vadd.f32 %v4894, %v4900
    %v4907 = vadd.f32 %v4895, %v4900
    %v4908 = vadd.f32 %v2935, %v4902
    %v4909 = vadd.f32 %v2936, %v4903
    %v4910 = vadd.f32 %v2937, %v4904
    %v4911 = vadd.f32 %v2938, %v4905
    %v4912 = vadd.f32 %v2939, %v4906
    %v4913 = vadd.f32 %v2940, %v4907
    %s4914 = scalar_lea.vmem %s13, 1
    %v4915 = vld [vmem:[%s4914] sm:$0x1]
    %s4916 = scalar_lea.vmem %s14, 1
    %v4917 = vld [vmem:[%s4916] sm:$0x1]
    %v4918 = vsel %vm247, %v4908, 0.0
    %4919 = vadd.xlane.f32.xlu0 %v4918
    %v4920 = vpop.xlane.xlu0 %4919
    %v4921 = vsel %vm247, %v4909, 0.0
    %4922 = vadd.xlane.f32.xlu0 %v4921
    %v4923 = vpop.xlane.xlu0 %4922
    %v4924 = vsel %vm247, %v4910, 0.0
    %4925 = vadd.xlane.f32.xlu0 %v4924
    %v4926 = vpop.xlane.xlu0 %4925
    %v4927 = vsel %vm247, %v4911, 0.0
    %4928 = vadd.xlane.f32.xlu0 %v4927
    %v4929 = vpop.xlane.xlu0 %4928
    %v4930 = vsel %vm247, %v4912, 0.0
    %4931 = vadd.xlane.f32.xlu0 %v4930
    %v4932 = vpop.xlane.xlu0 %4931
    %v4933 = vsel %vm2483, %v4913, 0.0
    %4934 = vadd.xlane.f32.xlu0 %v4933
    %v4935 = vpop.xlane.xlu0 %4934
    %v4936 = vmul.f32 %v4920, %v2487
    %v4937 = vmul.f32 %v4923, %v2487
    %v4938 = vmul.f32 %v4926, %v2487
    %v4939 = vmul.f32 %v4929, %v2487
    %v4940 = vmul.f32 %v4932, %v2487
    %v4941 = vmul.f32 %v4935, %v2487
    %v4942 = vsub.f32 %v4908, %v4936
    %v4943 = vsub.f32 %v4909, %v4937
    %v4944 = vsub.f32 %v4910, %v4938
    %v4945 = vsub.f32 %v4911, %v4939
    %v4946 = vsub.f32 %v4912, %v4940
    %v4947 = vsub.f32 %v4913, %v4941
    %v4948 = vmul.f32 %v4942, %v4942
    %v4949 = vmul.f32 %v4943, %v4943
    %v4950 = vmul.f32 %v4944, %v4944
    %v4951 = vmul.f32 %v4945, %v4945
    %v4952 = vmul.f32 %v4946, %v4946
    %v4953 = vmul.f32 %v4947, %v4947
    %v4954 = vsel %vm247, %v4948, 0.0
    %4955 = vadd.xlane.f32.xlu0 %v4954
    %v4956 = vpop.xlane.xlu0 %4955
    %v4957 = vsel %vm247, %v4949, 0.0
    %4958 = vadd.xlane.f32.xlu0 %v4957
    %v4959 = vpop.xlane.xlu0 %4958
    %v4960 = vsel %vm247, %v4950, 0.0
    %4961 = vadd.xlane.f32.xlu0 %v4960
    %v4962 = vpop.xlane.xlu0 %4961
    %v4963 = vsel %vm247, %v4951, 0.0
    %4964 = vadd.xlane.f32.xlu0 %v4963
    %v4965 = vpop.xlane.xlu0 %4964
    %v4966 = vsel %vm247, %v4952, 0.0
    %4967 = vadd.xlane.f32.xlu0 %v4966
    %v4968 = vpop.xlane.xlu0 %4967
    %v4969 = vsel %vm2483, %v4953, 0.0
    %4970 = vadd.xlane.f32.xlu0 %v4969
    %v4971 = vpop.xlane.xlu0 %4970
    %v4972 = vmul.f32 %v4956, %v2487
    %v4973 = vmul.f32 %v4959, %v2487
    %v4974 = vmul.f32 %v4962, %v2487
    %v4975 = vmul.f32 %v4965, %v2487
    %v4976 = vmul.f32 %v4968, %v2487
    %v4977 = vmul.f32 %v4971, %v2487
    %v4978 = vadd.f32 %v4972, 1e-05
    %v4979 = vadd.f32 %v4973, 1e-05
    %v4980 = vadd.f32 %v4974, 1e-05
    %v4981 = vadd.f32 %v4975, 1e-05
    %v4982 = vadd.f32 %v4976, 1e-05
    %v4983 = vadd.f32 %v4977, 1e-05
    %v4984 = vrsqrt.pop %v4978
    %v4985 = vrsqrt.pop %v4979
    %v4986 = vrsqrt.pop %v4980
    %v4987 = vrsqrt.pop %v4981
    %v4988 = vrsqrt.pop %v4982
    %v4989 = vrsqrt.pop %v4983
    %v4990 = vmul.f32 %v4942, %v4984
    %v4991 = vmul.f32 %v4943, %v4985
    %v4992 = vmul.f32 %v4944, %v4986
    %v4993 = vmul.f32 %v4945, %v4987
    %v4994 = vmul.f32 %v4946, %v4988
    %v4995 = vmul.f32 %v4947, %v4989
    %v4997 = vlaneseq
    %v4998 = vshrl.u32 %v4997, 7
    %v4999 = vsub.s32 0, %v4998
    %v5000 = vrot.slane %v4915, %v4999
    %v5002 = vmul.f32 %v4990, %v5000
    %v5003 = vmul.f32 %v4991, %v5000
    %v5004 = vmul.f32 %v4992, %v5000
    %v5005 = vmul.f32 %v4993, %v5000
    %v5006 = vmul.f32 %v4994, %v5000
    %v5007 = vmul.f32 %v4995, %v5000
    %v5009 = vlaneseq
    %v5010 = vshrl.u32 %v5009, 7
    %v5011 = vsub.s32 0, %v5010
    %v5012 = vrot.slane %v4917, %v5011
    %v5014 = vadd.f32 %v5002, %v5012
    %v5015 = vadd.f32 %v5003, %v5012
    %v5016 = vadd.f32 %v5004, %v5012
    %v5017 = vadd.f32 %v5005, %v5012
    %v5018 = vadd.f32 %v5006, %v5012
    %v5019 = vadd.f32 %v5007, %v5012
    %s5020 = scalar_lea.vmem %s15, 32
    %v5021 = vld [vmem:[%s5020] sm:$0xff]
    %v5022 = vld [vmem:[%s5020 + $0x8] sm:$0xff]
    %v5023 = vld [vmem:[%s5020 + $0x10] sm:$0xff]
    %v5024 = vld [vmem:[%s5020 + $0x18] sm:$0xff]
    %s5025 = scalar_lea.vmem %s16, 1
    %v5026 = vld [vmem:[%s5025] sm:$0x1]
    %v5028 = vlaneseq
    %v5029 = vshrl.u32 %v5028, 7
    %v5030 = vsub.s32 0, %v5029
    %v5031 = vrot.slane %v5026, %v5030
    %v5034 = vsel %vm247, %v5014, 0
    %v5037 = vsel %vm247, %v5015, 0
    %v5040 = vsel %vm247, %v5016, 0
    %v5043 = vsel %vm247, %v5017, 0
    %v5046 = vsel %vm247, %v5018, 0
    %v5049 = vsel %vm247, %v5019, 0
    %5051 = vmatprep.subr.mxu0 0.0
    %5052 = vmatpush1.msra.mxu0 0.0
    %5053 = vmatprep.subr.mxu0 0.0
    %5054 = vmatpush1.msra.mxu0 0.0
    %5055 = vmatprep.subr.mxu0 0.0
    %5056 = vmatpush1.msra.mxu0 0.0
    %5057 = vmatprep.subr.mxu0 0.0
    %5058 = vmatpush1.msra.mxu0 0.0
    %5059 = vmatprep.subr.mxu0 0.0
    %5060 = vmatpush1.msra.mxu0 0.0
    %5061 = vmatprep.subr.mxu0 0.0
    %5062 = vmatpush1.msra.mxu0 0.0
    %5063 = vmatprep.subr.mxu0 0.0
    %5064 = vmatpush1.msra.mxu0 0.0
    %5065 = vmatprep.subr.mxu0 0.0
    %5066 = vmatpush1.msra.mxu0 0.0
    %5067 = vmatprep.subr.mxu0 0.0
    %5068 = vmatpush1.msra.mxu0 0.0
    %5069 = vmatprep.subr.mxu0 0.0
    %5070 = vmatpush1.msra.mxu0 0.0
    %5071 = vmatprep.subr.mxu0 0.0
    %5072 = vmatpush1.msra.mxu0 0.0
    %5073 = vmatprep.subr.mxu0 0.0
    %5074 = vmatpush1.msra.mxu0 0.0
    %5075 = vmatprep.subr.mxu0 0.0
    %5076 = vmatpush1.msra.mxu0 %v5024
    %5077 = vmatprep.subr.mxu0 0.0
    %5078 = vmatpush1.msra.mxu0 %v5023
    %5079 = vmatprep.subr.mxu0 0.0
    %5080 = vmatpush1.msra.mxu0 %v5022
    %5081 = vmatprep.subr.mxu0 0.0
    %5082 = vmatpush1.msra.mxu0 %v5021
    %5083 = vmatprep.subr.mxu0 0.0
    %5084 = vmatpush2.msra.mxu0 0.0
    %5085 = vmatprep.subr.mxu0 0.0
    %5086 = vmatpush2.msra.mxu0 0.0
    %5087 = vmatprep.subr.mxu0 0.0
    %5088 = vmatpush2.msra.mxu0 0.0
    %5089 = vmatprep.subr.mxu0 0.0
    %5090 = vmatpush2.msra.mxu0 0.0
    %5091 = vmatprep.subr.mxu0 0.0
    %5092 = vmatpush2.msra.mxu0 0.0
    %5093 = vmatprep.subr.mxu0 0.0
    %5094 = vmatpush2.msra.mxu0 0.0
    %5095 = vmatprep.subr.mxu0 0.0
    %5096 = vmatpush2.msra.mxu0 0.0
    %5097 = vmatprep.subr.mxu0 0.0
    %5098 = vmatpush2.msra.mxu0 0.0
    %5099 = vmatprep.subr.mxu0 0.0
    %5100 = vmatpush2.msra.mxu0 0.0
    %5101 = vmatprep.subr.mxu0 0.0
    %5102 = vmatpush2.msra.mxu0 0.0
    %5103 = vmatprep.subr.mxu0 0.0
    %5104 = vmatpush2.msra.mxu0 0.0
    %5105 = vmatprep.subr.mxu0 0.0
    %5106 = vmatpush2.msra.mxu0 0.0
    %5107 = vmatprep.subr.mxu0 0.0
    %5108 = vmatpush2.msra.mxu0 0.0
    %5109 = vmatprep.subr.mxu0 0.0
    %5110 = vmatpush2.msra.mxu0 0.0
    %5111 = vmatprep.subr.mxu0 0.0
    %5112 = vmatpush2.msra.mxu0 0.0
    %5113 = vmatprep.subr.mxu0 0.0
    %5114 = vmatpush2.msra.mxu0 0.0
    %5115 = vmatprep.mubr.f32.mxu0 0.0
    %5116 = vmatmul.mubr.f32.gmra.mxu0 %v5034
    %v5117 = vpop.f32.mrf.mxu0
    %v5118 = vadd.f32 %v5031, %v5117
    %v5119 = vpop.f32.mrf.mxu0
    %5120 = vmatprep.mubr.f32.mxu0 0.0
    %5121 = vmatmul.mubr.f32.gmra.mxu0 %v5037
    %v5122 = vpop.f32.mrf.mxu0
    %v5123 = vadd.f32 %v5031, %v5122
    %v5124 = vpop.f32.mrf.mxu0
    %5125 = vmatprep.mubr.f32.mxu0 0.0
    %5126 = vmatmul.mubr.f32.gmra.mxu0 %v5040
    %v5127 = vpop.f32.mrf.mxu0
    %v5128 = vadd.f32 %v5031, %v5127
    %v5129 = vpop.f32.mrf.mxu0
    %5130 = vmatprep.mubr.f32.mxu0 0.0
    %5131 = vmatmul.mubr.f32.gmra.mxu0 %v5043
    %v5132 = vpop.f32.mrf.mxu0
    %v5133 = vadd.f32 %v5031, %v5132
    %v5134 = vpop.f32.mrf.mxu0
    %5135 = vmatprep.mubr.f32.mxu0 0.0
    %5136 = vmatmul.mubr.f32.gmra.mxu0 %v5046
    %v5137 = vpop.f32.mrf.mxu0
    %v5138 = vadd.f32 %v5031, %v5137
    %v5139 = vpop.f32.mrf.mxu0
    %5140 = vmatprep.mubr.f32.mxu0 0.0
    %5141 = vmatmul.mubr.f32.gmra.mxu0 %v5049
    %v5142 = vpop.f32.mrf.mxu0
    %v5143 = vadd.f32 %v5031, %v5142
    %v5144 = vpop.f32.mrf.mxu0
    %5145 = vdwg.mxu0
    %v5146 = vmax.f32 %v5118, 0.0
    %v5147 = vmax.f32 %v5123, 0.0
    %v5148 = vmax.f32 %v5128, 0.0
    %v5149 = vmax.f32 %v5133, 0.0
    %v5150 = vmax.f32 %v5138, 0.0
    %v5151 = vmax.f32 %v5143, 0.0
    %s5152 = scalar_lea.vmem %s17, 64
    %v5153 = vld [vmem:[%s5152] sm:$0xff]
    %v5154 = vld [vmem:[%s5152 + $0x8] sm:$0xff]
    %v5155 = vld [vmem:[%s5152 + $0x10] sm:$0xff]
    %v5156 = vld [vmem:[%s5152 + $0x18] sm:$0xff]
    %v5157 = vld [vmem:[%s5152 + $0x20] sm:$0xff]
    %v5158 = vld [vmem:[%s5152 + $0x28] sm:$0xff]
    %v5159 = vld [vmem:[%s5152 + $0x30] sm:$0xff]
    %v5160 = vld [vmem:[%s5152 + $0x38] sm:$0xff]
    %s5161 = scalar_lea.vmem %s18, 1
    %v5162 = vld [vmem:[%s5161] sm:$0x1]
    %v5164 = vlaneseq
    %v5165 = vshrl.u32 %v5164, 7
    %v5166 = vsub.s32 0, %v5165
    %v5167 = vrot.slane %v5162, %v5166
    %v5170 = vsel %vm2717, %v5146, 0
    %v5173 = vsel %vm2717, %v5147, 0
    %v5176 = vsel %vm2717, %v5148, 0
    %v5179 = vsel %vm2717, %v5149, 0
    %v5182 = vsel %vm2717, %v5150, 0
    %v5185 = vsel %vm2717, %v5151, 0
    %5187 = vmatprep.subr.mxu0 0.0
    %5188 = vmatpush1.msra.mxu0 0.0
    %5189 = vmatprep.subr.mxu0 0.0
    %5190 = vmatpush1.msra.mxu0 0.0
    %5191 = vmatprep.subr.mxu0 0.0
    %5192 = vmatpush1.msra.mxu0 0.0
    %5193 = vmatprep.subr.mxu0 0.0
    %5194 = vmatpush1.msra.mxu0 0.0
    %5195 = vmatprep.subr.mxu0 0.0
    %5196 = vmatpush1.msra.mxu0 0.0
    %5197 = vmatprep.subr.mxu0 0.0
    %5198 = vmatpush1.msra.mxu0 0.0
    %5199 = vmatprep.subr.mxu0 0.0
    %5200 = vmatpush1.msra.mxu0 0.0
    %5201 = vmatprep.subr.mxu0 0.0
    %5202 = vmatpush1.msra.mxu0 0.0
    %5203 = vmatprep.subr.mxu0 0.0
    %5204 = vmatpush1.msra.mxu0 %v5160
    %5205 = vmatprep.subr.mxu0 0.0
    %5206 = vmatpush1.msra.mxu0 %v5159
    %5207 = vmatprep.subr.mxu0 0.0
    %5208 = vmatpush1.msra.mxu0 %v5158
    %5209 = vmatprep.subr.mxu0 0.0
    %5210 = vmatpush1.msra.mxu0 %v5157
    %5211 = vmatprep.subr.mxu0 0.0
    %5212 = vmatpush1.msra.mxu0 %v5156
    %5213 = vmatprep.subr.mxu0 0.0
    %5214 = vmatpush1.msra.mxu0 %v5155
    %5215 = vmatprep.subr.mxu0 0.0
    %5216 = vmatpush1.msra.mxu0 %v5154
    %5217 = vmatprep.subr.mxu0 0.0
    %5218 = vmatpush1.msra.mxu0 %v5153
    %5219 = vmatprep.subr.mxu0 0.0
    %5220 = vmatpush2.msra.mxu0 0.0
    %5221 = vmatprep.subr.mxu0 0.0
    %5222 = vmatpush2.msra.mxu0 0.0
    %5223 = vmatprep.subr.mxu0 0.0
    %5224 = vmatpush2.msra.mxu0 0.0
    %5225 = vmatprep.subr.mxu0 0.0
    %5226 = vmatpush2.msra.mxu0 0.0
    %5227 = vmatprep.subr.mxu0 0.0
    %5228 = vmatpush2.msra.mxu0 0.0
    %5229 = vmatprep.subr.mxu0 0.0
    %5230 = vmatpush2.msra.mxu0 0.0
    %5231 = vmatprep.subr.mxu0 0.0
    %5232 = vmatpush2.msra.mxu0 0.0
    %5233 = vmatprep.subr.mxu0 0.0
    %5234 = vmatpush2.msra.mxu0 0.0
    %5235 = vmatprep.subr.mxu0 0.0
    %5236 = vmatpush2.msra.mxu0 0.0
    %5237 = vmatprep.subr.mxu0 0.0
    %5238 = vmatpush2.msra.mxu0 0.0
    %5239 = vmatprep.subr.mxu0 0.0
    %5240 = vmatpush2.msra.mxu0 0.0
    %5241 = vmatprep.subr.mxu0 0.0
    %5242 = vmatpush2.msra.mxu0 0.0
    %5243 = vmatprep.subr.mxu0 0.0
    %5244 = vmatpush2.msra.mxu0 0.0
    %5245 = vmatprep.subr.mxu0 0.0
    %5246 = vmatpush2.msra.mxu0 0.0
    %5247 = vmatprep.subr.mxu0 0.0
    %5248 = vmatpush2.msra.mxu0 0.0
    %5249 = vmatprep.subr.mxu0 0.0
    %5250 = vmatpush2.msra.mxu0 0.0
    %5251 = vmatprep.mubr.f32.mxu0 0.0
    %5252 = vmatmul.mubr.f32.gmra.mxu0 %v5170
    %v5253 = vpop.f32.mrf.mxu0
    %v5254 = vadd.f32 %v5167, %v5253
    %v5255 = vpop.f32.mrf.mxu0
    %5256 = vmatprep.mubr.f32.mxu0 0.0
    %5257 = vmatmul.mubr.f32.gmra.mxu0 %v5173
    %v5258 = vpop.f32.mrf.mxu0
    %v5259 = vadd.f32 %v5167, %v5258
    %v5260 = vpop.f32.mrf.mxu0
    %5261 = vmatprep.mubr.f32.mxu0 0.0
    %5262 = vmatmul.mubr.f32.gmra.mxu0 %v5176
    %v5263 = vpop.f32.mrf.mxu0
    %v5264 = vadd.f32 %v5167, %v5263
    %v5265 = vpop.f32.mrf.mxu0
    %5266 = vmatprep.mubr.f32.mxu0 0.0
    %5267 = vmatmul.mubr.f32.gmra.mxu0 %v5179
    %v5268 = vpop.f32.mrf.mxu0
    %v5269 = vadd.f32 %v5167, %v5268
    %v5270 = vpop.f32.mrf.mxu0
    %5271 = vmatprep.mubr.f32.mxu0 0.0
    %5272 = vmatmul.mubr.f32.gmra.mxu0 %v5182
    %v5273 = vpop.f32.mrf.mxu0
    %v5274 = vadd.f32 %v5167, %v5273
    %v5275 = vpop.f32.mrf.mxu0
    %5276 = vmatprep.mubr.f32.mxu0 0.0
    %5277 = vmatmul.mubr.f32.gmra.mxu0 %v5185
    %v5278 = vpop.f32.mrf.mxu0
    %v5279 = vadd.f32 %v5167, %v5278
    %v5280 = vpop.f32.mrf.mxu0
    %5281 = vdwg.mxu0
    %v5282 = vadd.f32 %v5014, %v5254
    %v5283 = vadd.f32 %v5015, %v5259
    %v5284 = vadd.f32 %v5016, %v5264
    %v5285 = vadd.f32 %v5017, %v5269
    %v5286 = vadd.f32 %v5018, %v5274
    %v5287 = vadd.f32 %v5019, %v5279
    %s5288 = scalar_lea.vmem %s19, 1
    %v5289 = vld [vmem:[%s5288] sm:$0x1]
    %s5290 = scalar_lea.vmem %s20, 1
    %v5291 = vld [vmem:[%s5290] sm:$0x1]
    %v5292 = vsel %vm247, %v5282, 0.0
    %5293 = vadd.xlane.f32.xlu0 %v5292
    %v5294 = vpop.xlane.xlu0 %5293
    %v5295 = vsel %vm247, %v5283, 0.0
    %5296 = vadd.xlane.f32.xlu0 %v5295
    %v5297 = vpop.xlane.xlu0 %5296
    %v5298 = vsel %vm247, %v5284, 0.0
    %5299 = vadd.xlane.f32.xlu0 %v5298
    %v5300 = vpop.xlane.xlu0 %5299
    %v5301 = vsel %vm247, %v5285, 0.0
    %5302 = vadd.xlane.f32.xlu0 %v5301
    %v5303 = vpop.xlane.xlu0 %5302
    %v5304 = vsel %vm247, %v5286, 0.0
    %5305 = vadd.xlane.f32.xlu0 %v5304
    %v5306 = vpop.xlane.xlu0 %5305
    %v5307 = vsel %vm2483, %v5287, 0.0
    %5308 = vadd.xlane.f32.xlu0 %v5307
    %v5309 = vpop.xlane.xlu0 %5308
    %v5310 = vmul.f32 %v5294, %v2487
    %v5311 = vmul.f32 %v5297, %v2487
    %v5312 = vmul.f32 %v5300, %v2487
    %v5313 = vmul.f32 %v5303, %v2487
    %v5314 = vmul.f32 %v5306, %v2487
    %v5315 = vmul.f32 %v5309, %v2487
    %v5316 = vsub.f32 %v5282, %v5310
    %v5317 = vsub.f32 %v5283, %v5311
    %v5318 = vsub.f32 %v5284, %v5312
    %v5319 = vsub.f32 %v5285, %v5313
    %v5320 = vsub.f32 %v5286, %v5314
    %v5321 = vsub.f32 %v5287, %v5315
    %v5322 = vmul.f32 %v5316, %v5316
    %v5323 = vmul.f32 %v5317, %v5317
    %v5324 = vmul.f32 %v5318, %v5318
    %v5325 = vmul.f32 %v5319, %v5319
    %v5326 = vmul.f32 %v5320, %v5320
    %v5327 = vmul.f32 %v5321, %v5321
    %v5328 = vsel %vm247, %v5322, 0.0
    %5329 = vadd.xlane.f32.xlu0 %v5328
    %v5330 = vpop.xlane.xlu0 %5329
    %v5331 = vsel %vm247, %v5323, 0.0
    %5332 = vadd.xlane.f32.xlu0 %v5331
    %v5333 = vpop.xlane.xlu0 %5332
    %v5334 = vsel %vm247, %v5324, 0.0
    %5335 = vadd.xlane.f32.xlu0 %v5334
    %v5336 = vpop.xlane.xlu0 %5335
    %v5337 = vsel %vm247, %v5325, 0.0
    %5338 = vadd.xlane.f32.xlu0 %v5337
    %v5339 = vpop.xlane.xlu0 %5338
    %v5340 = vsel %vm247, %v5326, 0.0
    %5341 = vadd.xlane.f32.xlu0 %v5340
    %v5342 = vpop.xlane.xlu0 %5341
    %v5343 = vsel %vm2483, %v5327, 0.0
    %5344 = vadd.xlane.f32.xlu0 %v5343
    %v5345 = vpop.xlane.xlu0 %5344
    %v5346 = vmul.f32 %v5330, %v2487
    %v5347 = vmul.f32 %v5333, %v2487
    %v5348 = vmul.f32 %v5336, %v2487
    %v5349 = vmul.f32 %v5339, %v2487
    %v5350 = vmul.f32 %v5342, %v2487
    %v5351 = vmul.f32 %v5345, %v2487
    %v5352 = vadd.f32 %v5346, 1e-05
    %v5353 = vadd.f32 %v5347, 1e-05
    %v5354 = vadd.f32 %v5348, 1e-05
    %v5355 = vadd.f32 %v5349, 1e-05
    %v5356 = vadd.f32 %v5350, 1e-05
    %v5357 = vadd.f32 %v5351, 1e-05
    %v5358 = vrsqrt.pop %v5352
    %v5359 = vrsqrt.pop %v5353
    %v5360 = vrsqrt.pop %v5354
    %v5361 = vrsqrt.pop %v5355
    %v5362 = vrsqrt.pop %v5356
    %v5363 = vrsqrt.pop %v5357
    %v5364 = vmul.f32 %v5316, %v5358
    %v5365 = vmul.f32 %v5317, %v5359
    %v5366 = vmul.f32 %v5318, %v5360
    %v5367 = vmul.f32 %v5319, %v5361
    %v5368 = vmul.f32 %v5320, %v5362
    %v5369 = vmul.f32 %v5321, %v5363
    %v5371 = vlaneseq
    %v5372 = vshrl.u32 %v5371, 7
    %v5373 = vsub.s32 0, %v5372
    %v5374 = vrot.slane %v5289, %v5373
    %v5376 = vmul.f32 %v5364, %v5374
    %v5377 = vmul.f32 %v5365, %v5374
    %v5378 = vmul.f32 %v5366, %v5374
    %v5379 = vmul.f32 %v5367, %v5374
    %v5380 = vmul.f32 %v5368, %v5374
    %v5381 = vmul.f32 %v5369, %v5374
    %v5383 = vlaneseq
    %v5384 = vshrl.u32 %v5383, 7
    %v5385 = vsub.s32 0, %v5384
    %v5386 = vrot.slane %v5291, %v5385
    %v5388 = vadd.f32 %v5376, %v5386
    %v5389 = vadd.f32 %v5377, %v5386
    %v5390 = vadd.f32 %v5378, %v5386
    %v5391 = vadd.f32 %v5379, %v5386
    %v5392 = vadd.f32 %v5380, %v5386
    %v5393 = vadd.f32 %v5381, %v5386
    %5394 = vst.msk [vmem:[%s21] sm:$0xff] %vm247, %v5388
    %5395 = vst.msk [vmem:[%s21 + $0x8] sm:$0xff] %vm247, %v5389
    %5396 = vst.msk [vmem:[%s21 + $0x10] sm:$0xff] %vm247, %v5390
    %5397 = vst.msk [vmem:[%s21 + $0x18] sm:$0xff] %vm247, %v5391
    %5398 = vst.msk [vmem:[%s21 + $0x20] sm:$0xff] %vm247, %v5392
    %5399 = vst.msk [vmem:[%s21 + $0x28] sm:$0xf] %vm2483, %v5393
    // Predicated region
    $region94: #{tpu_custom_call.1} parent=1 // pred_check
      _
    $region95: #{tpu_custom_call.1} parent=1 // pred_check_branch
      %5401 = sbr.rel (0) target = $region97
    $region96: #{tpu_custom_call.1} parent=1 // pred_region
      _
    $region97: #{tpu_custom_call.1} parent=1 // pred_fallthru
      _
    // Predicated region
    $region98: #{tpu_custom_call.1} parent=1 // pred_check
      _
    $region99: #{tpu_custom_call.1} parent=1 // pred_check_branch
      %5403 = sbr.rel (0) target = $region101
    $region100: #{tpu_custom_call.1} parent=1 // pred_region
      _
    $region101: #{tpu_custom_call.1} parent=1 // pred_fallthru
      _
    %5404 = vsyncpa [#allocation3], 1
    %5405 = vsyncpa [#allocation5], 1

</llo_original>
